<compile_context>
chip_gen: v6e
topology: v6e:2x2x1
jax: 0.10.0
libtpu: 0.0.40
codegen_flags: <defaults>
</compile_context>

<pallas_src>
import jax
import jax.numpy as jnp
from jax import lax
from jax.experimental import pallas as pl
from jax.experimental.pallas import tpu as pltpu

KERNEL_SIZES = (3, 5, 7)
DILATIONS = (1, 2, 4, 5)
NUM_BRANCHES = len(KERNEL_SIZES) * len(DILATIONS)  # 12


def conv_unit_kernel(x_ref, w0_ref, b0_ref, dw3_ref, dw5_ref, dw7_ref,
                     pw_ref, pbf_ref, o_ref):
    # x_ref:   (C_in, L)       one batch sample (L on lanes, channels on sublanes)
    # w0_ref:  (C_in, C_in)    first 1x1 conv weight
    # b0_ref:  (C_in, 1)       first 1x1 conv bias
    # dwK_ref: (4, C_in, K)    depthwise weights for kernel size K, stacked over dilations
    # pw_ref:  (12, Cb, C_in)  per-branch 1x1 projection weights
    # pbf_ref: (12, Cb, 1)     per-branch fused bias (pointwise bias + folded depthwise bias)
    # o_ref:   (12*Cb, L)      branch outputs concatenated along channels
    x = x_ref[...]
    L = x.shape[-1]

    # --- first pointwise conv (MXU) ---
    y = jnp.dot(w0_ref[...], x, preferred_element_type=jnp.float32) + b0_ref[...]

    # Lane index, hoisted out of the tap loops (zeroes the virtually-padded region).
    lane = lax.broadcasted_iota(jnp.int32, y.shape, 1)

    dw_refs = (dw3_ref, dw5_ref, dw7_ref)
    branch_outs = []
    for ks_idx, k in enumerate(KERNEL_SIZES):
        half = (k - 1) // 2
        for d_idx, d in enumerate(DILATIONS):
            b = ks_idx * len(DILATIONS) + d_idx
            w_dw = dw_refs[ks_idx][d_idx]            # (C_in, k)

            # --- dilated depthwise conv: per-tap lane shift (XLU) + FMA (VPU) ---
            z = w_dw[:, half:half + 1] * y           # center tap: no shift, no mask
            for t in range(k):
                if t == half:
                    continue
                s = (t - half) * d                   # z[:, l] += w[:, t] * y[:, l + s]
                tap = pltpu.roll(y, shift=(-s) % L, axis=1)
                src = lane + s
                tap = jnp.where((src >= 0) & (src < L), tap, 0.0)
                z = z + w_dw[:, t:t + 1] * tap

            # --- branch pointwise conv (MXU) with fused bias ---
            branch_outs.append(
                jnp.dot(pw_ref[b], z, preferred_element_type=jnp.float32)
                + pbf_ref[b])

    # One lane-dense store of the full (C_out, L) slab.
    o_ref[...] = jnp.concatenate(branch_outs, axis=0).astype(o_ref.dtype)


def conv_unit(x, w0, b0, dw_weights, dw_biases, pw, pb):
    """Conv_Unit forward.

    x:          (N, C_in, L) float32
    w0, b0:     (C_in, C_in), (C_in,)
    dw_weights: tuple of 3 arrays (4, C_in, k) for k in (3, 5, 7)
    dw_biases:  tuple of 3 arrays (4, C_in)
    pw, pb:     (12, Cb, C_in), (12, Cb)
    returns:    (N, 12 * Cb, L)
    """
    N, C_in, L = x.shape
    Cb = pw.shape[1]
    C_out = NUM_BRANCHES * Cb
    dw3, dw5, dw7 = dw_weights

    # Fold each branch's depthwise bias through its 1x1 conv:
    #   W_pw @ (z + b_dw) + b_pw == W_pw @ z + (W_pw @ b_dw + b_pw)
    db_all = jnp.concatenate(dw_biases, axis=0)                       # (12, C_in)
    pbf = (jnp.einsum("boc,bc->bo", pw, db_all) + pb).reshape(NUM_BRANCHES, Cb, 1)

    def full(shape):
        return pl.BlockSpec(shape, lambda n, _s=len(shape): (0,) * _s)

    return pl.pallas_call(
        conv_unit_kernel,
        out_shape=jax.ShapeDtypeStruct((N, C_out, L), x.dtype),
        grid=(N,),
        in_specs=[
            pl.BlockSpec((pl.Squeezed(), C_in, L), lambda n: (n, 0, 0)),   # x[n]
            full((C_in, C_in)),                                            # w0
            full((C_in, 1)),                                               # b0
            full((len(DILATIONS), C_in, 3)),                               # dw k=3
            full((len(DILATIONS), C_in, 5)),                               # dw k=5
            full((len(DILATIONS), C_in, 7)),                               # dw k=7
            full((NUM_BRANCHES, Cb, C_in)),                                # pw
            full((NUM_BRANCHES, Cb, 1)),                                   # fused bias
        ],
        out_specs=pl.BlockSpec((pl.Squeezed(), C_out, L), lambda n: (n, 0, 0)),
        compiler_params=pltpu.CompilerParams(
            dimension_semantics=("parallel",),
            vmem_limit_bytes=32 * 1024 * 1024,
        ),
    )(x, w0, b0.reshape(C_in, 1), dw3, dw5, dw7, pw, pbf)


def _reference(x, w0, b0, dw_weights, dw_biases, pw, pb):
    """Pure-JAX reference of Conv_Unit.forward (independent implementation)."""
    C_in = x.shape[1]
    hp = lax.Precision.HIGHEST
    y = jnp.einsum("oc,ncl->nol", w0, x, precision=hp) + b0[None, :, None]
    outs = []
    for ks_idx, k in enumerate(KERNEL_SIZES):
        for d_idx, d in enumerate(DILATIONS):
            b = ks_idx * len(DILATIONS) + d_idx
            pad = (k - 1) // 2 * d
            w = dw_weights[ks_idx][d_idx]                     # (C_in, k)
            z = lax.conv_general_dilated(
                y, w[:, None, :],
                window_strides=(1,), padding=[(pad, pad)],
                rhs_dilation=(d,),
                dimension_numbers=("NCH", "OIH", "NCH"),
                feature_group_count=C_in,
                precision=hp)
            z = z + dw_biases[ks_idx][d_idx][None, :, None]
            outs.append(jnp.einsum("oc,ncl->nol", pw[b], z, precision=hp)
                        + pb[b][None, :, None])
    return jnp.concatenate(outs, axis=1)


if __name__ == "__main__":
    key = jax.random.PRNGKey(0)
    keys = jax.random.split(key, 12)

    # Small shapes consistent with Conv_Unit (out_channels divisible by 3 and then by 4).
    N, C_in, L = 2, 8, 128
    OUT_CHANNELS = 96
    Cb = OUT_CHANNELS // NUM_BRANCHES          # = out_channels // 3 // 4

    x = jax.random.normal(keys[0], (N, C_in, L), dtype=jnp.float32)

    w0 = jax.random.normal(keys[1], (C_in, C_in), dtype=jnp.float32) * 0.3
    b0 = jax.random.normal(keys[2], (C_in,), dtype=jnp.float32) * 0.1

    dw_weights = tuple(
        jax.random.normal(keys[3 + i], (len(DILATIONS), C_in, k), dtype=jnp.float32) * 0.3
        for i, k in enumerate(KERNEL_SIZES))
    dw_biases = tuple(
        jax.random.normal(keys[6 + i], (len(DILATIONS), C_in), dtype=jnp.float32) * 0.1
        for i in range(len(KERNEL_SIZES)))

    pw = jax.random.normal(keys[9], (NUM_BRANCHES, Cb, C_in), dtype=jnp.float32) * 0.3
    pb = jax.random.normal(keys[10], (NUM_BRANCHES, Cb), dtype=jnp.float32) * 0.1

    out = conv_unit(x, w0, b0, dw_weights, dw_biases, pw, pb)
    out = jax.block_until_ready(out)

    ref = _reference(x, w0, b0, dw_weights, dw_biases, pw, pb)
    assert out.shape == (N, OUT_CHANNELS, L)
    assert jnp.allclose(out, ref, atol=2e-3, rtol=2e-3), "mismatch vs reference"

    print("KERNEL_OK")
</pallas_src>

<mosaic_0001>
module attributes {stable_mosaic.version = 11 : i64} {
  func.func @conv_unit_kernel(%arg0: i32, %arg1: memref<1x8x128xf32, #tpu.memory_space<vmem>>, %arg2: memref<8x8xf32, #tpu.memory_space<vmem>>, %arg3: memref<8x1xf32, #tpu.memory_space<vmem>>, %arg4: memref<4x8x3xf32, #tpu.memory_space<vmem>>, %arg5: memref<4x8x5xf32, #tpu.memory_space<vmem>>, %arg6: memref<4x8x7xf32, #tpu.memory_space<vmem>>, %arg7: memref<12x8x8xf32, #tpu.memory_space<vmem>>, %arg8: memref<12x8x1xf32, #tpu.memory_space<vmem>>, %arg9: memref<1x96x128xf32, #tpu.memory_space<vmem>>) attributes {dimension_semantics = [#tpu.dimension_semantics<parallel>], iteration_bounds = array<i64: 2>, scalar_prefetch = 0 : i64, scratch_operands = 0 : i64, tpu.core_type = #tpu.core_type<tc>, window_params = [{transform_indices = @transform_0, window_bounds = array<i64: 1, 8, 128>}, {pipeline_mode = #tpu.pipeline_mode<synchronous>, transform_indices = @transform_1, window_bounds = array<i64: 8, 8>}, {pipeline_mode = #tpu.pipeline_mode<synchronous>, transform_indices = @transform_2, window_bounds = array<i64: 8, 1>}, {pipeline_mode = #tpu.pipeline_mode<synchronous>, transform_indices = @transform_3, window_bounds = array<i64: 4, 8, 3>}, {pipeline_mode = #tpu.pipeline_mode<synchronous>, transform_indices = @transform_4, window_bounds = array<i64: 4, 8, 5>}, {pipeline_mode = #tpu.pipeline_mode<synchronous>, transform_indices = @transform_5, window_bounds = array<i64: 4, 8, 7>}, {pipeline_mode = #tpu.pipeline_mode<synchronous>, transform_indices = @transform_6, window_bounds = array<i64: 12, 8, 8>}, {pipeline_mode = #tpu.pipeline_mode<synchronous>, transform_indices = @transform_7, window_bounds = array<i64: 12, 8, 1>}, {transform_indices = @transform_8, window_bounds = array<i64: 1, 96, 128>}]} {
    %c0 = arith.constant 0 : index
    %c0_0 = arith.constant 0 : index
    %c0_1 = arith.constant 0 : index
    %0 = vector.load %arg1[%c0, %c0_0, %c0_1] : memref<1x8x128xf32, #tpu.memory_space<vmem>>, vector<1x8x128xf32>
    %1 = vector.shape_cast %0 : vector<1x8x128xf32> to vector<8x128xf32>
    %c0_2 = arith.constant 0 : index
    %c0_3 = arith.constant 0 : index
    %2 = vector.load %arg2[%c0_2, %c0_3] : memref<8x8xf32, #tpu.memory_space<vmem>>, vector<8x8xf32>
    %cst = arith.constant dense<0.000000e+00> : vector<8x128xf32>
    %3 = tpu.matmul %2, %1, %cst {dimension_numbers = #tpu.dot_dimension_numbers<[1], [0], [0], [1], [0, 0, 1, 1], [], []>} : vector<8x8xf32>, vector<8x128xf32>, vector<8x128xf32> -> vector<8x128xf32>
    %c0_4 = arith.constant 0 : index
    %c0_5 = arith.constant 0 : index
    %4 = vector.load %arg3[%c0_4, %c0_5] : memref<8x1xf32, #tpu.memory_space<vmem>>, vector<8x1xf32>
    %5 = vector.broadcast %4 : vector<8x1xf32> to vector<8x128xf32>
    %6 = arith.addf %3, %5 : vector<8x128xf32>
    %7 = tpu.iota {dimensions = array<i32: 1>} : vector<8x128xi32>
    %c0_6 = arith.constant 0 : index
    %c0_7 = arith.constant 0 : index
    %c0_8 = arith.constant 0 : index
    %8 = vector.load %arg4[%c0_6, %c0_7, %c0_8] : memref<4x8x3xf32, #tpu.memory_space<vmem>>, vector<1x8x3xf32>
    %9 = vector.shape_cast %8 : vector<1x8x3xf32> to vector<8x3xf32>
    %10 = vector.extract_strided_slice %9 {offsets = [0, 1], sizes = [8, 1], strides = [1, 1]} : vector<8x3xf32> to vector<8x1xf32>
    %11 = vector.broadcast %10 : vector<8x1xf32> to vector<8x128xf32>
    %12 = arith.mulf %11, %6 : vector<8x128xf32>
    %c1_i32 = arith.constant 1 : i32
    %13 = tpu.dynamic_rotate %6 by %c1_i32 dim 1 : vector<8x128xf32>, i32 -> vector<8x128xf32>
    %c-1_i32 = arith.constant -1 : i32
    %14 = vector.broadcast %c-1_i32 : i32 to vector<8x128xi32>
    %15 = arith.addi %7, %14 : vector<8x128xi32>
    %c0_i32 = arith.constant 0 : i32
    %16 = vector.broadcast %c0_i32 : i32 to vector<8x128xi32>
    %17 = arith.cmpi sge, %15, %16 : vector<8x128xi32>
    %c128_i32 = arith.constant 128 : i32
    %18 = vector.broadcast %c128_i32 : i32 to vector<8x128xi32>
    %19 = arith.cmpi slt, %15, %18 : vector<8x128xi32>
    %20 = arith.andi %17, %19 : vector<8x128xi1>
    %cst_9 = arith.constant 0.000000e+00 : f32
    %21 = vector.broadcast %cst_9 : f32 to vector<8x128xf32>
    %22 = arith.select %20, %13, %21 : vector<8x128xi1>, vector<8x128xf32>
    %23 = vector.extract_strided_slice %9 {offsets = [0, 0], sizes = [8, 1], strides = [1, 1]} : vector<8x3xf32> to vector<8x1xf32>
    %24 = vector.broadcast %23 : vector<8x1xf32> to vector<8x128xf32>
    %25 = arith.mulf %24, %22 : vector<8x128xf32>
    %26 = arith.addf %12, %25 : vector<8x128xf32>
    %c127_i32 = arith.constant 127 : i32
    %27 = tpu.dynamic_rotate %6 by %c127_i32 dim 1 : vector<8x128xf32>, i32 -> vector<8x128xf32>
    %c1_i32_10 = arith.constant 1 : i32
    %28 = vector.broadcast %c1_i32_10 : i32 to vector<8x128xi32>
    %29 = arith.addi %7, %28 : vector<8x128xi32>
    %c0_i32_11 = arith.constant 0 : i32
    %30 = vector.broadcast %c0_i32_11 : i32 to vector<8x128xi32>
    %31 = arith.cmpi sge, %29, %30 : vector<8x128xi32>
    %c128_i32_12 = arith.constant 128 : i32
    %32 = vector.broadcast %c128_i32_12 : i32 to vector<8x128xi32>
    %33 = arith.cmpi slt, %29, %32 : vector<8x128xi32>
    %34 = arith.andi %31, %33 : vector<8x128xi1>
    %cst_13 = arith.constant 0.000000e+00 : f32
    %35 = vector.broadcast %cst_13 : f32 to vector<8x128xf32>
    %36 = arith.select %34, %27, %35 : vector<8x128xi1>, vector<8x128xf32>
    %37 = vector.extract_strided_slice %9 {offsets = [0, 2], sizes = [8, 1], strides = [1, 1]} : vector<8x3xf32> to vector<8x1xf32>
    %38 = vector.broadcast %37 : vector<8x1xf32> to vector<8x128xf32>
    %39 = arith.mulf %38, %36 : vector<8x128xf32>
    %40 = arith.addf %26, %39 : vector<8x128xf32>
    %c0_14 = arith.constant 0 : index
    %c0_15 = arith.constant 0 : index
    %c0_16 = arith.constant 0 : index
    %41 = vector.load %arg7[%c0_14, %c0_15, %c0_16] : memref<12x8x8xf32, #tpu.memory_space<vmem>>, vector<1x8x8xf32>
    %42 = vector.shape_cast %41 : vector<1x8x8xf32> to vector<8x8xf32>
    %cst_17 = arith.constant dense<0.000000e+00> : vector<8x128xf32>
    %43 = tpu.matmul %42, %40, %cst_17 {dimension_numbers = #tpu.dot_dimension_numbers<[1], [0], [0], [1], [0, 0, 1, 1], [], []>} : vector<8x8xf32>, vector<8x128xf32>, vector<8x128xf32> -> vector<8x128xf32>
    %c0_18 = arith.constant 0 : index
    %c0_19 = arith.constant 0 : index
    %c0_20 = arith.constant 0 : index
    %44 = vector.load %arg8[%c0_18, %c0_19, %c0_20] : memref<12x8x1xf32, #tpu.memory_space<vmem>>, vector<1x8x1xf32>
    %45 = vector.shape_cast %44 : vector<1x8x1xf32> to vector<8x1xf32>
    %46 = vector.broadcast %45 : vector<8x1xf32> to vector<8x128xf32>
    %47 = arith.addf %43, %46 : vector<8x128xf32>
    %c1 = arith.constant 1 : index
    %c0_21 = arith.constant 0 : index
    %c0_22 = arith.constant 0 : index
    %48 = vector.load %arg4[%c1, %c0_21, %c0_22] : memref<4x8x3xf32, #tpu.memory_space<vmem>>, vector<1x8x3xf32>
    %49 = vector.shape_cast %48 : vector<1x8x3xf32> to vector<8x3xf32>
    %50 = vector.extract_strided_slice %49 {offsets = [0, 1], sizes = [8, 1], strides = [1, 1]} : vector<8x3xf32> to vector<8x1xf32>
    %51 = vector.broadcast %50 : vector<8x1xf32> to vector<8x128xf32>
    %52 = arith.mulf %51, %6 : vector<8x128xf32>
    %c2_i32 = arith.constant 2 : i32
    %53 = tpu.dynamic_rotate %6 by %c2_i32 dim 1 : vector<8x128xf32>, i32 -> vector<8x128xf32>
    %c-2_i32 = arith.constant -2 : i32
    %54 = vector.broadcast %c-2_i32 : i32 to vector<8x128xi32>
    %55 = arith.addi %7, %54 : vector<8x128xi32>
    %c0_i32_23 = arith.constant 0 : i32
    %56 = vector.broadcast %c0_i32_23 : i32 to vector<8x128xi32>
    %57 = arith.cmpi sge, %55, %56 : vector<8x128xi32>
    %c128_i32_24 = arith.constant 128 : i32
    %58 = vector.broadcast %c128_i32_24 : i32 to vector<8x128xi32>
    %59 = arith.cmpi slt, %55, %58 : vector<8x128xi32>
    %60 = arith.andi %57, %59 : vector<8x128xi1>
    %cst_25 = arith.constant 0.000000e+00 : f32
    %61 = vector.broadcast %cst_25 : f32 to vector<8x128xf32>
    %62 = arith.select %60, %53, %61 : vector<8x128xi1>, vector<8x128xf32>
    %63 = vector.extract_strided_slice %49 {offsets = [0, 0], sizes = [8, 1], strides = [1, 1]} : vector<8x3xf32> to vector<8x1xf32>
    %64 = vector.broadcast %63 : vector<8x1xf32> to vector<8x128xf32>
    %65 = arith.mulf %64, %62 : vector<8x128xf32>
    %66 = arith.addf %52, %65 : vector<8x128xf32>
    %c126_i32 = arith.constant 126 : i32
    %67 = tpu.dynamic_rotate %6 by %c126_i32 dim 1 : vector<8x128xf32>, i32 -> vector<8x128xf32>
    %c2_i32_26 = arith.constant 2 : i32
    %68 = vector.broadcast %c2_i32_26 : i32 to vector<8x128xi32>
    %69 = arith.addi %7, %68 : vector<8x128xi32>
    %c0_i32_27 = arith.constant 0 : i32
    %70 = vector.broadcast %c0_i32_27 : i32 to vector<8x128xi32>
    %71 = arith.cmpi sge, %69, %70 : vector<8x128xi32>
    %c128_i32_28 = arith.constant 128 : i32
    %72 = vector.broadcast %c128_i32_28 : i32 to vector<8x128xi32>
    %73 = arith.cmpi slt, %69, %72 : vector<8x128xi32>
    %74 = arith.andi %71, %73 : vector<8x128xi1>
    %cst_29 = arith.constant 0.000000e+00 : f32
    %75 = vector.broadcast %cst_29 : f32 to vector<8x128xf32>
    %76 = arith.select %74, %67, %75 : vector<8x128xi1>, vector<8x128xf32>
    %77 = vector.extract_strided_slice %49 {offsets = [0, 2], sizes = [8, 1], strides = [1, 1]} : vector<8x3xf32> to vector<8x1xf32>
    %78 = vector.broadcast %77 : vector<8x1xf32> to vector<8x128xf32>
    %79 = arith.mulf %78, %76 : vector<8x128xf32>
    %80 = arith.addf %66, %79 : vector<8x128xf32>
    %c1_30 = arith.constant 1 : index
    %c0_31 = arith.constant 0 : index
    %c0_32 = arith.constant 0 : index
    %81 = vector.load %arg7[%c1_30, %c0_31, %c0_32] : memref<12x8x8xf32, #tpu.memory_space<vmem>>, vector<1x8x8xf32>
    %82 = vector.shape_cast %81 : vector<1x8x8xf32> to vector<8x8xf32>
    %cst_33 = arith.constant dense<0.000000e+00> : vector<8x128xf32>
    %83 = tpu.matmul %82, %80, %cst_33 {dimension_numbers = #tpu.dot_dimension_numbers<[1], [0], [0], [1], [0, 0, 1, 1], [], []>} : vector<8x8xf32>, vector<8x128xf32>, vector<8x128xf32> -> vector<8x128xf32>
    %c1_34 = arith.constant 1 : index
    %c0_35 = arith.constant 0 : index
    %c0_36 = arith.constant 0 : index
    %84 = vector.load %arg8[%c1_34, %c0_35, %c0_36] : memref<12x8x1xf32, #tpu.memory_space<vmem>>, vector<1x8x1xf32>
    %85 = vector.shape_cast %84 : vector<1x8x1xf32> to vector<8x1xf32>
    %86 = vector.broadcast %85 : vector<8x1xf32> to vector<8x128xf32>
    %87 = arith.addf %83, %86 : vector<8x128xf32>
    %c2 = arith.constant 2 : index
    %c0_37 = arith.constant 0 : index
    %c0_38 = arith.constant 0 : index
    %88 = vector.load %arg4[%c2, %c0_37, %c0_38] : memref<4x8x3xf32, #tpu.memory_space<vmem>>, vector<1x8x3xf32>
    %89 = vector.shape_cast %88 : vector<1x8x3xf32> to vector<8x3xf32>
    %90 = vector.extract_strided_slice %89 {offsets = [0, 1], sizes = [8, 1], strides = [1, 1]} : vector<8x3xf32> to vector<8x1xf32>
    %91 = vector.broadcast %90 : vector<8x1xf32> to vector<8x128xf32>
    %92 = arith.mulf %91, %6 : vector<8x128xf32>
    %c4_i32 = arith.constant 4 : i32
    %93 = tpu.dynamic_rotate %6 by %c4_i32 dim 1 : vector<8x128xf32>, i32 -> vector<8x128xf32>
    %c-4_i32 = arith.constant -4 : i32
    %94 = vector.broadcast %c-4_i32 : i32 to vector<8x128xi32>
    %95 = arith.addi %7, %94 : vector<8x128xi32>
    %c0_i32_39 = arith.constant 0 : i32
    %96 = vector.broadcast %c0_i32_39 : i32 to vector<8x128xi32>
    %97 = arith.cmpi sge, %95, %96 : vector<8x128xi32>
    %c128_i32_40 = arith.constant 128 : i32
    %98 = vector.broadcast %c128_i32_40 : i32 to vector<8x128xi32>
    %99 = arith.cmpi slt, %95, %98 : vector<8x128xi32>
    %100 = arith.andi %97, %99 : vector<8x128xi1>
    %cst_41 = arith.constant 0.000000e+00 : f32
    %101 = vector.broadcast %cst_41 : f32 to vector<8x128xf32>
    %102 = arith.select %100, %93, %101 : vector<8x128xi1>, vector<8x128xf32>
    %103 = vector.extract_strided_slice %89 {offsets = [0, 0], sizes = [8, 1], strides = [1, 1]} : vector<8x3xf32> to vector<8x1xf32>
    %104 = vector.broadcast %103 : vector<8x1xf32> to vector<8x128xf32>
    %105 = arith.mulf %104, %102 : vector<8x128xf32>
    %106 = arith.addf %92, %105 : vector<8x128xf32>
    %c124_i32 = arith.constant 124 : i32
    %107 = tpu.dynamic_rotate %6 by %c124_i32 dim 1 : vector<8x128xf32>, i32 -> vector<8x128xf32>
    %c4_i32_42 = arith.constant 4 : i32
    %108 = vector.broadcast %c4_i32_42 : i32 to vector<8x128xi32>
    %109 = arith.addi %7, %108 : vector<8x128xi32>
    %c0_i32_43 = arith.constant 0 : i32
    %110 = vector.broadcast %c0_i32_43 : i32 to vector<8x128xi32>
    %111 = arith.cmpi sge, %109, %110 : vector<8x128xi32>
    %c128_i32_44 = arith.constant 128 : i32
    %112 = vector.broadcast %c128_i32_44 : i32 to vector<8x128xi32>
    %113 = arith.cmpi slt, %109, %112 : vector<8x128xi32>
    %114 = arith.andi %111, %113 : vector<8x128xi1>
    %cst_45 = arith.constant 0.000000e+00 : f32
    %115 = vector.broadcast %cst_45 : f32 to vector<8x128xf32>
    %116 = arith.select %114, %107, %115 : vector<8x128xi1>, vector<8x128xf32>
    %117 = vector.extract_strided_slice %89 {offsets = [0, 2], sizes = [8, 1], strides = [1, 1]} : vector<8x3xf32> to vector<8x1xf32>
    %118 = vector.broadcast %117 : vector<8x1xf32> to vector<8x128xf32>
    %119 = arith.mulf %118, %116 : vector<8x128xf32>
    %120 = arith.addf %106, %119 : vector<8x128xf32>
    %c2_46 = arith.constant 2 : index
    %c0_47 = arith.constant 0 : index
    %c0_48 = arith.constant 0 : index
    %121 = vector.load %arg7[%c2_46, %c0_47, %c0_48] : memref<12x8x8xf32, #tpu.memory_space<vmem>>, vector<1x8x8xf32>
    %122 = vector.shape_cast %121 : vector<1x8x8xf32> to vector<8x8xf32>
    %cst_49 = arith.constant dense<0.000000e+00> : vector<8x128xf32>
    %123 = tpu.matmul %122, %120, %cst_49 {dimension_numbers = #tpu.dot_dimension_numbers<[1], [0], [0], [1], [0, 0, 1, 1], [], []>} : vector<8x8xf32>, vector<8x128xf32>, vector<8x128xf32> -> vector<8x128xf32>
    %c2_50 = arith.constant 2 : index
    %c0_51 = arith.constant 0 : index
    %c0_52 = arith.constant 0 : index
    %124 = vector.load %arg8[%c2_50, %c0_51, %c0_52] : memref<12x8x1xf32, #tpu.memory_space<vmem>>, vector<1x8x1xf32>
    %125 = vector.shape_cast %124 : vector<1x8x1xf32> to vector<8x1xf32>
    %126 = vector.broadcast %125 : vector<8x1xf32> to vector<8x128xf32>
    %127 = arith.addf %123, %126 : vector<8x128xf32>
    %c3 = arith.constant 3 : index
    %c0_53 = arith.constant 0 : index
    %c0_54 = arith.constant 0 : index
    %128 = vector.load %arg4[%c3, %c0_53, %c0_54] : memref<4x8x3xf32, #tpu.memory_space<vmem>>, vector<1x8x3xf32>
    %129 = vector.shape_cast %128 : vector<1x8x3xf32> to vector<8x3xf32>
    %130 = vector.extract_strided_slice %129 {offsets = [0, 1], sizes = [8, 1], strides = [1, 1]} : vector<8x3xf32> to vector<8x1xf32>
    %131 = vector.broadcast %130 : vector<8x1xf32> to vector<8x128xf32>
    %132 = arith.mulf %131, %6 : vector<8x128xf32>
    %c5_i32 = arith.constant 5 : i32
    %133 = tpu.dynamic_rotate %6 by %c5_i32 dim 1 : vector<8x128xf32>, i32 -> vector<8x128xf32>
    %c-5_i32 = arith.constant -5 : i32
    %134 = vector.broadcast %c-5_i32 : i32 to vector<8x128xi32>
    %135 = arith.addi %7, %134 : vector<8x128xi32>
    %c0_i32_55 = arith.constant 0 : i32
    %136 = vector.broadcast %c0_i32_55 : i32 to vector<8x128xi32>
    %137 = arith.cmpi sge, %135, %136 : vector<8x128xi32>
    %c128_i32_56 = arith.constant 128 : i32
    %138 = vector.broadcast %c128_i32_56 : i32 to vector<8x128xi32>
    %139 = arith.cmpi slt, %135, %138 : vector<8x128xi32>
    %140 = arith.andi %137, %139 : vector<8x128xi1>
    %cst_57 = arith.constant 0.000000e+00 : f32
    %141 = vector.broadcast %cst_57 : f32 to vector<8x128xf32>
    %142 = arith.select %140, %133, %141 : vector<8x128xi1>, vector<8x128xf32>
    %143 = vector.extract_strided_slice %129 {offsets = [0, 0], sizes = [8, 1], strides = [1, 1]} : vector<8x3xf32> to vector<8x1xf32>
    %144 = vector.broadcast %143 : vector<8x1xf32> to vector<8x128xf32>
    %145 = arith.mulf %144, %142 : vector<8x128xf32>
    %146 = arith.addf %132, %145 : vector<8x128xf32>
    %c123_i32 = arith.constant 123 : i32
    %147 = tpu.dynamic_rotate %6 by %c123_i32 dim 1 : vector<8x128xf32>, i32 -> vector<8x128xf32>
    %c5_i32_58 = arith.constant 5 : i32
    %148 = vector.broadcast %c5_i32_58 : i32 to vector<8x128xi32>
    %149 = arith.addi %7, %148 : vector<8x128xi32>
    %c0_i32_59 = arith.constant 0 : i32
    %150 = vector.broadcast %c0_i32_59 : i32 to vector<8x128xi32>
    %151 = arith.cmpi sge, %149, %150 : vector<8x128xi32>
    %c128_i32_60 = arith.constant 128 : i32
    %152 = vector.broadcast %c128_i32_60 : i32 to vector<8x128xi32>
    %153 = arith.cmpi slt, %149, %152 : vector<8x128xi32>
    %154 = arith.andi %151, %153 : vector<8x128xi1>
    %cst_61 = arith.constant 0.000000e+00 : f32
    %155 = vector.broadcast %cst_61 : f32 to vector<8x128xf32>
    %156 = arith.select %154, %147, %155 : vector<8x128xi1>, vector<8x128xf32>
    %157 = vector.extract_strided_slice %129 {offsets = [0, 2], sizes = [8, 1], strides = [1, 1]} : vector<8x3xf32> to vector<8x1xf32>
    %158 = vector.broadcast %157 : vector<8x1xf32> to vector<8x128xf32>
    %159 = arith.mulf %158, %156 : vector<8x128xf32>
    %160 = arith.addf %146, %159 : vector<8x128xf32>
    %c3_62 = arith.constant 3 : index
    %c0_63 = arith.constant 0 : index
    %c0_64 = arith.constant 0 : index
    %161 = vector.load %arg7[%c3_62, %c0_63, %c0_64] : memref<12x8x8xf32, #tpu.memory_space<vmem>>, vector<1x8x8xf32>
    %162 = vector.shape_cast %161 : vector<1x8x8xf32> to vector<8x8xf32>
    %cst_65 = arith.constant dense<0.000000e+00> : vector<8x128xf32>
    %163 = tpu.matmul %162, %160, %cst_65 {dimension_numbers = #tpu.dot_dimension_numbers<[1], [0], [0], [1], [0, 0, 1, 1], [], []>} : vector<8x8xf32>, vector<8x128xf32>, vector<8x128xf32> -> vector<8x128xf32>
    %c3_66 = arith.constant 3 : index
    %c0_67 = arith.constant 0 : index
    %c0_68 = arith.constant 0 : index
    %164 = vector.load %arg8[%c3_66, %c0_67, %c0_68] : memref<12x8x1xf32, #tpu.memory_space<vmem>>, vector<1x8x1xf32>
    %165 = vector.shape_cast %164 : vector<1x8x1xf32> to vector<8x1xf32>
    %166 = vector.broadcast %165 : vector<8x1xf32> to vector<8x128xf32>
    %167 = arith.addf %163, %166 : vector<8x128xf32>
    %c0_69 = arith.constant 0 : index
    %c0_70 = arith.constant 0 : index
    %c0_71 = arith.constant 0 : index
    %168 = vector.load %arg5[%c0_69, %c0_70, %c0_71] : memref<4x8x5xf32, #tpu.memory_space<vmem>>, vector<1x8x5xf32>
    %169 = vector.shape_cast %168 : vector<1x8x5xf32> to vector<8x5xf32>
    %170 = vector.extract_strided_slice %169 {offsets = [0, 2], sizes = [8, 1], strides = [1, 1]} : vector<8x5xf32> to vector<8x1xf32>
    %171 = vector.broadcast %170 : vector<8x1xf32> to vector<8x128xf32>
    %172 = arith.mulf %171, %6 : vector<8x128xf32>
    %c2_i32_72 = arith.constant 2 : i32
    %173 = tpu.dynamic_rotate %6 by %c2_i32_72 dim 1 : vector<8x128xf32>, i32 -> vector<8x128xf32>
    %c-2_i32_73 = arith.constant -2 : i32
    %174 = vector.broadcast %c-2_i32_73 : i32 to vector<8x128xi32>
    %175 = arith.addi %7, %174 : vector<8x128xi32>
    %c0_i32_74 = arith.constant 0 : i32
    %176 = vector.broadcast %c0_i32_74 : i32 to vector<8x128xi32>
    %177 = arith.cmpi sge, %175, %176 : vector<8x128xi32>
    %c128_i32_75 = arith.constant 128 : i32
    %178 = vector.broadcast %c128_i32_75 : i32 to vector<8x128xi32>
    %179 = arith.cmpi slt, %175, %178 : vector<8x128xi32>
    %180 = arith.andi %177, %179 : vector<8x128xi1>
    %cst_76 = arith.constant 0.000000e+00 : f32
    %181 = vector.broadcast %cst_76 : f32 to vector<8x128xf32>
    %182 = arith.select %180, %173, %181 : vector<8x128xi1>, vector<8x128xf32>
    %183 = vector.extract_strided_slice %169 {offsets = [0, 0], sizes = [8, 1], strides = [1, 1]} : vector<8x5xf32> to vector<8x1xf32>
    %184 = vector.broadcast %183 : vector<8x1xf32> to vector<8x128xf32>
    %185 = arith.mulf %184, %182 : vector<8x128xf32>
    %186 = arith.addf %172, %185 : vector<8x128xf32>
    %c1_i32_77 = arith.constant 1 : i32
    %187 = tpu.dynamic_rotate %6 by %c1_i32_77 dim 1 : vector<8x128xf32>, i32 -> vector<8x128xf32>
    %c-1_i32_78 = arith.constant -1 : i32
    %188 = vector.broadcast %c-1_i32_78 : i32 to vector<8x128xi32>
    %189 = arith.addi %7, %188 : vector<8x128xi32>
    %c0_i32_79 = arith.constant 0 : i32
    %190 = vector.broadcast %c0_i32_79 : i32 to vector<8x128xi32>
    %191 = arith.cmpi sge, %189, %190 : vector<8x128xi32>
    %c128_i32_80 = arith.constant 128 : i32
    %192 = vector.broadcast %c128_i32_80 : i32 to vector<8x128xi32>
    %193 = arith.cmpi slt, %189, %192 : vector<8x128xi32>
    %194 = arith.andi %191, %193 : vector<8x128xi1>
    %cst_81 = arith.constant 0.000000e+00 : f32
    %195 = vector.broadcast %cst_81 : f32 to vector<8x128xf32>
    %196 = arith.select %194, %187, %195 : vector<8x128xi1>, vector<8x128xf32>
    %197 = vector.extract_strided_slice %169 {offsets = [0, 1], sizes = [8, 1], strides = [1, 1]} : vector<8x5xf32> to vector<8x1xf32>
    %198 = vector.broadcast %197 : vector<8x1xf32> to vector<8x128xf32>
    %199 = arith.mulf %198, %196 : vector<8x128xf32>
    %200 = arith.addf %186, %199 : vector<8x128xf32>
    %c127_i32_82 = arith.constant 127 : i32
    %201 = tpu.dynamic_rotate %6 by %c127_i32_82 dim 1 : vector<8x128xf32>, i32 -> vector<8x128xf32>
    %c1_i32_83 = arith.constant 1 : i32
    %202 = vector.broadcast %c1_i32_83 : i32 to vector<8x128xi32>
    %203 = arith.addi %7, %202 : vector<8x128xi32>
    %c0_i32_84 = arith.constant 0 : i32
    %204 = vector.broadcast %c0_i32_84 : i32 to vector<8x128xi32>
    %205 = arith.cmpi sge, %203, %204 : vector<8x128xi32>
    %c128_i32_85 = arith.constant 128 : i32
    %206 = vector.broadcast %c128_i32_85 : i32 to vector<8x128xi32>
    %207 = arith.cmpi slt, %203, %206 : vector<8x128xi32>
    %208 = arith.andi %205, %207 : vector<8x128xi1>
    %cst_86 = arith.constant 0.000000e+00 : f32
    %209 = vector.broadcast %cst_86 : f32 to vector<8x128xf32>
    %210 = arith.select %208, %201, %209 : vector<8x128xi1>, vector<8x128xf32>
    %211 = vector.extract_strided_slice %169 {offsets = [0, 3], sizes = [8, 1], strides = [1, 1]} : vector<8x5xf32> to vector<8x1xf32>
    %212 = vector.broadcast %211 : vector<8x1xf32> to vector<8x128xf32>
    %213 = arith.mulf %212, %210 : vector<8x128xf32>
    %214 = arith.addf %200, %213 : vector<8x128xf32>
    %c126_i32_87 = arith.constant 126 : i32
    %215 = tpu.dynamic_rotate %6 by %c126_i32_87 dim 1 : vector<8x128xf32>, i32 -> vector<8x128xf32>
    %c2_i32_88 = arith.constant 2 : i32
    %216 = vector.broadcast %c2_i32_88 : i32 to vector<8x128xi32>
    %217 = arith.addi %7, %216 : vector<8x128xi32>
    %c0_i32_89 = arith.constant 0 : i32
    %218 = vector.broadcast %c0_i32_89 : i32 to vector<8x128xi32>
    %219 = arith.cmpi sge, %217, %218 : vector<8x128xi32>
    %c128_i32_90 = arith.constant 128 : i32
    %220 = vector.broadcast %c128_i32_90 : i32 to vector<8x128xi32>
    %221 = arith.cmpi slt, %217, %220 : vector<8x128xi32>
    %222 = arith.andi %219, %221 : vector<8x128xi1>
    %cst_91 = arith.constant 0.000000e+00 : f32
    %223 = vector.broadcast %cst_91 : f32 to vector<8x128xf32>
    %224 = arith.select %222, %215, %223 : vector<8x128xi1>, vector<8x128xf32>
    %225 = vector.extract_strided_slice %169 {offsets = [0, 4], sizes = [8, 1], strides = [1, 1]} : vector<8x5xf32> to vector<8x1xf32>
    %226 = vector.broadcast %225 : vector<8x1xf32> to vector<8x128xf32>
    %227 = arith.mulf %226, %224 : vector<8x128xf32>
    %228 = arith.addf %214, %227 : vector<8x128xf32>
    %c4 = arith.constant 4 : index
    %c0_92 = arith.constant 0 : index
    %c0_93 = arith.constant 0 : index
    %229 = vector.load %arg7[%c4, %c0_92, %c0_93] : memref<12x8x8xf32, #tpu.memory_space<vmem>>, vector<1x8x8xf32>
    %230 = vector.shape_cast %229 : vector<1x8x8xf32> to vector<8x8xf32>
    %cst_94 = arith.constant dense<0.000000e+00> : vector<8x128xf32>
    %231 = tpu.matmul %230, %228, %cst_94 {dimension_numbers = #tpu.dot_dimension_numbers<[1], [0], [0], [1], [0, 0, 1, 1], [], []>} : vector<8x8xf32>, vector<8x128xf32>, vector<8x128xf32> -> vector<8x128xf32>
    %c4_95 = arith.constant 4 : index
    %c0_96 = arith.constant 0 : index
    %c0_97 = arith.constant 0 : index
    %232 = vector.load %arg8[%c4_95, %c0_96, %c0_97] : memref<12x8x1xf32, #tpu.memory_space<vmem>>, vector<1x8x1xf32>
    %233 = vector.shape_cast %232 : vector<1x8x1xf32> to vector<8x1xf32>
    %234 = vector.broadcast %233 : vector<8x1xf32> to vector<8x128xf32>
    %235 = arith.addf %231, %234 : vector<8x128xf32>
    %c1_98 = arith.constant 1 : index
    %c0_99 = arith.constant 0 : index
    %c0_100 = arith.constant 0 : index
    %236 = vector.load %arg5[%c1_98, %c0_99, %c0_100] : memref<4x8x5xf32, #tpu.memory_space<vmem>>, vector<1x8x5xf32>
    %237 = vector.shape_cast %236 : vector<1x8x5xf32> to vector<8x5xf32>
    %238 = vector.extract_strided_slice %237 {offsets = [0, 2], sizes = [8, 1], strides = [1, 1]} : vector<8x5xf32> to vector<8x1xf32>
    %239 = vector.broadcast %238 : vector<8x1xf32> to vector<8x128xf32>
    %240 = arith.mulf %239, %6 : vector<8x128xf32>
    %c4_i32_101 = arith.constant 4 : i32
    %241 = tpu.dynamic_rotate %6 by %c4_i32_101 dim 1 : vector<8x128xf32>, i32 -> vector<8x128xf32>
    %c-4_i32_102 = arith.constant -4 : i32
    %242 = vector.broadcast %c-4_i32_102 : i32 to vector<8x128xi32>
    %243 = arith.addi %7, %242 : vector<8x128xi32>
    %c0_i32_103 = arith.constant 0 : i32
    %244 = vector.broadcast %c0_i32_103 : i32 to vector<8x128xi32>
    %245 = arith.cmpi sge, %243, %244 : vector<8x128xi32>
    %c128_i32_104 = arith.constant 128 : i32
    %246 = vector.broadcast %c128_i32_104 : i32 to vector<8x128xi32>
    %247 = arith.cmpi slt, %243, %246 : vector<8x128xi32>
    %248 = arith.andi %245, %247 : vector<8x128xi1>
    %cst_105 = arith.constant 0.000000e+00 : f32
    %249 = vector.broadcast %cst_105 : f32 to vector<8x128xf32>
    %250 = arith.select %248, %241, %249 : vector<8x128xi1>, vector<8x128xf32>
    %251 = vector.extract_strided_slice %237 {offsets = [0, 0], sizes = [8, 1], strides = [1, 1]} : vector<8x5xf32> to vector<8x1xf32>
    %252 = vector.broadcast %251 : vector<8x1xf32> to vector<8x128xf32>
    %253 = arith.mulf %252, %250 : vector<8x128xf32>
    %254 = arith.addf %240, %253 : vector<8x128xf32>
    %c2_i32_106 = arith.constant 2 : i32
    %255 = tpu.dynamic_rotate %6 by %c2_i32_106 dim 1 : vector<8x128xf32>, i32 -> vector<8x128xf32>
    %c-2_i32_107 = arith.constant -2 : i32
    %256 = vector.broadcast %c-2_i32_107 : i32 to vector<8x128xi32>
    %257 = arith.addi %7, %256 : vector<8x128xi32>
    %c0_i32_108 = arith.constant 0 : i32
    %258 = vector.broadcast %c0_i32_108 : i32 to vector<8x128xi32>
    %259 = arith.cmpi sge, %257, %258 : vector<8x128xi32>
    %c128_i32_109 = arith.constant 128 : i32
    %260 = vector.broadcast %c128_i32_109 : i32 to vector<8x128xi32>
    %261 = arith.cmpi slt, %257, %260 : vector<8x128xi32>
    %262 = arith.andi %259, %261 : vector<8x128xi1>
    %cst_110 = arith.constant 0.000000e+00 : f32
    %263 = vector.broadcast %cst_110 : f32 to vector<8x128xf32>
    %264 = arith.select %262, %255, %263 : vector<8x128xi1>, vector<8x128xf32>
    %265 = vector.extract_strided_slice %237 {offsets = [0, 1], sizes = [8, 1], strides = [1, 1]} : vector<8x5xf32> to vector<8x1xf32>
    %266 = vector.broadcast %265 : vector<8x1xf32> to vector<8x128xf32>
    %267 = arith.mulf %266, %264 : vector<8x128xf32>
    %268 = arith.addf %254, %267 : vector<8x128xf32>
    %c126_i32_111 = arith.constant 126 : i32
    %269 = tpu.dynamic_rotate %6 by %c126_i32_111 dim 1 : vector<8x128xf32>, i32 -> vector<8x128xf32>
    %c2_i32_112 = arith.constant 2 : i32
    %270 = vector.broadcast %c2_i32_112 : i32 to vector<8x128xi32>
    %271 = arith.addi %7, %270 : vector<8x128xi32>
    %c0_i32_113 = arith.constant 0 : i32
    %272 = vector.broadcast %c0_i32_113 : i32 to vector<8x128xi32>
    %273 = arith.cmpi sge, %271, %272 : vector<8x128xi32>
    %c128_i32_114 = arith.constant 128 : i32
    %274 = vector.broadcast %c128_i32_114 : i32 to vector<8x128xi32>
    %275 = arith.cmpi slt, %271, %274 : vector<8x128xi32>
    %276 = arith.andi %273, %275 : vector<8x128xi1>
    %cst_115 = arith.constant 0.000000e+00 : f32
    %277 = vector.broadcast %cst_115 : f32 to vector<8x128xf32>
    %278 = arith.select %276, %269, %277 : vector<8x128xi1>, vector<8x128xf32>
    %279 = vector.extract_strided_slice %237 {offsets = [0, 3], sizes = [8, 1], strides = [1, 1]} : vector<8x5xf32> to vector<8x1xf32>
    %280 = vector.broadcast %279 : vector<8x1xf32> to vector<8x128xf32>
    %281 = arith.mulf %280, %278 : vector<8x128xf32>
    %282 = arith.addf %268, %281 : vector<8x128xf32>
    %c124_i32_116 = arith.constant 124 : i32
    %283 = tpu.dynamic_rotate %6 by %c124_i32_116 dim 1 : vector<8x128xf32>, i32 -> vector<8x128xf32>
    %c4_i32_117 = arith.constant 4 : i32
    %284 = vector.broadcast %c4_i32_117 : i32 to vector<8x128xi32>
    %285 = arith.addi %7, %284 : vector<8x128xi32>
    %c0_i32_118 = arith.constant 0 : i32
    %286 = vector.broadcast %c0_i32_118 : i32 to vector<8x128xi32>
    %287 = arith.cmpi sge, %285, %286 : vector<8x128xi32>
    %c128_i32_119 = arith.constant 128 : i32
    %288 = vector.broadcast %c128_i32_119 : i32 to vector<8x128xi32>
    %289 = arith.cmpi slt, %285, %288 : vector<8x128xi32>
    %290 = arith.andi %287, %289 : vector<8x128xi1>
    %cst_120 = arith.constant 0.000000e+00 : f32
    %291 = vector.broadcast %cst_120 : f32 to vector<8x128xf32>
    %292 = arith.select %290, %283, %291 : vector<8x128xi1>, vector<8x128xf32>
    %293 = vector.extract_strided_slice %237 {offsets = [0, 4], sizes = [8, 1], strides = [1, 1]} : vector<8x5xf32> to vector<8x1xf32>
    %294 = vector.broadcast %293 : vector<8x1xf32> to vector<8x128xf32>
    %295 = arith.mulf %294, %292 : vector<8x128xf32>
    %296 = arith.addf %282, %295 : vector<8x128xf32>
    %c5 = arith.constant 5 : index
    %c0_121 = arith.constant 0 : index
    %c0_122 = arith.constant 0 : index
    %297 = vector.load %arg7[%c5, %c0_121, %c0_122] : memref<12x8x8xf32, #tpu.memory_space<vmem>>, vector<1x8x8xf32>
    %298 = vector.shape_cast %297 : vector<1x8x8xf32> to vector<8x8xf32>
    %cst_123 = arith.constant dense<0.000000e+00> : vector<8x128xf32>
    %299 = tpu.matmul %298, %296, %cst_123 {dimension_numbers = #tpu.dot_dimension_numbers<[1], [0], [0], [1], [0, 0, 1, 1], [], []>} : vector<8x8xf32>, vector<8x128xf32>, vector<8x128xf32> -> vector<8x128xf32>
    %c5_124 = arith.constant 5 : index
    %c0_125 = arith.constant 0 : index
    %c0_126 = arith.constant 0 : index
    %300 = vector.load %arg8[%c5_124, %c0_125, %c0_126] : memref<12x8x1xf32, #tpu.memory_space<vmem>>, vector<1x8x1xf32>
    %301 = vector.shape_cast %300 : vector<1x8x1xf32> to vector<8x1xf32>
    %302 = vector.broadcast %301 : vector<8x1xf32> to vector<8x128xf32>
    %303 = arith.addf %299, %302 : vector<8x128xf32>
    %c2_127 = arith.constant 2 : index
    %c0_128 = arith.constant 0 : index
    %c0_129 = arith.constant 0 : index
    %304 = vector.load %arg5[%c2_127, %c0_128, %c0_129] : memref<4x8x5xf32, #tpu.memory_space<vmem>>, vector<1x8x5xf32>
    %305 = vector.shape_cast %304 : vector<1x8x5xf32> to vector<8x5xf32>
    %306 = vector.extract_strided_slice %305 {offsets = [0, 2], sizes = [8, 1], strides = [1, 1]} : vector<8x5xf32> to vector<8x1xf32>
    %307 = vector.broadcast %306 : vector<8x1xf32> to vector<8x128xf32>
    %308 = arith.mulf %307, %6 : vector<8x128xf32>
    %c8_i32 = arith.constant 8 : i32
    %309 = tpu.dynamic_rotate %6 by %c8_i32 dim 1 : vector<8x128xf32>, i32 -> vector<8x128xf32>
    %c-8_i32 = arith.constant -8 : i32
    %310 = vector.broadcast %c-8_i32 : i32 to vector<8x128xi32>
    %311 = arith.addi %7, %310 : vector<8x128xi32>
    %c0_i32_130 = arith.constant 0 : i32
    %312 = vector.broadcast %c0_i32_130 : i32 to vector<8x128xi32>
    %313 = arith.cmpi sge, %311, %312 : vector<8x128xi32>
    %c128_i32_131 = arith.constant 128 : i32
    %314 = vector.broadcast %c128_i32_131 : i32 to vector<8x128xi32>
    %315 = arith.cmpi slt, %311, %314 : vector<8x128xi32>
    %316 = arith.andi %313, %315 : vector<8x128xi1>
    %cst_132 = arith.constant 0.000000e+00 : f32
    %317 = vector.broadcast %cst_132 : f32 to vector<8x128xf32>
    %318 = arith.select %316, %309, %317 : vector<8x128xi1>, vector<8x128xf32>
    %319 = vector.extract_strided_slice %305 {offsets = [0, 0], sizes = [8, 1], strides = [1, 1]} : vector<8x5xf32> to vector<8x1xf32>
    %320 = vector.broadcast %319 : vector<8x1xf32> to vector<8x128xf32>
    %321 = arith.mulf %320, %318 : vector<8x128xf32>
    %322 = arith.addf %308, %321 : vector<8x128xf32>
    %c4_i32_133 = arith.constant 4 : i32
    %323 = tpu.dynamic_rotate %6 by %c4_i32_133 dim 1 : vector<8x128xf32>, i32 -> vector<8x128xf32>
    %c-4_i32_134 = arith.constant -4 : i32
    %324 = vector.broadcast %c-4_i32_134 : i32 to vector<8x128xi32>
    %325 = arith.addi %7, %324 : vector<8x128xi32>
    %c0_i32_135 = arith.constant 0 : i32
    %326 = vector.broadcast %c0_i32_135 : i32 to vector<8x128xi32>
    %327 = arith.cmpi sge, %325, %326 : vector<8x128xi32>
    %c128_i32_136 = arith.constant 128 : i32
    %328 = vector.broadcast %c128_i32_136 : i32 to vector<8x128xi32>
    %329 = arith.cmpi slt, %325, %328 : vector<8x128xi32>
    %330 = arith.andi %327, %329 : vector<8x128xi1>
    %cst_137 = arith.constant 0.000000e+00 : f32
    %331 = vector.broadcast %cst_137 : f32 to vector<8x128xf32>
    %332 = arith.select %330, %323, %331 : vector<8x128xi1>, vector<8x128xf32>
    %333 = vector.extract_strided_slice %305 {offsets = [0, 1], sizes = [8, 1], strides = [1, 1]} : vector<8x5xf32> to vector<8x1xf32>
    %334 = vector.broadcast %333 : vector<8x1xf32> to vector<8x128xf32>
    %335 = arith.mulf %334, %332 : vector<8x128xf32>
    %336 = arith.addf %322, %335 : vector<8x128xf32>
    %c124_i32_138 = arith.constant 124 : i32
    %337 = tpu.dynamic_rotate %6 by %c124_i32_138 dim 1 : vector<8x128xf32>, i32 -> vector<8x128xf32>
    %c4_i32_139 = arith.constant 4 : i32
    %338 = vector.broadcast %c4_i32_139 : i32 to vector<8x128xi32>
    %339 = arith.addi %7, %338 : vector<8x128xi32>
    %c0_i32_140 = arith.constant 0 : i32
    %340 = vector.broadcast %c0_i32_140 : i32 to vector<8x128xi32>
    %341 = arith.cmpi sge, %339, %340 : vector<8x128xi32>
    %c128_i32_141 = arith.constant 128 : i32
    %342 = vector.broadcast %c128_i32_141 : i32 to vector<8x128xi32>
    %343 = arith.cmpi slt, %339, %342 : vector<8x128xi32>
    %344 = arith.andi %341, %343 : vector<8x128xi1>
    %cst_142 = arith.constant 0.000000e+00 : f32
    %345 = vector.broadcast %cst_142 : f32 to vector<8x128xf32>
    %346 = arith.select %344, %337, %345 : vector<8x128xi1>, vector<8x128xf32>
    %347 = vector.extract_strided_slice %305 {offsets = [0, 3], sizes = [8, 1], strides = [1, 1]} : vector<8x5xf32> to vector<8x1xf32>
    %348 = vector.broadcast %347 : vector<8x1xf32> to vector<8x128xf32>
    %349 = arith.mulf %348, %346 : vector<8x128xf32>
    %350 = arith.addf %336, %349 : vector<8x128xf32>
    %c120_i32 = arith.constant 120 : i32
    %351 = tpu.dynamic_rotate %6 by %c120_i32 dim 1 : vector<8x128xf32>, i32 -> vector<8x128xf32>
    %c8_i32_143 = arith.constant 8 : i32
    %352 = vector.broadcast %c8_i32_143 : i32 to vector<8x128xi32>
    %353 = arith.addi %7, %352 : vector<8x128xi32>
    %c0_i32_144 = arith.constant 0 : i32
    %354 = vector.broadcast %c0_i32_144 : i32 to vector<8x128xi32>
    %355 = arith.cmpi sge, %353, %354 : vector<8x128xi32>
    %c128_i32_145 = arith.constant 128 : i32
    %356 = vector.broadcast %c128_i32_145 : i32 to vector<8x128xi32>
    %357 = arith.cmpi slt, %353, %356 : vector<8x128xi32>
    %358 = arith.andi %355, %357 : vector<8x128xi1>
    %cst_146 = arith.constant 0.000000e+00 : f32
    %359 = vector.broadcast %cst_146 : f32 to vector<8x128xf32>
    %360 = arith.select %358, %351, %359 : vector<8x128xi1>, vector<8x128xf32>
    %361 = vector.extract_strided_slice %305 {offsets = [0, 4], sizes = [8, 1], strides = [1, 1]} : vector<8x5xf32> to vector<8x1xf32>
    %362 = vector.broadcast %361 : vector<8x1xf32> to vector<8x128xf32>
    %363 = arith.mulf %362, %360 : vector<8x128xf32>
    %364 = arith.addf %350, %363 : vector<8x128xf32>
    %c6 = arith.constant 6 : index
    %c0_147 = arith.constant 0 : index
    %c0_148 = arith.constant 0 : index
    %365 = vector.load %arg7[%c6, %c0_147, %c0_148] : memref<12x8x8xf32, #tpu.memory_space<vmem>>, vector<1x8x8xf32>
    %366 = vector.shape_cast %365 : vector<1x8x8xf32> to vector<8x8xf32>
    %cst_149 = arith.constant dense<0.000000e+00> : vector<8x128xf32>
    %367 = tpu.matmul %366, %364, %cst_149 {dimension_numbers = #tpu.dot_dimension_numbers<[1], [0], [0], [1], [0, 0, 1, 1], [], []>} : vector<8x8xf32>, vector<8x128xf32>, vector<8x128xf32> -> vector<8x128xf32>
    %c6_150 = arith.constant 6 : index
    %c0_151 = arith.constant 0 : index
    %c0_152 = arith.constant 0 : index
    %368 = vector.load %arg8[%c6_150, %c0_151, %c0_152] : memref<12x8x1xf32, #tpu.memory_space<vmem>>, vector<1x8x1xf32>
    %369 = vector.shape_cast %368 : vector<1x8x1xf32> to vector<8x1xf32>
    %370 = vector.broadcast %369 : vector<8x1xf32> to vector<8x128xf32>
    %371 = arith.addf %367, %370 : vector<8x128xf32>
    %c3_153 = arith.constant 3 : index
    %c0_154 = arith.constant 0 : index
    %c0_155 = arith.constant 0 : index
    %372 = vector.load %arg5[%c3_153, %c0_154, %c0_155] : memref<4x8x5xf32, #tpu.memory_space<vmem>>, vector<1x8x5xf32>
    %373 = vector.shape_cast %372 : vector<1x8x5xf32> to vector<8x5xf32>
    %374 = vector.extract_strided_slice %373 {offsets = [0, 2], sizes = [8, 1], strides = [1, 1]} : vector<8x5xf32> to vector<8x1xf32>
    %375 = vector.broadcast %374 : vector<8x1xf32> to vector<8x128xf32>
    %376 = arith.mulf %375, %6 : vector<8x128xf32>
    %c10_i32 = arith.constant 10 : i32
    %377 = tpu.dynamic_rotate %6 by %c10_i32 dim 1 : vector<8x128xf32>, i32 -> vector<8x128xf32>
    %c-10_i32 = arith.constant -10 : i32
    %378 = vector.broadcast %c-10_i32 : i32 to vector<8x128xi32>
    %379 = arith.addi %7, %378 : vector<8x128xi32>
    %c0_i32_156 = arith.constant 0 : i32
    %380 = vector.broadcast %c0_i32_156 : i32 to vector<8x128xi32>
    %381 = arith.cmpi sge, %379, %380 : vector<8x128xi32>
    %c128_i32_157 = arith.constant 128 : i32
    %382 = vector.broadcast %c128_i32_157 : i32 to vector<8x128xi32>
    %383 = arith.cmpi slt, %379, %382 : vector<8x128xi32>
    %384 = arith.andi %381, %383 : vector<8x128xi1>
    %cst_158 = arith.constant 0.000000e+00 : f32
    %385 = vector.broadcast %cst_158 : f32 to vector<8x128xf32>
    %386 = arith.select %384, %377, %385 : vector<8x128xi1>, vector<8x128xf32>
    %387 = vector.extract_strided_slice %373 {offsets = [0, 0], sizes = [8, 1], strides = [1, 1]} : vector<8x5xf32> to vector<8x1xf32>
    %388 = vector.broadcast %387 : vector<8x1xf32> to vector<8x128xf32>
    %389 = arith.mulf %388, %386 : vector<8x128xf32>
    %390 = arith.addf %376, %389 : vector<8x128xf32>
    %c5_i32_159 = arith.constant 5 : i32
    %391 = tpu.dynamic_rotate %6 by %c5_i32_159 dim 1 : vector<8x128xf32>, i32 -> vector<8x128xf32>
    %c-5_i32_160 = arith.constant -5 : i32
    %392 = vector.broadcast %c-5_i32_160 : i32 to vector<8x128xi32>
    %393 = arith.addi %7, %392 : vector<8x128xi32>
    %c0_i32_161 = arith.constant 0 : i32
    %394 = vector.broadcast %c0_i32_161 : i32 to vector<8x128xi32>
    %395 = arith.cmpi sge, %393, %394 : vector<8x128xi32>
    %c128_i32_162 = arith.constant 128 : i32
    %396 = vector.broadcast %c128_i32_162 : i32 to vector<8x128xi32>
    %397 = arith.cmpi slt, %393, %396 : vector<8x128xi32>
    %398 = arith.andi %395, %397 : vector<8x128xi1>
    %cst_163 = arith.constant 0.000000e+00 : f32
    %399 = vector.broadcast %cst_163 : f32 to vector<8x128xf32>
    %400 = arith.select %398, %391, %399 : vector<8x128xi1>, vector<8x128xf32>
    %401 = vector.extract_strided_slice %373 {offsets = [0, 1], sizes = [8, 1], strides = [1, 1]} : vector<8x5xf32> to vector<8x1xf32>
    %402 = vector.broadcast %401 : vector<8x1xf32> to vector<8x128xf32>
    %403 = arith.mulf %402, %400 : vector<8x128xf32>
    %404 = arith.addf %390, %403 : vector<8x128xf32>
    %c123_i32_164 = arith.constant 123 : i32
    %405 = tpu.dynamic_rotate %6 by %c123_i32_164 dim 1 : vector<8x128xf32>, i32 -> vector<8x128xf32>
    %c5_i32_165 = arith.constant 5 : i32
    %406 = vector.broadcast %c5_i32_165 : i32 to vector<8x128xi32>
    %407 = arith.addi %7, %406 : vector<8x128xi32>
    %c0_i32_166 = arith.constant 0 : i32
    %408 = vector.broadcast %c0_i32_166 : i32 to vector<8x128xi32>
    %409 = arith.cmpi sge, %407, %408 : vector<8x128xi32>
    %c128_i32_167 = arith.constant 128 : i32
    %410 = vector.broadcast %c128_i32_167 : i32 to vector<8x128xi32>
    %411 = arith.cmpi slt, %407, %410 : vector<8x128xi32>
    %412 = arith.andi %409, %411 : vector<8x128xi1>
    %cst_168 = arith.constant 0.000000e+00 : f32
    %413 = vector.broadcast %cst_168 : f32 to vector<8x128xf32>
    %414 = arith.select %412, %405, %413 : vector<8x128xi1>, vector<8x128xf32>
    %415 = vector.extract_strided_slice %373 {offsets = [0, 3], sizes = [8, 1], strides = [1, 1]} : vector<8x5xf32> to vector<8x1xf32>
    %416 = vector.broadcast %415 : vector<8x1xf32> to vector<8x128xf32>
    %417 = arith.mulf %416, %414 : vector<8x128xf32>
    %418 = arith.addf %404, %417 : vector<8x128xf32>
    %c118_i32 = arith.constant 118 : i32
    %419 = tpu.dynamic_rotate %6 by %c118_i32 dim 1 : vector<8x128xf32>, i32 -> vector<8x128xf32>
    %c10_i32_169 = arith.constant 10 : i32
    %420 = vector.broadcast %c10_i32_169 : i32 to vector<8x128xi32>
    %421 = arith.addi %7, %420 : vector<8x128xi32>
    %c0_i32_170 = arith.constant 0 : i32
    %422 = vector.broadcast %c0_i32_170 : i32 to vector<8x128xi32>
    %423 = arith.cmpi sge, %421, %422 : vector<8x128xi32>
    %c128_i32_171 = arith.constant 128 : i32
    %424 = vector.broadcast %c128_i32_171 : i32 to vector<8x128xi32>
    %425 = arith.cmpi slt, %421, %424 : vector<8x128xi32>
    %426 = arith.andi %423, %425 : vector<8x128xi1>
    %cst_172 = arith.constant 0.000000e+00 : f32
    %427 = vector.broadcast %cst_172 : f32 to vector<8x128xf32>
    %428 = arith.select %426, %419, %427 : vector<8x128xi1>, vector<8x128xf32>
    %429 = vector.extract_strided_slice %373 {offsets = [0, 4], sizes = [8, 1], strides = [1, 1]} : vector<8x5xf32> to vector<8x1xf32>
    %430 = vector.broadcast %429 : vector<8x1xf32> to vector<8x128xf32>
    %431 = arith.mulf %430, %428 : vector<8x128xf32>
    %432 = arith.addf %418, %431 : vector<8x128xf32>
    %c7 = arith.constant 7 : index
    %c0_173 = arith.constant 0 : index
    %c0_174 = arith.constant 0 : index
    %433 = vector.load %arg7[%c7, %c0_173, %c0_174] : memref<12x8x8xf32, #tpu.memory_space<vmem>>, vector<1x8x8xf32>
    %434 = vector.shape_cast %433 : vector<1x8x8xf32> to vector<8x8xf32>
    %cst_175 = arith.constant dense<0.000000e+00> : vector<8x128xf32>
    %435 = tpu.matmul %434, %432, %cst_175 {dimension_numbers = #tpu.dot_dimension_numbers<[1], [0], [0], [1], [0, 0, 1, 1], [], []>} : vector<8x8xf32>, vector<8x128xf32>, vector<8x128xf32> -> vector<8x128xf32>
    %c7_176 = arith.constant 7 : index
    %c0_177 = arith.constant 0 : index
    %c0_178 = arith.constant 0 : index
    %436 = vector.load %arg8[%c7_176, %c0_177, %c0_178] : memref<12x8x1xf32, #tpu.memory_space<vmem>>, vector<1x8x1xf32>
    %437 = vector.shape_cast %436 : vector<1x8x1xf32> to vector<8x1xf32>
    %438 = vector.broadcast %437 : vector<8x1xf32> to vector<8x128xf32>
    %439 = arith.addf %435, %438 : vector<8x128xf32>
    %c0_179 = arith.constant 0 : index
    %c0_180 = arith.constant 0 : index
    %c0_181 = arith.constant 0 : index
    %440 = vector.load %arg6[%c0_179, %c0_180, %c0_181] : memref<4x8x7xf32, #tpu.memory_space<vmem>>, vector<1x8x7xf32>
    %441 = vector.shape_cast %440 : vector<1x8x7xf32> to vector<8x7xf32>
    %442 = vector.extract_strided_slice %441 {offsets = [0, 3], sizes = [8, 1], strides = [1, 1]} : vector<8x7xf32> to vector<8x1xf32>
    %443 = vector.broadcast %442 : vector<8x1xf32> to vector<8x128xf32>
    %444 = arith.mulf %443, %6 : vector<8x128xf32>
    %c3_i32 = arith.constant 3 : i32
    %445 = tpu.dynamic_rotate %6 by %c3_i32 dim 1 : vector<8x128xf32>, i32 -> vector<8x128xf32>
    %c-3_i32 = arith.constant -3 : i32
    %446 = vector.broadcast %c-3_i32 : i32 to vector<8x128xi32>
    %447 = arith.addi %7, %446 : vector<8x128xi32>
    %c0_i32_182 = arith.constant 0 : i32
    %448 = vector.broadcast %c0_i32_182 : i32 to vector<8x128xi32>
    %449 = arith.cmpi sge, %447, %448 : vector<8x128xi32>
    %c128_i32_183 = arith.constant 128 : i32
    %450 = vector.broadcast %c128_i32_183 : i32 to vector<8x128xi32>
    %451 = arith.cmpi slt, %447, %450 : vector<8x128xi32>
    %452 = arith.andi %449, %451 : vector<8x128xi1>
    %cst_184 = arith.constant 0.000000e+00 : f32
    %453 = vector.broadcast %cst_184 : f32 to vector<8x128xf32>
    %454 = arith.select %452, %445, %453 : vector<8x128xi1>, vector<8x128xf32>
    %455 = vector.extract_strided_slice %441 {offsets = [0, 0], sizes = [8, 1], strides = [1, 1]} : vector<8x7xf32> to vector<8x1xf32>
    %456 = vector.broadcast %455 : vector<8x1xf32> to vector<8x128xf32>
    %457 = arith.mulf %456, %454 : vector<8x128xf32>
    %458 = arith.addf %444, %457 : vector<8x128xf32>
    %c2_i32_185 = arith.constant 2 : i32
    %459 = tpu.dynamic_rotate %6 by %c2_i32_185 dim 1 : vector<8x128xf32>, i32 -> vector<8x128xf32>
    %c-2_i32_186 = arith.constant -2 : i32
    %460 = vector.broadcast %c-2_i32_186 : i32 to vector<8x128xi32>
    %461 = arith.addi %7, %460 : vector<8x128xi32>
    %c0_i32_187 = arith.constant 0 : i32
    %462 = vector.broadcast %c0_i32_187 : i32 to vector<8x128xi32>
    %463 = arith.cmpi sge, %461, %462 : vector<8x128xi32>
    %c128_i32_188 = arith.constant 128 : i32
    %464 = vector.broadcast %c128_i32_188 : i32 to vector<8x128xi32>
    %465 = arith.cmpi slt, %461, %464 : vector<8x128xi32>
    %466 = arith.andi %463, %465 : vector<8x128xi1>
    %cst_189 = arith.constant 0.000000e+00 : f32
    %467 = vector.broadcast %cst_189 : f32 to vector<8x128xf32>
    %468 = arith.select %466, %459, %467 : vector<8x128xi1>, vector<8x128xf32>
    %469 = vector.extract_strided_slice %441 {offsets = [0, 1], sizes = [8, 1], strides = [1, 1]} : vector<8x7xf32> to vector<8x1xf32>
    %470 = vector.broadcast %469 : vector<8x1xf32> to vector<8x128xf32>
    %471 = arith.mulf %470, %468 : vector<8x128xf32>
    %472 = arith.addf %458, %471 : vector<8x128xf32>
    %c1_i32_190 = arith.constant 1 : i32
    %473 = tpu.dynamic_rotate %6 by %c1_i32_190 dim 1 : vector<8x128xf32>, i32 -> vector<8x128xf32>
    %c-1_i32_191 = arith.constant -1 : i32
    %474 = vector.broadcast %c-1_i32_191 : i32 to vector<8x128xi32>
    %475 = arith.addi %7, %474 : vector<8x128xi32>
    %c0_i32_192 = arith.constant 0 : i32
    %476 = vector.broadcast %c0_i32_192 : i32 to vector<8x128xi32>
    %477 = arith.cmpi sge, %475, %476 : vector<8x128xi32>
    %c128_i32_193 = arith.constant 128 : i32
    %478 = vector.broadcast %c128_i32_193 : i32 to vector<8x128xi32>
    %479 = arith.cmpi slt, %475, %478 : vector<8x128xi32>
    %480 = arith.andi %477, %479 : vector<8x128xi1>
    %cst_194 = arith.constant 0.000000e+00 : f32
    %481 = vector.broadcast %cst_194 : f32 to vector<8x128xf32>
    %482 = arith.select %480, %473, %481 : vector<8x128xi1>, vector<8x128xf32>
    %483 = vector.extract_strided_slice %441 {offsets = [0, 2], sizes = [8, 1], strides = [1, 1]} : vector<8x7xf32> to vector<8x1xf32>
    %484 = vector.broadcast %483 : vector<8x1xf32> to vector<8x128xf32>
    %485 = arith.mulf %484, %482 : vector<8x128xf32>
    %486 = arith.addf %472, %485 : vector<8x128xf32>
    %c127_i32_195 = arith.constant 127 : i32
    %487 = tpu.dynamic_rotate %6 by %c127_i32_195 dim 1 : vector<8x128xf32>, i32 -> vector<8x128xf32>
    %c1_i32_196 = arith.constant 1 : i32
    %488 = vector.broadcast %c1_i32_196 : i32 to vector<8x128xi32>
    %489 = arith.addi %7, %488 : vector<8x128xi32>
    %c0_i32_197 = arith.constant 0 : i32
    %490 = vector.broadcast %c0_i32_197 : i32 to vector<8x128xi32>
    %491 = arith.cmpi sge, %489, %490 : vector<8x128xi32>
    %c128_i32_198 = arith.constant 128 : i32
    %492 = vector.broadcast %c128_i32_198 : i32 to vector<8x128xi32>
    %493 = arith.cmpi slt, %489, %492 : vector<8x128xi32>
    %494 = arith.andi %491, %493 : vector<8x128xi1>
    %cst_199 = arith.constant 0.000000e+00 : f32
    %495 = vector.broadcast %cst_199 : f32 to vector<8x128xf32>
    %496 = arith.select %494, %487, %495 : vector<8x128xi1>, vector<8x128xf32>
    %497 = vector.extract_strided_slice %441 {offsets = [0, 4], sizes = [8, 1], strides = [1, 1]} : vector<8x7xf32> to vector<8x1xf32>
    %498 = vector.broadcast %497 : vector<8x1xf32> to vector<8x128xf32>
    %499 = arith.mulf %498, %496 : vector<8x128xf32>
    %500 = arith.addf %486, %499 : vector<8x128xf32>
    %c126_i32_200 = arith.constant 126 : i32
    %501 = tpu.dynamic_rotate %6 by %c126_i32_200 dim 1 : vector<8x128xf32>, i32 -> vector<8x128xf32>
    %c2_i32_201 = arith.constant 2 : i32
    %502 = vector.broadcast %c2_i32_201 : i32 to vector<8x128xi32>
    %503 = arith.addi %7, %502 : vector<8x128xi32>
    %c0_i32_202 = arith.constant 0 : i32
    %504 = vector.broadcast %c0_i32_202 : i32 to vector<8x128xi32>
    %505 = arith.cmpi sge, %503, %504 : vector<8x128xi32>
    %c128_i32_203 = arith.constant 128 : i32
    %506 = vector.broadcast %c128_i32_203 : i32 to vector<8x128xi32>
    %507 = arith.cmpi slt, %503, %506 : vector<8x128xi32>
    %508 = arith.andi %505, %507 : vector<8x128xi1>
    %cst_204 = arith.constant 0.000000e+00 : f32
    %509 = vector.broadcast %cst_204 : f32 to vector<8x128xf32>
    %510 = arith.select %508, %501, %509 : vector<8x128xi1>, vector<8x128xf32>
    %511 = vector.extract_strided_slice %441 {offsets = [0, 5], sizes = [8, 1], strides = [1, 1]} : vector<8x7xf32> to vector<8x1xf32>
    %512 = vector.broadcast %511 : vector<8x1xf32> to vector<8x128xf32>
    %513 = arith.mulf %512, %510 : vector<8x128xf32>
    %514 = arith.addf %500, %513 : vector<8x128xf32>
    %c125_i32 = arith.constant 125 : i32
    %515 = tpu.dynamic_rotate %6 by %c125_i32 dim 1 : vector<8x128xf32>, i32 -> vector<8x128xf32>
    %c3_i32_205 = arith.constant 3 : i32
    %516 = vector.broadcast %c3_i32_205 : i32 to vector<8x128xi32>
    %517 = arith.addi %7, %516 : vector<8x128xi32>
    %c0_i32_206 = arith.constant 0 : i32
    %518 = vector.broadcast %c0_i32_206 : i32 to vector<8x128xi32>
    %519 = arith.cmpi sge, %517, %518 : vector<8x128xi32>
    %c128_i32_207 = arith.constant 128 : i32
    %520 = vector.broadcast %c128_i32_207 : i32 to vector<8x128xi32>
    %521 = arith.cmpi slt, %517, %520 : vector<8x128xi32>
    %522 = arith.andi %519, %521 : vector<8x128xi1>
    %cst_208 = arith.constant 0.000000e+00 : f32
    %523 = vector.broadcast %cst_208 : f32 to vector<8x128xf32>
    %524 = arith.select %522, %515, %523 : vector<8x128xi1>, vector<8x128xf32>
    %525 = vector.extract_strided_slice %441 {offsets = [0, 6], sizes = [8, 1], strides = [1, 1]} : vector<8x7xf32> to vector<8x1xf32>
    %526 = vector.broadcast %525 : vector<8x1xf32> to vector<8x128xf32>
    %527 = arith.mulf %526, %524 : vector<8x128xf32>
    %528 = arith.addf %514, %527 : vector<8x128xf32>
    %c8 = arith.constant 8 : index
    %c0_209 = arith.constant 0 : index
    %c0_210 = arith.constant 0 : index
    %529 = vector.load %arg7[%c8, %c0_209, %c0_210] : memref<12x8x8xf32, #tpu.memory_space<vmem>>, vector<1x8x8xf32>
    %530 = vector.shape_cast %529 : vector<1x8x8xf32> to vector<8x8xf32>
    %cst_211 = arith.constant dense<0.000000e+00> : vector<8x128xf32>
    %531 = tpu.matmul %530, %528, %cst_211 {dimension_numbers = #tpu.dot_dimension_numbers<[1], [0], [0], [1], [0, 0, 1, 1], [], []>} : vector<8x8xf32>, vector<8x128xf32>, vector<8x128xf32> -> vector<8x128xf32>
    %c8_212 = arith.constant 8 : index
    %c0_213 = arith.constant 0 : index
    %c0_214 = arith.constant 0 : index
    %532 = vector.load %arg8[%c8_212, %c0_213, %c0_214] : memref<12x8x1xf32, #tpu.memory_space<vmem>>, vector<1x8x1xf32>
    %533 = vector.shape_cast %532 : vector<1x8x1xf32> to vector<8x1xf32>
    %534 = vector.broadcast %533 : vector<8x1xf32> to vector<8x128xf32>
    %535 = arith.addf %531, %534 : vector<8x128xf32>
    %c1_215 = arith.constant 1 : index
    %c0_216 = arith.constant 0 : index
    %c0_217 = arith.constant 0 : index
    %536 = vector.load %arg6[%c1_215, %c0_216, %c0_217] : memref<4x8x7xf32, #tpu.memory_space<vmem>>, vector<1x8x7xf32>
    %537 = vector.shape_cast %536 : vector<1x8x7xf32> to vector<8x7xf32>
    %538 = vector.extract_strided_slice %537 {offsets = [0, 3], sizes = [8, 1], strides = [1, 1]} : vector<8x7xf32> to vector<8x1xf32>
    %539 = vector.broadcast %538 : vector<8x1xf32> to vector<8x128xf32>
    %540 = arith.mulf %539, %6 : vector<8x128xf32>
    %c6_i32 = arith.constant 6 : i32
    %541 = tpu.dynamic_rotate %6 by %c6_i32 dim 1 : vector<8x128xf32>, i32 -> vector<8x128xf32>
    %c-6_i32 = arith.constant -6 : i32
    %542 = vector.broadcast %c-6_i32 : i32 to vector<8x128xi32>
    %543 = arith.addi %7, %542 : vector<8x128xi32>
    %c0_i32_218 = arith.constant 0 : i32
    %544 = vector.broadcast %c0_i32_218 : i32 to vector<8x128xi32>
    %545 = arith.cmpi sge, %543, %544 : vector<8x128xi32>
    %c128_i32_219 = arith.constant 128 : i32
    %546 = vector.broadcast %c128_i32_219 : i32 to vector<8x128xi32>
    %547 = arith.cmpi slt, %543, %546 : vector<8x128xi32>
    %548 = arith.andi %545, %547 : vector<8x128xi1>
    %cst_220 = arith.constant 0.000000e+00 : f32
    %549 = vector.broadcast %cst_220 : f32 to vector<8x128xf32>
    %550 = arith.select %548, %541, %549 : vector<8x128xi1>, vector<8x128xf32>
    %551 = vector.extract_strided_slice %537 {offsets = [0, 0], sizes = [8, 1], strides = [1, 1]} : vector<8x7xf32> to vector<8x1xf32>
    %552 = vector.broadcast %551 : vector<8x1xf32> to vector<8x128xf32>
    %553 = arith.mulf %552, %550 : vector<8x128xf32>
    %554 = arith.addf %540, %553 : vector<8x128xf32>
    %c4_i32_221 = arith.constant 4 : i32
    %555 = tpu.dynamic_rotate %6 by %c4_i32_221 dim 1 : vector<8x128xf32>, i32 -> vector<8x128xf32>
    %c-4_i32_222 = arith.constant -4 : i32
    %556 = vector.broadcast %c-4_i32_222 : i32 to vector<8x128xi32>
    %557 = arith.addi %7, %556 : vector<8x128xi32>
    %c0_i32_223 = arith.constant 0 : i32
    %558 = vector.broadcast %c0_i32_223 : i32 to vector<8x128xi32>
    %559 = arith.cmpi sge, %557, %558 : vector<8x128xi32>
    %c128_i32_224 = arith.constant 128 : i32
    %560 = vector.broadcast %c128_i32_224 : i32 to vector<8x128xi32>
    %561 = arith.cmpi slt, %557, %560 : vector<8x128xi32>
    %562 = arith.andi %559, %561 : vector<8x128xi1>
    %cst_225 = arith.constant 0.000000e+00 : f32
    %563 = vector.broadcast %cst_225 : f32 to vector<8x128xf32>
    %564 = arith.select %562, %555, %563 : vector<8x128xi1>, vector<8x128xf32>
    %565 = vector.extract_strided_slice %537 {offsets = [0, 1], sizes = [8, 1], strides = [1, 1]} : vector<8x7xf32> to vector<8x1xf32>
    %566 = vector.broadcast %565 : vector<8x1xf32> to vector<8x128xf32>
    %567 = arith.mulf %566, %564 : vector<8x128xf32>
    %568 = arith.addf %554, %567 : vector<8x128xf32>
    %c2_i32_226 = arith.constant 2 : i32
    %569 = tpu.dynamic_rotate %6 by %c2_i32_226 dim 1 : vector<8x128xf32>, i32 -> vector<8x128xf32>
    %c-2_i32_227 = arith.constant -2 : i32
    %570 = vector.broadcast %c-2_i32_227 : i32 to vector<8x128xi32>
    %571 = arith.addi %7, %570 : vector<8x128xi32>
    %c0_i32_228 = arith.constant 0 : i32
    %572 = vector.broadcast %c0_i32_228 : i32 to vector<8x128xi32>
    %573 = arith.cmpi sge, %571, %572 : vector<8x128xi32>
    %c128_i32_229 = arith.constant 128 : i32
    %574 = vector.broadcast %c128_i32_229 : i32 to vector<8x128xi32>
    %575 = arith.cmpi slt, %571, %574 : vector<8x128xi32>
    %576 = arith.andi %573, %575 : vector<8x128xi1>
    %cst_230 = arith.constant 0.000000e+00 : f32
    %577 = vector.broadcast %cst_230 : f32 to vector<8x128xf32>
    %578 = arith.select %576, %569, %577 : vector<8x128xi1>, vector<8x128xf32>
    %579 = vector.extract_strided_slice %537 {offsets = [0, 2], sizes = [8, 1], strides = [1, 1]} : vector<8x7xf32> to vector<8x1xf32>
    %580 = vector.broadcast %579 : vector<8x1xf32> to vector<8x128xf32>
    %581 = arith.mulf %580, %578 : vector<8x128xf32>
    %582 = arith.addf %568, %581 : vector<8x128xf32>
    %c126_i32_231 = arith.constant 126 : i32
    %583 = tpu.dynamic_rotate %6 by %c126_i32_231 dim 1 : vector<8x128xf32>, i32 -> vector<8x128xf32>
    %c2_i32_232 = arith.constant 2 : i32
    %584 = vector.broadcast %c2_i32_232 : i32 to vector<8x128xi32>
    %585 = arith.addi %7, %584 : vector<8x128xi32>
    %c0_i32_233 = arith.constant 0 : i32
    %586 = vector.broadcast %c0_i32_233 : i32 to vector<8x128xi32>
    %587 = arith.cmpi sge, %585, %586 : vector<8x128xi32>
    %c128_i32_234 = arith.constant 128 : i32
    %588 = vector.broadcast %c128_i32_234 : i32 to vector<8x128xi32>
    %589 = arith.cmpi slt, %585, %588 : vector<8x128xi32>
    %590 = arith.andi %587, %589 : vector<8x128xi1>
    %cst_235 = arith.constant 0.000000e+00 : f32
    %591 = vector.broadcast %cst_235 : f32 to vector<8x128xf32>
    %592 = arith.select %590, %583, %591 : vector<8x128xi1>, vector<8x128xf32>
    %593 = vector.extract_strided_slice %537 {offsets = [0, 4], sizes = [8, 1], strides = [1, 1]} : vector<8x7xf32> to vector<8x1xf32>
    %594 = vector.broadcast %593 : vector<8x1xf32> to vector<8x128xf32>
    %595 = arith.mulf %594, %592 : vector<8x128xf32>
    %596 = arith.addf %582, %595 : vector<8x128xf32>
    %c124_i32_236 = arith.constant 124 : i32
    %597 = tpu.dynamic_rotate %6 by %c124_i32_236 dim 1 : vector<8x128xf32>, i32 -> vector<8x128xf32>
    %c4_i32_237 = arith.constant 4 : i32
    %598 = vector.broadcast %c4_i32_237 : i32 to vector<8x128xi32>
    %599 = arith.addi %7, %598 : vector<8x128xi32>
    %c0_i32_238 = arith.constant 0 : i32
    %600 = vector.broadcast %c0_i32_238 : i32 to vector<8x128xi32>
    %601 = arith.cmpi sge, %599, %600 : vector<8x128xi32>
    %c128_i32_239 = arith.constant 128 : i32
    %602 = vector.broadcast %c128_i32_239 : i32 to vector<8x128xi32>
    %603 = arith.cmpi slt, %599, %602 : vector<8x128xi32>
    %604 = arith.andi %601, %603 : vector<8x128xi1>
    %cst_240 = arith.constant 0.000000e+00 : f32
    %605 = vector.broadcast %cst_240 : f32 to vector<8x128xf32>
    %606 = arith.select %604, %597, %605 : vector<8x128xi1>, vector<8x128xf32>
    %607 = vector.extract_strided_slice %537 {offsets = [0, 5], sizes = [8, 1], strides = [1, 1]} : vector<8x7xf32> to vector<8x1xf32>
    %608 = vector.broadcast %607 : vector<8x1xf32> to vector<8x128xf32>
    %609 = arith.mulf %608, %606 : vector<8x128xf32>
    %610 = arith.addf %596, %609 : vector<8x128xf32>
    %c122_i32 = arith.constant 122 : i32
    %611 = tpu.dynamic_rotate %6 by %c122_i32 dim 1 : vector<8x128xf32>, i32 -> vector<8x128xf32>
    %c6_i32_241 = arith.constant 6 : i32
    %612 = vector.broadcast %c6_i32_241 : i32 to vector<8x128xi32>
    %613 = arith.addi %7, %612 : vector<8x128xi32>
    %c0_i32_242 = arith.constant 0 : i32
    %614 = vector.broadcast %c0_i32_242 : i32 to vector<8x128xi32>
    %615 = arith.cmpi sge, %613, %614 : vector<8x128xi32>
    %c128_i32_243 = arith.constant 128 : i32
    %616 = vector.broadcast %c128_i32_243 : i32 to vector<8x128xi32>
    %617 = arith.cmpi slt, %613, %616 : vector<8x128xi32>
    %618 = arith.andi %615, %617 : vector<8x128xi1>
    %cst_244 = arith.constant 0.000000e+00 : f32
    %619 = vector.broadcast %cst_244 : f32 to vector<8x128xf32>
    %620 = arith.select %618, %611, %619 : vector<8x128xi1>, vector<8x128xf32>
    %621 = vector.extract_strided_slice %537 {offsets = [0, 6], sizes = [8, 1], strides = [1, 1]} : vector<8x7xf32> to vector<8x1xf32>
    %622 = vector.broadcast %621 : vector<8x1xf32> to vector<8x128xf32>
    %623 = arith.mulf %622, %620 : vector<8x128xf32>
    %624 = arith.addf %610, %623 : vector<8x128xf32>
    %c9 = arith.constant 9 : index
    %c0_245 = arith.constant 0 : index
    %c0_246 = arith.constant 0 : index
    %625 = vector.load %arg7[%c9, %c0_245, %c0_246] : memref<12x8x8xf32, #tpu.memory_space<vmem>>, vector<1x8x8xf32>
    %626 = vector.shape_cast %625 : vector<1x8x8xf32> to vector<8x8xf32>
    %cst_247 = arith.constant dense<0.000000e+00> : vector<8x128xf32>
    %627 = tpu.matmul %626, %624, %cst_247 {dimension_numbers = #tpu.dot_dimension_numbers<[1], [0], [0], [1], [0, 0, 1, 1], [], []>} : vector<8x8xf32>, vector<8x128xf32>, vector<8x128xf32> -> vector<8x128xf32>
    %c9_248 = arith.constant 9 : index
    %c0_249 = arith.constant 0 : index
    %c0_250 = arith.constant 0 : index
    %628 = vector.load %arg8[%c9_248, %c0_249, %c0_250] : memref<12x8x1xf32, #tpu.memory_space<vmem>>, vector<1x8x1xf32>
    %629 = vector.shape_cast %628 : vector<1x8x1xf32> to vector<8x1xf32>
    %630 = vector.broadcast %629 : vector<8x1xf32> to vector<8x128xf32>
    %631 = arith.addf %627, %630 : vector<8x128xf32>
    %c2_251 = arith.constant 2 : index
    %c0_252 = arith.constant 0 : index
    %c0_253 = arith.constant 0 : index
    %632 = vector.load %arg6[%c2_251, %c0_252, %c0_253] : memref<4x8x7xf32, #tpu.memory_space<vmem>>, vector<1x8x7xf32>
    %633 = vector.shape_cast %632 : vector<1x8x7xf32> to vector<8x7xf32>
    %634 = vector.extract_strided_slice %633 {offsets = [0, 3], sizes = [8, 1], strides = [1, 1]} : vector<8x7xf32> to vector<8x1xf32>
    %635 = vector.broadcast %634 : vector<8x1xf32> to vector<8x128xf32>
    %636 = arith.mulf %635, %6 : vector<8x128xf32>
    %c12_i32 = arith.constant 12 : i32
    %637 = tpu.dynamic_rotate %6 by %c12_i32 dim 1 : vector<8x128xf32>, i32 -> vector<8x128xf32>
    %c-12_i32 = arith.constant -12 : i32
    %638 = vector.broadcast %c-12_i32 : i32 to vector<8x128xi32>
    %639 = arith.addi %7, %638 : vector<8x128xi32>
    %c0_i32_254 = arith.constant 0 : i32
    %640 = vector.broadcast %c0_i32_254 : i32 to vector<8x128xi32>
    %641 = arith.cmpi sge, %639, %640 : vector<8x128xi32>
    %c128_i32_255 = arith.constant 128 : i32
    %642 = vector.broadcast %c128_i32_255 : i32 to vector<8x128xi32>
    %643 = arith.cmpi slt, %639, %642 : vector<8x128xi32>
    %644 = arith.andi %641, %643 : vector<8x128xi1>
    %cst_256 = arith.constant 0.000000e+00 : f32
    %645 = vector.broadcast %cst_256 : f32 to vector<8x128xf32>
    %646 = arith.select %644, %637, %645 : vector<8x128xi1>, vector<8x128xf32>
    %647 = vector.extract_strided_slice %633 {offsets = [0, 0], sizes = [8, 1], strides = [1, 1]} : vector<8x7xf32> to vector<8x1xf32>
    %648 = vector.broadcast %647 : vector<8x1xf32> to vector<8x128xf32>
    %649 = arith.mulf %648, %646 : vector<8x128xf32>
    %650 = arith.addf %636, %649 : vector<8x128xf32>
    %c8_i32_257 = arith.constant 8 : i32
    %651 = tpu.dynamic_rotate %6 by %c8_i32_257 dim 1 : vector<8x128xf32>, i32 -> vector<8x128xf32>
    %c-8_i32_258 = arith.constant -8 : i32
    %652 = vector.broadcast %c-8_i32_258 : i32 to vector<8x128xi32>
    %653 = arith.addi %7, %652 : vector<8x128xi32>
    %c0_i32_259 = arith.constant 0 : i32
    %654 = vector.broadcast %c0_i32_259 : i32 to vector<8x128xi32>
    %655 = arith.cmpi sge, %653, %654 : vector<8x128xi32>
    %c128_i32_260 = arith.constant 128 : i32
    %656 = vector.broadcast %c128_i32_260 : i32 to vector<8x128xi32>
    %657 = arith.cmpi slt, %653, %656 : vector<8x128xi32>
    %658 = arith.andi %655, %657 : vector<8x128xi1>
    %cst_261 = arith.constant 0.000000e+00 : f32
    %659 = vector.broadcast %cst_261 : f32 to vector<8x128xf32>
    %660 = arith.select %658, %651, %659 : vector<8x128xi1>, vector<8x128xf32>
    %661 = vector.extract_strided_slice %633 {offsets = [0, 1], sizes = [8, 1], strides = [1, 1]} : vector<8x7xf32> to vector<8x1xf32>
    %662 = vector.broadcast %661 : vector<8x1xf32> to vector<8x128xf32>
    %663 = arith.mulf %662, %660 : vector<8x128xf32>
    %664 = arith.addf %650, %663 : vector<8x128xf32>
    %c4_i32_262 = arith.constant 4 : i32
    %665 = tpu.dynamic_rotate %6 by %c4_i32_262 dim 1 : vector<8x128xf32>, i32 -> vector<8x128xf32>
    %c-4_i32_263 = arith.constant -4 : i32
    %666 = vector.broadcast %c-4_i32_263 : i32 to vector<8x128xi32>
    %667 = arith.addi %7, %666 : vector<8x128xi32>
    %c0_i32_264 = arith.constant 0 : i32
    %668 = vector.broadcast %c0_i32_264 : i32 to vector<8x128xi32>
    %669 = arith.cmpi sge, %667, %668 : vector<8x128xi32>
    %c128_i32_265 = arith.constant 128 : i32
    %670 = vector.broadcast %c128_i32_265 : i32 to vector<8x128xi32>
    %671 = arith.cmpi slt, %667, %670 : vector<8x128xi32>
    %672 = arith.andi %669, %671 : vector<8x128xi1>
    %cst_266 = arith.constant 0.000000e+00 : f32
    %673 = vector.broadcast %cst_266 : f32 to vector<8x128xf32>
    %674 = arith.select %672, %665, %673 : vector<8x128xi1>, vector<8x128xf32>
    %675 = vector.extract_strided_slice %633 {offsets = [0, 2], sizes = [8, 1], strides = [1, 1]} : vector<8x7xf32> to vector<8x1xf32>
    %676 = vector.broadcast %675 : vector<8x1xf32> to vector<8x128xf32>
    %677 = arith.mulf %676, %674 : vector<8x128xf32>
    %678 = arith.addf %664, %677 : vector<8x128xf32>
    %c124_i32_267 = arith.constant 124 : i32
    %679 = tpu.dynamic_rotate %6 by %c124_i32_267 dim 1 : vector<8x128xf32>, i32 -> vector<8x128xf32>
    %c4_i32_268 = arith.constant 4 : i32
    %680 = vector.broadcast %c4_i32_268 : i32 to vector<8x128xi32>
    %681 = arith.addi %7, %680 : vector<8x128xi32>
    %c0_i32_269 = arith.constant 0 : i32
    %682 = vector.broadcast %c0_i32_269 : i32 to vector<8x128xi32>
    %683 = arith.cmpi sge, %681, %682 : vector<8x128xi32>
    %c128_i32_270 = arith.constant 128 : i32
    %684 = vector.broadcast %c128_i32_270 : i32 to vector<8x128xi32>
    %685 = arith.cmpi slt, %681, %684 : vector<8x128xi32>
    %686 = arith.andi %683, %685 : vector<8x128xi1>
    %cst_271 = arith.constant 0.000000e+00 : f32
    %687 = vector.broadcast %cst_271 : f32 to vector<8x128xf32>
    %688 = arith.select %686, %679, %687 : vector<8x128xi1>, vector<8x128xf32>
    %689 = vector.extract_strided_slice %633 {offsets = [0, 4], sizes = [8, 1], strides = [1, 1]} : vector<8x7xf32> to vector<8x1xf32>
    %690 = vector.broadcast %689 : vector<8x1xf32> to vector<8x128xf32>
    %691 = arith.mulf %690, %688 : vector<8x128xf32>
    %692 = arith.addf %678, %691 : vector<8x128xf32>
    %c120_i32_272 = arith.constant 120 : i32
    %693 = tpu.dynamic_rotate %6 by %c120_i32_272 dim 1 : vector<8x128xf32>, i32 -> vector<8x128xf32>
    %c8_i32_273 = arith.constant 8 : i32
    %694 = vector.broadcast %c8_i32_273 : i32 to vector<8x128xi32>
    %695 = arith.addi %7, %694 : vector<8x128xi32>
    %c0_i32_274 = arith.constant 0 : i32
    %696 = vector.broadcast %c0_i32_274 : i32 to vector<8x128xi32>
    %697 = arith.cmpi sge, %695, %696 : vector<8x128xi32>
    %c128_i32_275 = arith.constant 128 : i32
    %698 = vector.broadcast %c128_i32_275 : i32 to vector<8x128xi32>
    %699 = arith.cmpi slt, %695, %698 : vector<8x128xi32>
    %700 = arith.andi %697, %699 : vector<8x128xi1>
    %cst_276 = arith.constant 0.000000e+00 : f32
    %701 = vector.broadcast %cst_276 : f32 to vector<8x128xf32>
    %702 = arith.select %700, %693, %701 : vector<8x128xi1>, vector<8x128xf32>
    %703 = vector.extract_strided_slice %633 {offsets = [0, 5], sizes = [8, 1], strides = [1, 1]} : vector<8x7xf32> to vector<8x1xf32>
    %704 = vector.broadcast %703 : vector<8x1xf32> to vector<8x128xf32>
    %705 = arith.mulf %704, %702 : vector<8x128xf32>
    %706 = arith.addf %692, %705 : vector<8x128xf32>
    %c116_i32 = arith.constant 116 : i32
    %707 = tpu.dynamic_rotate %6 by %c116_i32 dim 1 : vector<8x128xf32>, i32 -> vector<8x128xf32>
    %c12_i32_277 = arith.constant 12 : i32
    %708 = vector.broadcast %c12_i32_277 : i32 to vector<8x128xi32>
    %709 = arith.addi %7, %708 : vector<8x128xi32>
    %c0_i32_278 = arith.constant 0 : i32
    %710 = vector.broadcast %c0_i32_278 : i32 to vector<8x128xi32>
    %711 = arith.cmpi sge, %709, %710 : vector<8x128xi32>
    %c128_i32_279 = arith.constant 128 : i32
    %712 = vector.broadcast %c128_i32_279 : i32 to vector<8x128xi32>
    %713 = arith.cmpi slt, %709, %712 : vector<8x128xi32>
    %714 = arith.andi %711, %713 : vector<8x128xi1>
    %cst_280 = arith.constant 0.000000e+00 : f32
    %715 = vector.broadcast %cst_280 : f32 to vector<8x128xf32>
    %716 = arith.select %714, %707, %715 : vector<8x128xi1>, vector<8x128xf32>
    %717 = vector.extract_strided_slice %633 {offsets = [0, 6], sizes = [8, 1], strides = [1, 1]} : vector<8x7xf32> to vector<8x1xf32>
    %718 = vector.broadcast %717 : vector<8x1xf32> to vector<8x128xf32>
    %719 = arith.mulf %718, %716 : vector<8x128xf32>
    %720 = arith.addf %706, %719 : vector<8x128xf32>
    %c10 = arith.constant 10 : index
    %c0_281 = arith.constant 0 : index
    %c0_282 = arith.constant 0 : index
    %721 = vector.load %arg7[%c10, %c0_281, %c0_282] : memref<12x8x8xf32, #tpu.memory_space<vmem>>, vector<1x8x8xf32>
    %722 = vector.shape_cast %721 : vector<1x8x8xf32> to vector<8x8xf32>
    %cst_283 = arith.constant dense<0.000000e+00> : vector<8x128xf32>
    %723 = tpu.matmul %722, %720, %cst_283 {dimension_numbers = #tpu.dot_dimension_numbers<[1], [0], [0], [1], [0, 0, 1, 1], [], []>} : vector<8x8xf32>, vector<8x128xf32>, vector<8x128xf32> -> vector<8x128xf32>
    %c10_284 = arith.constant 10 : index
    %c0_285 = arith.constant 0 : index
    %c0_286 = arith.constant 0 : index
    %724 = vector.load %arg8[%c10_284, %c0_285, %c0_286] : memref<12x8x1xf32, #tpu.memory_space<vmem>>, vector<1x8x1xf32>
    %725 = vector.shape_cast %724 : vector<1x8x1xf32> to vector<8x1xf32>
    %726 = vector.broadcast %725 : vector<8x1xf32> to vector<8x128xf32>
    %727 = arith.addf %723, %726 : vector<8x128xf32>
    %c3_287 = arith.constant 3 : index
    %c0_288 = arith.constant 0 : index
    %c0_289 = arith.constant 0 : index
    %728 = vector.load %arg6[%c3_287, %c0_288, %c0_289] : memref<4x8x7xf32, #tpu.memory_space<vmem>>, vector<1x8x7xf32>
    %729 = vector.shape_cast %728 : vector<1x8x7xf32> to vector<8x7xf32>
    %730 = vector.extract_strided_slice %729 {offsets = [0, 3], sizes = [8, 1], strides = [1, 1]} : vector<8x7xf32> to vector<8x1xf32>
    %731 = vector.broadcast %730 : vector<8x1xf32> to vector<8x128xf32>
    %732 = arith.mulf %731, %6 : vector<8x128xf32>
    %c15_i32 = arith.constant 15 : i32
    %733 = tpu.dynamic_rotate %6 by %c15_i32 dim 1 : vector<8x128xf32>, i32 -> vector<8x128xf32>
    %c-15_i32 = arith.constant -15 : i32
    %734 = vector.broadcast %c-15_i32 : i32 to vector<8x128xi32>
    %735 = arith.addi %7, %734 : vector<8x128xi32>
    %c0_i32_290 = arith.constant 0 : i32
    %736 = vector.broadcast %c0_i32_290 : i32 to vector<8x128xi32>
    %737 = arith.cmpi sge, %735, %736 : vector<8x128xi32>
    %c128_i32_291 = arith.constant 128 : i32
    %738 = vector.broadcast %c128_i32_291 : i32 to vector<8x128xi32>
    %739 = arith.cmpi slt, %735, %738 : vector<8x128xi32>
    %740 = arith.andi %737, %739 : vector<8x128xi1>
    %cst_292 = arith.constant 0.000000e+00 : f32
    %741 = vector.broadcast %cst_292 : f32 to vector<8x128xf32>
    %742 = arith.select %740, %733, %741 : vector<8x128xi1>, vector<8x128xf32>
    %743 = vector.extract_strided_slice %729 {offsets = [0, 0], sizes = [8, 1], strides = [1, 1]} : vector<8x7xf32> to vector<8x1xf32>
    %744 = vector.broadcast %743 : vector<8x1xf32> to vector<8x128xf32>
    %745 = arith.mulf %744, %742 : vector<8x128xf32>
    %746 = arith.addf %732, %745 : vector<8x128xf32>
    %c10_i32_293 = arith.constant 10 : i32
    %747 = tpu.dynamic_rotate %6 by %c10_i32_293 dim 1 : vector<8x128xf32>, i32 -> vector<8x128xf32>
    %c-10_i32_294 = arith.constant -10 : i32
    %748 = vector.broadcast %c-10_i32_294 : i32 to vector<8x128xi32>
    %749 = arith.addi %7, %748 : vector<8x128xi32>
    %c0_i32_295 = arith.constant 0 : i32
    %750 = vector.broadcast %c0_i32_295 : i32 to vector<8x128xi32>
    %751 = arith.cmpi sge, %749, %750 : vector<8x128xi32>
    %c128_i32_296 = arith.constant 128 : i32
    %752 = vector.broadcast %c128_i32_296 : i32 to vector<8x128xi32>
    %753 = arith.cmpi slt, %749, %752 : vector<8x128xi32>
    %754 = arith.andi %751, %753 : vector<8x128xi1>
    %cst_297 = arith.constant 0.000000e+00 : f32
    %755 = vector.broadcast %cst_297 : f32 to vector<8x128xf32>
    %756 = arith.select %754, %747, %755 : vector<8x128xi1>, vector<8x128xf32>
    %757 = vector.extract_strided_slice %729 {offsets = [0, 1], sizes = [8, 1], strides = [1, 1]} : vector<8x7xf32> to vector<8x1xf32>
    %758 = vector.broadcast %757 : vector<8x1xf32> to vector<8x128xf32>
    %759 = arith.mulf %758, %756 : vector<8x128xf32>
    %760 = arith.addf %746, %759 : vector<8x128xf32>
    %c5_i32_298 = arith.constant 5 : i32
    %761 = tpu.dynamic_rotate %6 by %c5_i32_298 dim 1 : vector<8x128xf32>, i32 -> vector<8x128xf32>
    %c-5_i32_299 = arith.constant -5 : i32
    %762 = vector.broadcast %c-5_i32_299 : i32 to vector<8x128xi32>
    %763 = arith.addi %7, %762 : vector<8x128xi32>
    %c0_i32_300 = arith.constant 0 : i32
    %764 = vector.broadcast %c0_i32_300 : i32 to vector<8x128xi32>
    %765 = arith.cmpi sge, %763, %764 : vector<8x128xi32>
    %c128_i32_301 = arith.constant 128 : i32
    %766 = vector.broadcast %c128_i32_301 : i32 to vector<8x128xi32>
    %767 = arith.cmpi slt, %763, %766 : vector<8x128xi32>
    %768 = arith.andi %765, %767 : vector<8x128xi1>
    %cst_302 = arith.constant 0.000000e+00 : f32
    %769 = vector.broadcast %cst_302 : f32 to vector<8x128xf32>
    %770 = arith.select %768, %761, %769 : vector<8x128xi1>, vector<8x128xf32>
    %771 = vector.extract_strided_slice %729 {offsets = [0, 2], sizes = [8, 1], strides = [1, 1]} : vector<8x7xf32> to vector<8x1xf32>
    %772 = vector.broadcast %771 : vector<8x1xf32> to vector<8x128xf32>
    %773 = arith.mulf %772, %770 : vector<8x128xf32>
    %774 = arith.addf %760, %773 : vector<8x128xf32>
    %c123_i32_303 = arith.constant 123 : i32
    %775 = tpu.dynamic_rotate %6 by %c123_i32_303 dim 1 : vector<8x128xf32>, i32 -> vector<8x128xf32>
    %c5_i32_304 = arith.constant 5 : i32
    %776 = vector.broadcast %c5_i32_304 : i32 to vector<8x128xi32>
    %777 = arith.addi %7, %776 : vector<8x128xi32>
    %c0_i32_305 = arith.constant 0 : i32
    %778 = vector.broadcast %c0_i32_305 : i32 to vector<8x128xi32>
    %779 = arith.cmpi sge, %777, %778 : vector<8x128xi32>
    %c128_i32_306 = arith.constant 128 : i32
    %780 = vector.broadcast %c128_i32_306 : i32 to vector<8x128xi32>
    %781 = arith.cmpi slt, %777, %780 : vector<8x128xi32>
    %782 = arith.andi %779, %781 : vector<8x128xi1>
    %cst_307 = arith.constant 0.000000e+00 : f32
    %783 = vector.broadcast %cst_307 : f32 to vector<8x128xf32>
    %784 = arith.select %782, %775, %783 : vector<8x128xi1>, vector<8x128xf32>
    %785 = vector.extract_strided_slice %729 {offsets = [0, 4], sizes = [8, 1], strides = [1, 1]} : vector<8x7xf32> to vector<8x1xf32>
    %786 = vector.broadcast %785 : vector<8x1xf32> to vector<8x128xf32>
    %787 = arith.mulf %786, %784 : vector<8x128xf32>
    %788 = arith.addf %774, %787 : vector<8x128xf32>
    %c118_i32_308 = arith.constant 118 : i32
    %789 = tpu.dynamic_rotate %6 by %c118_i32_308 dim 1 : vector<8x128xf32>, i32 -> vector<8x128xf32>
    %c10_i32_309 = arith.constant 10 : i32
    %790 = vector.broadcast %c10_i32_309 : i32 to vector<8x128xi32>
    %791 = arith.addi %7, %790 : vector<8x128xi32>
    %c0_i32_310 = arith.constant 0 : i32
    %792 = vector.broadcast %c0_i32_310 : i32 to vector<8x128xi32>
    %793 = arith.cmpi sge, %791, %792 : vector<8x128xi32>
    %c128_i32_311 = arith.constant 128 : i32
    %794 = vector.broadcast %c128_i32_311 : i32 to vector<8x128xi32>
    %795 = arith.cmpi slt, %791, %794 : vector<8x128xi32>
    %796 = arith.andi %793, %795 : vector<8x128xi1>
    %cst_312 = arith.constant 0.000000e+00 : f32
    %797 = vector.broadcast %cst_312 : f32 to vector<8x128xf32>
    %798 = arith.select %796, %789, %797 : vector<8x128xi1>, vector<8x128xf32>
    %799 = vector.extract_strided_slice %729 {offsets = [0, 5], sizes = [8, 1], strides = [1, 1]} : vector<8x7xf32> to vector<8x1xf32>
    %800 = vector.broadcast %799 : vector<8x1xf32> to vector<8x128xf32>
    %801 = arith.mulf %800, %798 : vector<8x128xf32>
    %802 = arith.addf %788, %801 : vector<8x128xf32>
    %c113_i32 = arith.constant 113 : i32
    %803 = tpu.dynamic_rotate %6 by %c113_i32 dim 1 : vector<8x128xf32>, i32 -> vector<8x128xf32>
    %c15_i32_313 = arith.constant 15 : i32
    %804 = vector.broadcast %c15_i32_313 : i32 to vector<8x128xi32>
    %805 = arith.addi %7, %804 : vector<8x128xi32>
    %c0_i32_314 = arith.constant 0 : i32
    %806 = vector.broadcast %c0_i32_314 : i32 to vector<8x128xi32>
    %807 = arith.cmpi sge, %805, %806 : vector<8x128xi32>
    %c128_i32_315 = arith.constant 128 : i32
    %808 = vector.broadcast %c128_i32_315 : i32 to vector<8x128xi32>
    %809 = arith.cmpi slt, %805, %808 : vector<8x128xi32>
    %810 = arith.andi %807, %809 : vector<8x128xi1>
    %cst_316 = arith.constant 0.000000e+00 : f32
    %811 = vector.broadcast %cst_316 : f32 to vector<8x128xf32>
    %812 = arith.select %810, %803, %811 : vector<8x128xi1>, vector<8x128xf32>
    %813 = vector.extract_strided_slice %729 {offsets = [0, 6], sizes = [8, 1], strides = [1, 1]} : vector<8x7xf32> to vector<8x1xf32>
    %814 = vector.broadcast %813 : vector<8x1xf32> to vector<8x128xf32>
    %815 = arith.mulf %814, %812 : vector<8x128xf32>
    %816 = arith.addf %802, %815 : vector<8x128xf32>
    %c11 = arith.constant 11 : index
    %c0_317 = arith.constant 0 : index
    %c0_318 = arith.constant 0 : index
    %817 = vector.load %arg7[%c11, %c0_317, %c0_318] : memref<12x8x8xf32, #tpu.memory_space<vmem>>, vector<1x8x8xf32>
    %818 = vector.shape_cast %817 : vector<1x8x8xf32> to vector<8x8xf32>
    %cst_319 = arith.constant dense<0.000000e+00> : vector<8x128xf32>
    %819 = tpu.matmul %818, %816, %cst_319 {dimension_numbers = #tpu.dot_dimension_numbers<[1], [0], [0], [1], [0, 0, 1, 1], [], []>} : vector<8x8xf32>, vector<8x128xf32>, vector<8x128xf32> -> vector<8x128xf32>
    %c11_320 = arith.constant 11 : index
    %c0_321 = arith.constant 0 : index
    %c0_322 = arith.constant 0 : index
    %820 = vector.load %arg8[%c11_320, %c0_321, %c0_322] : memref<12x8x1xf32, #tpu.memory_space<vmem>>, vector<1x8x1xf32>
    %821 = vector.shape_cast %820 : vector<1x8x1xf32> to vector<8x1xf32>
    %822 = vector.broadcast %821 : vector<8x1xf32> to vector<8x128xf32>
    %823 = arith.addf %819, %822 : vector<8x128xf32>
    %824 = tpu.concatenate %47, %87, %127, %167, %235, %303, %371, %439, %535, %631, %727, %823 in 0 : vector<8x128xf32>, vector<8x128xf32>, vector<8x128xf32>, vector<8x128xf32>, vector<8x128xf32>, vector<8x128xf32>, vector<8x128xf32>, vector<8x128xf32>, vector<8x128xf32>, vector<8x128xf32>, vector<8x128xf32>, vector<8x128xf32> -> vector<96x128xf32>
    %c0_323 = arith.constant 0 : index
    %c0_324 = arith.constant 0 : index
    %c0_325 = arith.constant 0 : index
    %825 = vector.load %arg9[%c0_323, %c0_324, %c0_325] : memref<1x96x128xf32, #tpu.memory_space<vmem>>, vector<1x96x128xf32>
    %826 = vector.shape_cast %825 : vector<1x96x128xf32> to vector<96x128xf32>
    %827 = vector.shape_cast %824 : vector<96x128xf32> to vector<1x96x128xf32>
    tpu.vector_store %arg9[%c0_323, %c0_324, %c0_325], %827 {strides = array<i32>} : memref<1x96x128xf32, #tpu.memory_space<vmem>>, vector<1x96x128xf32>,
    return
  }
  func.func @transform_0(%arg0: i32) -> (i32, i32, i32) {
    %c0_i32 = arith.constant 0 : i32
    %c0_i32_0 = arith.constant 0 : i32
    %c0_i32_1 = arith.constant 0 : i32
    return %arg0, %c0_i32, %c0_i32_0 : i32, i32, i32
  }
  func.func @transform_1(%arg0: i32) -> (i32, i32) {
    %c0_i32 = arith.constant 0 : i32
    %c0_i32_0 = arith.constant 0 : i32
    %c0_i32_1 = arith.constant 0 : i32
    return %c0_i32, %c0_i32_0 : i32, i32
  }
  func.func @transform_2(%arg0: i32) -> (i32, i32) {
    %c0_i32 = arith.constant 0 : i32
    %c0_i32_0 = arith.constant 0 : i32
    %c0_i32_1 = arith.constant 0 : i32
    return %c0_i32, %c0_i32_0 : i32, i32
  }
  func.func @transform_3(%arg0: i32) -> (i32, i32, i32) {
    %c0_i32 = arith.constant 0 : i32
    %c0_i32_0 = arith.constant 0 : i32
    %c0_i32_1 = arith.constant 0 : i32
    %c0_i32_2 = arith.constant 0 : i32
    return %c0_i32, %c0_i32_0, %c0_i32_1 : i32, i32, i32
  }
  func.func @transform_4(%arg0: i32) -> (i32, i32, i32) {
    %c0_i32 = arith.constant 0 : i32
    %c0_i32_0 = arith.constant 0 : i32
    %c0_i32_1 = arith.constant 0 : i32
    %c0_i32_2 = arith.constant 0 : i32
    return %c0_i32, %c0_i32_0, %c0_i32_1 : i32, i32, i32
  }
  func.func @transform_5(%arg0: i32) -> (i32, i32, i32) {
    %c0_i32 = arith.constant 0 : i32
    %c0_i32_0 = arith.constant 0 : i32
    %c0_i32_1 = arith.constant 0 : i32
    %c0_i32_2 = arith.constant 0 : i32
    return %c0_i32, %c0_i32_0, %c0_i32_1 : i32, i32, i32
  }
  func.func @transform_6(%arg0: i32) -> (i32, i32, i32) {
    %c0_i32 = arith.constant 0 : i32
    %c0_i32_0 = arith.constant 0 : i32
    %c0_i32_1 = arith.constant 0 : i32
    %c0_i32_2 = arith.constant 0 : i32
    return %c0_i32, %c0_i32_0, %c0_i32_1 : i32, i32, i32
  }
  func.func @transform_7(%arg0: i32) -> (i32, i32, i32) {
    %c0_i32 = arith.constant 0 : i32
    %c0_i32_0 = arith.constant 0 : i32
    %c0_i32_1 = arith.constant 0 : i32
    %c0_i32_2 = arith.constant 0 : i32
    return %c0_i32, %c0_i32_0, %c0_i32_1 : i32, i32, i32
  }
  func.func @transform_8(%arg0: i32) -> (i32, i32, i32) {
    %c0_i32 = arith.constant 0 : i32
    %c0_i32_0 = arith.constant 0 : i32
    %c0_i32_1 = arith.constant 0 : i32
    return %arg0, %c0_i32, %c0_i32_0 : i32, i32, i32
  }
}

</mosaic_0001>

<llo_original>
// kernel: tpu_custom_call.1
$region0: #{tpu_custom_call.1}
  #allocation0 [shape = 'u32[]', space=smem, size = 0x4, offset = 0x4, fixed_abs, tag = 'smem constant byte address 0x4 - core index']
  #allocation1 [shape = 'u32[144,128]{1,0:T(1,128)}', space=vmem, size = 0x12000, scoped, tag = 'internal scratch']
  %s0 = inlined_call_operand.vmem [shape: f32[2,8,128], index: 0, kind: input, shape index: {}]
  %s1 = inlined_call_operand.vmem [shape: f32[8,8], index: 1, kind: input, shape index: {}]
  %s2 = inlined_call_operand.vmem [shape: f32[8,1], index: 2, kind: input, shape index: {}]
  %s3 = inlined_call_operand.vmem [shape: f32[4,8,3], index: 3, kind: input, shape index: {}]
  %s4 = inlined_call_operand.vmem [shape: f32[4,8,5], index: 4, kind: input, shape index: {}]
  %s5 = inlined_call_operand.vmem [shape: f32[4,8,7], index: 5, kind: input, shape index: {}]
  %s6 = inlined_call_operand.vmem [shape: f32[12,8,8], index: 6, kind: input, shape index: {}]
  %s7 = inlined_call_operand.vmem [shape: f32[12,8,1], index: 7, kind: input, shape index: {}]
  %s8 = inlined_call_operand.hbm [shape: f32[2,96,128], index: 8, kind: output, shape index: {}]
  %s9 = sld [smem:[#allocation0]]
  $region65: #{tpu_custom_call.1} parent=0
    _
  %s11 = ssub.s32 1, %s9
  %s12 = scalar_select 0, %s11, %s9
  $region1: #{tpu_custom_call.1} parent=0
    #allocation2 [shape = 'u8[98304]{0}', space=vmem, size = 0x18000, scoped, tag = 'output window, operand 0']
    #allocation3 [shape = 's32[2]{0}', space=sflag, size = 0x8, scoped, tag = 'scoped memory for tpu_custom_call.1']
    %13 = vsyncpa [#allocation3], 0
    %s14 = scalar_lea.sflag [#allocation3], 1
    %15 = vsyncpa %s14, 0
    loop: start=0, step=1, limit=4
    $region2: #{tpu_custom_call.1} parent=1 // loop_pre_header
      _
    $region3: #{tpu_custom_call.1} parent=1 // loop_header
      %s17 = sphi 0, %s21
      %p18 = scmp.ge.s32.totalorder %s17, 4
      %s27 = sphi 0, %s29
      %s30 = sphi 0, %s27
      %s31 = sphi 0, %s30
      %s47 = sphi 0, %s31
      %s51 = sphi 0, %s51
      %s53 = sphi 0, %s51
      %s54 = sphi 0, %s53
      %s68 = sphi 0, %s54
      %s72 = sphi 0, %s72
      %s74 = sphi 0, %s72
      %s75 = sphi 0, %s74
      %s89 = sphi 0, %s75
      %s93 = sphi 0, %s93
      %s95 = sphi 0, %s93
      %s96 = sphi 0, %s95
      %s110 = sphi 0, %s96
      %s114 = sphi 0, %s114
      %s116 = sphi 0, %s114
      %s117 = sphi 0, %s116
      %s131 = sphi 0, %s117
      %s135 = sphi 0, %s135
      %s137 = sphi 0, %s135
      %s138 = sphi 0, %s137
      %s152 = sphi 0, %s138
      %s156 = sphi 0, %s156
      %s158 = sphi 0, %s156
      %s159 = sphi 0, %s158
      %s173 = sphi 0, %s159
      %s177 = sphi 0, %s177
      %s179 = sphi 0, %s177
      %s180 = sphi 0, %s179
      %s194 = sphi 0, %s180
      %s200 = sphi 0, %s202
      %s203 = sphi 0, %s200
      %s204 = sphi 0, %s203
      %s220 = sphi 0, %s204
    $region4: #{tpu_custom_call.1} parent=1 // loop_header_branch
      %20 = sbr.rel (%p18) target = $region8
    $region5: #{tpu_custom_call.1} parent=1 // loop_body
      %s22 = ssub.s32 %s17, 1
      %s23 = ssub.s32 %s17, 2
      %s24 = sadd.s32 %s17, 1
      %s25 = ssub.s32 %s17, %s24
      %p26 = scmp.eq.s32.totalorder %s25, 0
      %s28 = sadd.s32 %s27, 1
      %s29 = scalar_select %p26, %s27, %s28
      %p32 = pneg %p26
      %p33 = scmp.eq.s32.totalorder %s17, 1
      %p34 = por %p32, %p33
      %p35 = scmp.ne.s32.totalorder %s27, %s30
      %p36 = scmp.eq.s32.totalorder %s17, 0
      %p37 = por %p35, %p36
      %p38 = scmp.ne.s32.totalorder %s27, %s30
      %p39 = scmp.eq.s32.totalorder %s22, 1
      %p40 = por %p38, %p39
      %p41 = scmp.ne.s32.totalorder %s30, %s31
      %p42 = scmp.eq.s32.totalorder %s22, 0
      %p43 = por %p41, %p42
      %p44 = scmp.ne.s32.totalorder %s30, %s31
      %p45 = scmp.eq.s32.totalorder %s23, 1
      %p46 = por %p44, %p45
      %p48 = scmp.ne.s32.totalorder %s31, %s47
      %p49 = scmp.eq.s32.totalorder %s23, 0
      %p50 = por %p48, %p49
      %s52 = sadd.s32 %s51, 1
      %p55 = scmp.eq.s32.totalorder %s17, 1
      %p56 = scmp.ne.s32.totalorder %s51, %s53
      %p57 = scmp.eq.s32.totalorder %s17, 0
      %p58 = por %p56, %p57
      %p59 = scmp.ne.s32.totalorder %s51, %s53
      %p60 = scmp.eq.s32.totalorder %s22, 1
      %p61 = por %p59, %p60
      %p62 = scmp.ne.s32.totalorder %s53, %s54
      %p63 = scmp.eq.s32.totalorder %s22, 0
      %p64 = por %p62, %p63
      %p65 = scmp.ne.s32.totalorder %s53, %s54
      %p66 = scmp.eq.s32.totalorder %s23, 1
      %p67 = por %p65, %p66
      %p69 = scmp.ne.s32.totalorder %s54, %s68
      %p70 = scmp.eq.s32.totalorder %s23, 0
      %p71 = por %p69, %p70
      %s73 = sadd.s32 %s72, 1
      %p76 = scmp.eq.s32.totalorder %s17, 1
      %p77 = scmp.ne.s32.totalorder %s72, %s74
      %p78 = scmp.eq.s32.totalorder %s17, 0
      %p79 = por %p77, %p78
      %p80 = scmp.ne.s32.totalorder %s72, %s74
      %p81 = scmp.eq.s32.totalorder %s22, 1
      %p82 = por %p80, %p81
      %p83 = scmp.ne.s32.totalorder %s74, %s75
      %p84 = scmp.eq.s32.totalorder %s22, 0
      %p85 = por %p83, %p84
      %p86 = scmp.ne.s32.totalorder %s74, %s75
      %p87 = scmp.eq.s32.totalorder %s23, 1
      %p88 = por %p86, %p87
      %p90 = scmp.ne.s32.totalorder %s75, %s89
      %p91 = scmp.eq.s32.totalorder %s23, 0
      %p92 = por %p90, %p91
      %s94 = sadd.s32 %s93, 1
      %p97 = scmp.eq.s32.totalorder %s17, 1
      %p98 = scmp.ne.s32.totalorder %s93, %s95
      %p99 = scmp.eq.s32.totalorder %s17, 0
      %p100 = por %p98, %p99
      %p101 = scmp.ne.s32.totalorder %s93, %s95
      %p102 = scmp.eq.s32.totalorder %s22, 1
      %p103 = por %p101, %p102
      %p104 = scmp.ne.s32.totalorder %s95, %s96
      %p105 = scmp.eq.s32.totalorder %s22, 0
      %p106 = por %p104, %p105
      %p107 = scmp.ne.s32.totalorder %s95, %s96
      %p108 = scmp.eq.s32.totalorder %s23, 1
      %p109 = por %p107, %p108
      %p111 = scmp.ne.s32.totalorder %s96, %s110
      %p112 = scmp.eq.s32.totalorder %s23, 0
      %p113 = por %p111, %p112
      %s115 = sadd.s32 %s114, 1
      %p118 = scmp.eq.s32.totalorder %s17, 1
      %p119 = scmp.ne.s32.totalorder %s114, %s116
      %p120 = scmp.eq.s32.totalorder %s17, 0
      %p121 = por %p119, %p120
      %p122 = scmp.ne.s32.totalorder %s114, %s116
      %p123 = scmp.eq.s32.totalorder %s22, 1
      %p124 = por %p122, %p123
      %p125 = scmp.ne.s32.totalorder %s116, %s117
      %p126 = scmp.eq.s32.totalorder %s22, 0
      %p127 = por %p125, %p126
      %p128 = scmp.ne.s32.totalorder %s116, %s117
      %p129 = scmp.eq.s32.totalorder %s23, 1
      %p130 = por %p128, %p129
      %p132 = scmp.ne.s32.totalorder %s117, %s131
      %p133 = scmp.eq.s32.totalorder %s23, 0
      %p134 = por %p132, %p133
      %s136 = sadd.s32 %s135, 1
      %p139 = scmp.eq.s32.totalorder %s17, 1
      %p140 = scmp.ne.s32.totalorder %s135, %s137
      %p141 = scmp.eq.s32.totalorder %s17, 0
      %p142 = por %p140, %p141
      %p143 = scmp.ne.s32.totalorder %s135, %s137
      %p144 = scmp.eq.s32.totalorder %s22, 1
      %p145 = por %p143, %p144
      %p146 = scmp.ne.s32.totalorder %s137, %s138
      %p147 = scmp.eq.s32.totalorder %s22, 0
      %p148 = por %p146, %p147
      %p149 = scmp.ne.s32.totalorder %s137, %s138
      %p150 = scmp.eq.s32.totalorder %s23, 1
      %p151 = por %p149, %p150
      %p153 = scmp.ne.s32.totalorder %s138, %s152
      %p154 = scmp.eq.s32.totalorder %s23, 0
      %p155 = por %p153, %p154
      %s157 = sadd.s32 %s156, 1
      %p160 = scmp.eq.s32.totalorder %s17, 1
      %p161 = scmp.ne.s32.totalorder %s156, %s158
      %p162 = scmp.eq.s32.totalorder %s17, 0
      %p163 = por %p161, %p162
      %p164 = scmp.ne.s32.totalorder %s156, %s158
      %p165 = scmp.eq.s32.totalorder %s22, 1
      %p166 = por %p164, %p165
      %p167 = scmp.ne.s32.totalorder %s158, %s159
      %p168 = scmp.eq.s32.totalorder %s22, 0
      %p169 = por %p167, %p168
      %p170 = scmp.ne.s32.totalorder %s158, %s159
      %p171 = scmp.eq.s32.totalorder %s23, 1
      %p172 = por %p170, %p171
      %p174 = scmp.ne.s32.totalorder %s159, %s173
      %p175 = scmp.eq.s32.totalorder %s23, 0
      %p176 = por %p174, %p175
      %s178 = sadd.s32 %s177, 1
      %p181 = scmp.eq.s32.totalorder %s17, 1
      %p182 = scmp.ne.s32.totalorder %s177, %s179
      %p183 = scmp.eq.s32.totalorder %s17, 0
      %p184 = por %p182, %p183
      %p185 = scmp.ne.s32.totalorder %s177, %s179
      %p186 = scmp.eq.s32.totalorder %s22, 1
      %p187 = por %p185, %p186
      %p188 = scmp.ne.s32.totalorder %s179, %s180
      %p189 = scmp.eq.s32.totalorder %s22, 0
      %p190 = por %p188, %p189
      %p191 = scmp.ne.s32.totalorder %s179, %s180
      %p192 = scmp.eq.s32.totalorder %s23, 1
      %p193 = por %p191, %p192
      %p195 = scmp.ne.s32.totalorder %s180, %s194
      %p196 = scmp.eq.s32.totalorder %s23, 0
      %p197 = por %p195, %p196
      %s198 = ssub.s32 %s17, %s24
      %p199 = scmp.eq.s32.totalorder %s198, 0
      %s201 = sadd.s32 %s200, 1
      %s202 = scalar_select %p199, %s200, %s201
      %p205 = pneg %p199
      %p206 = scmp.eq.s32.totalorder %s17, 1
      %p207 = por %p205, %p206
      %p208 = scmp.ne.s32.totalorder %s200, %s203
      %p209 = scmp.eq.s32.totalorder %s17, 0
      %p210 = por %p208, %p209
      %p211 = scmp.ne.s32.totalorder %s200, %s203
      %p212 = scmp.eq.s32.totalorder %s22, 1
      %p213 = por %p211, %p212
      %p214 = scmp.ne.s32.totalorder %s203, %s204
      %p215 = scmp.eq.s32.totalorder %s22, 0
      %p216 = por %p214, %p215
      %p217 = scmp.ne.s32.totalorder %s203, %s204
      %p218 = scmp.eq.s32.totalorder %s23, 1
      %p219 = por %p217, %p218
      %p221 = scmp.ne.s32.totalorder %s204, %s220
      %p222 = scmp.eq.s32.totalorder %s23, 0
      %p223 = por %p221, %p222
      %p224 = scmp.le.s32.totalorder 1, %s17
      %p225 = scmp.lt.s32.totalorder %s17, 3
      %p226 = pnand %p224, %p225
      %p227 = pneg %p226
      // Predicated region
      $region9: #{tpu_custom_call.1} parent=5 // pred_check
        _
      $region10: #{tpu_custom_call.1} parent=5 // pred_check_branch
        %229 = sbr.rel (%p226) target = $region12
      $region11: #{tpu_custom_call.1} parent=5 // pred_region
        %s230 = ssub.s32 %s17, 1
        // Predicated region
        $region13: #{tpu_custom_call.1} parent=11 // pred_check
          %p231 = pneg %p64
        $region14: #{tpu_custom_call.1} parent=11 // pred_check_branch
          %233 = sbr.rel (%p231) target = $region16
        $region15: #{tpu_custom_call.1} parent=11 // pred_region
          _
        $region16: #{tpu_custom_call.1} parent=11 // pred_fallthru
          _
        // Predicated region
        $region17: #{tpu_custom_call.1} parent=11 // pred_check
          %p234 = pneg %p85
        $region18: #{tpu_custom_call.1} parent=11 // pred_check_branch
          %236 = sbr.rel (%p234) target = $region20
        $region19: #{tpu_custom_call.1} parent=11 // pred_region
          _
        $region20: #{tpu_custom_call.1} parent=11 // pred_fallthru
          _
        // Predicated region
        $region21: #{tpu_custom_call.1} parent=11 // pred_check
          %p237 = pneg %p106
        $region22: #{tpu_custom_call.1} parent=11 // pred_check_branch
          %239 = sbr.rel (%p237) target = $region24
        $region23: #{tpu_custom_call.1} parent=11 // pred_region
          _
        $region24: #{tpu_custom_call.1} parent=11 // pred_fallthru
          _
        // Predicated region
        $region25: #{tpu_custom_call.1} parent=11 // pred_check
          %p240 = pneg %p127
        $region26: #{tpu_custom_call.1} parent=11 // pred_check_branch
          %242 = sbr.rel (%p240) target = $region28
        $region27: #{tpu_custom_call.1} parent=11 // pred_region
          _
        $region28: #{tpu_custom_call.1} parent=11 // pred_fallthru
          _
        // Predicated region
        $region29: #{tpu_custom_call.1} parent=11 // pred_check
          %p243 = pneg %p148
        $region30: #{tpu_custom_call.1} parent=11 // pred_check_branch
          %245 = sbr.rel (%p243) target = $region32
        $region31: #{tpu_custom_call.1} parent=11 // pred_region
          _
        $region32: #{tpu_custom_call.1} parent=11 // pred_fallthru
          _
        // Predicated region
        $region33: #{tpu_custom_call.1} parent=11 // pred_check
          %p246 = pneg %p169
        $region34: #{tpu_custom_call.1} parent=11 // pred_check_branch
          %248 = sbr.rel (%p246) target = $region36
        $region35: #{tpu_custom_call.1} parent=11 // pred_region
          _
        $region36: #{tpu_custom_call.1} parent=11 // pred_fallthru
          _
        // Predicated region
        $region37: #{tpu_custom_call.1} parent=11 // pred_check
          %p249 = pneg %p190
        $region38: #{tpu_custom_call.1} parent=11 // pred_check_branch
          %251 = sbr.rel (%p249) target = $region40
        $region39: #{tpu_custom_call.1} parent=11 // pred_region
          _
        $region40: #{tpu_custom_call.1} parent=11 // pred_fallthru
          _
      $region12: #{tpu_custom_call.1} parent=5 // pred_fallthru
        _
      %p252 = scmp.lt.s32.totalorder %s17, 2
      // Predicated region
      $region41: #{tpu_custom_call.1} parent=5 // pred_check
        %p253 = pneg %p252
      $region42: #{tpu_custom_call.1} parent=5 // pred_check_branch
        %255 = sbr.rel (%p253) target = $region44
      $region43: #{tpu_custom_call.1} parent=5 // pred_region
        // Predicated region
        $region45: #{tpu_custom_call.1} parent=43 // pred_check
          %p256 = pneg %p37
        $region46: #{tpu_custom_call.1} parent=43 // pred_check_branch
          %258 = sbr.rel (%p256) target = $region48
        $region47: #{tpu_custom_call.1} parent=43 // pred_region
          %p259 = scmp.lt.s32.totalorder %s17, 1
          %s260 = scalar_select %p259, %s17, 1
          %s261 = smul.addr %s260, 8
          %s262 = scalar_lea.vmem %s0, %s261
        $region48: #{tpu_custom_call.1} parent=43 // pred_fallthru
          _
      $region44: #{tpu_custom_call.1} parent=5 // pred_fallthru
        _
      %p263 = scmp.le.s32.totalorder 1, %s17
      %p264 = scmp.lt.s32.totalorder %s17, 3
      %p265 = pnand %p263, %p264
      %p266 = pneg %p265
      // Predicated region
      $region49: #{tpu_custom_call.1} parent=5 // pred_check
        _
      $region50: #{tpu_custom_call.1} parent=5 // pred_check_branch
        %268 = sbr.rel (%p265) target = $region52
      $region51: #{tpu_custom_call.1} parent=5 // pred_region
        %s269 = ssub.s32 %s17, 1
        %p270 = scmp.lt.s32.totalorder %s22, 1
        %s271 = scalar_select %p270, %s22, 1
        %s272 = smul.addr %s271, 8
        %s273 = scalar_lea.vmem %s0, %s272
        %p274 = pneg %p43
        %p275 = pneg %p40
        %p276 = pneg %p64
        %p277 = pneg %p61
        %p278 = pneg %p85
        %p279 = pneg %p82
        %p280 = pneg %p106
        %p281 = pneg %p103
        %p282 = pneg %p127
        %p283 = pneg %p124
        %p284 = pneg %p148
        %p285 = pneg %p145
        %p286 = pneg %p169
        %p287 = pneg %p166
        %p288 = pneg %p190
        %p289 = pneg %p187
        %p290 = pneg %p216
        %p291 = pneg %p213
        %s292 = sand.u32 %s203, 1
        %s293 = scalar_lea.sflag [#allocation3], %s292
        %s294 = sand.u32 %s203, 1
        %s295 = smul.addr %s294, 96
        %s296 = scalar_lea.vmem [#allocation2], %s295
        %p297 = scmp.lt.s32.totalorder %s22, 1
        %s298 = scalar_select %p297, %s22, 1
        %s299 = smul.addr %s298, 8
        %s300 = scalar_lea.vmem %s0, %s299
        %v301 = vld [vmem:[%s300] sm:$0xff]
        %v302 = vld [vmem:[%s1] sm:$0xff]
        %v303 = vld [vmem:[%s2] sm:$0xff]
        %305 = vset.pattern.permute.xlu0 0
        %306 = vperm.xlu0 %305, %v303
        %v307 = vpop.permute.xlu0 %306
        %vm309 = vcmask 64512
        %v311 = vsel %vm309, %v302, 0
        %313 = vmatprep.subr.mxu0 0.0
        %314 = vmatpush1.msra.mxu0 0.0
        %315 = vmatprep.subr.mxu0 0.0
        %316 = vmatpush1.msra.mxu0 0.0
        %317 = vmatprep.subr.mxu0 0.0
        %318 = vmatpush1.msra.mxu0 0.0
        %319 = vmatprep.subr.mxu0 0.0
        %320 = vmatpush1.msra.mxu0 0.0
        %321 = vmatprep.subr.mxu0 0.0
        %322 = vmatpush1.msra.mxu0 0.0
        %323 = vmatprep.subr.mxu0 0.0
        %324 = vmatpush1.msra.mxu0 0.0
        %325 = vmatprep.subr.mxu0 0.0
        %326 = vmatpush1.msra.mxu0 0.0
        %327 = vmatprep.subr.mxu0 0.0
        %328 = vmatpush1.msra.mxu0 0.0
        %329 = vmatprep.subr.mxu0 0.0
        %330 = vmatpush1.msra.mxu0 0.0
        %331 = vmatprep.subr.mxu0 0.0
        %332 = vmatpush1.msra.mxu0 0.0
        %333 = vmatprep.subr.mxu0 0.0
        %334 = vmatpush1.msra.mxu0 0.0
        %335 = vmatprep.subr.mxu0 0.0
        %336 = vmatpush1.msra.mxu0 0.0
        %337 = vmatprep.subr.mxu0 0.0
        %338 = vmatpush1.msra.mxu0 0.0
        %339 = vmatprep.subr.mxu0 0.0
        %340 = vmatpush1.msra.mxu0 0.0
        %341 = vmatprep.subr.mxu0 0.0
        %342 = vmatpush1.msra.mxu0 0.0
        %343 = vmatprep.subr.mxu0 0.0
        %344 = vmatpush1.msra.mxu0 %v301
        %345 = vmatprep.subr.mxu0 0.0
        %346 = vmatpush2.msra.mxu0 0.0
        %347 = vmatprep.subr.mxu0 0.0
        %348 = vmatpush2.msra.mxu0 0.0
        %349 = vmatprep.subr.mxu0 0.0
        %350 = vmatpush2.msra.mxu0 0.0
        %351 = vmatprep.subr.mxu0 0.0
        %352 = vmatpush2.msra.mxu0 0.0
        %353 = vmatprep.subr.mxu0 0.0
        %354 = vmatpush2.msra.mxu0 0.0
        %355 = vmatprep.subr.mxu0 0.0
        %356 = vmatpush2.msra.mxu0 0.0
        %357 = vmatprep.subr.mxu0 0.0
        %358 = vmatpush2.msra.mxu0 0.0
        %359 = vmatprep.subr.mxu0 0.0
        %360 = vmatpush2.msra.mxu0 0.0
        %361 = vmatprep.subr.mxu0 0.0
        %362 = vmatpush2.msra.mxu0 0.0
        %363 = vmatprep.subr.mxu0 0.0
        %364 = vmatpush2.msra.mxu0 0.0
        %365 = vmatprep.subr.mxu0 0.0
        %366 = vmatpush2.msra.mxu0 0.0
        %367 = vmatprep.subr.mxu0 0.0
        %368 = vmatpush2.msra.mxu0 0.0
        %369 = vmatprep.subr.mxu0 0.0
        %370 = vmatpush2.msra.mxu0 0.0
        %371 = vmatprep.subr.mxu0 0.0
        %372 = vmatpush2.msra.mxu0 0.0
        %373 = vmatprep.subr.mxu0 0.0
        %374 = vmatpush2.msra.mxu0 0.0
        %375 = vmatprep.subr.mxu0 0.0
        %376 = vmatpush2.msra.mxu0 0.0
        %377 = vmatprep.mubr.f32.mxu0 0.0
        %378 = vmatmul.mubr.f32.gmra.mxu0 %v311
        %v379 = vpop.f32.mrf.mxu0
        %v380 = vadd.f32 %v307, %v379
        %v381 = vpop.f32.mrf.mxu0
        %382 = vdwg.mxu0
        %v383 = vlaneseq
        %v384 = vand.u32 %v383, 127
        %v385 = vld [vmem:[%s3] sm:$0xff]
        %387 = vset.pattern.permute.xlu0 1
        %388 = vperm.xlu0 %387, %v385
        %v389 = vpop.permute.xlu0 %388
        %v391 = vmul.f32 %v389, %v380
        %392 = vrot.lane.b32.xlu0 %v380, 1
        %v393 = vpop.permute.xlu0 %392
        %v394 = vadd.s32 %v384, 4294967295
        %vm395 = vcmp.ge.s32.totalorder %v394, 0
        %vm396 = vcmp.lt.s32.totalorder %v394, 128
        %vm397 = vmand %vm395, %vm396
        %v398 = vsel %vm397, %v393, 0.0
        %399 = vset.pattern.permute.xlu0 0
        %400 = vperm.xlu0 %399, %v385
        %v401 = vpop.permute.xlu0 %400
        %v403 = vmul.f32 %v401, %v398
        %v404 = vadd.f32 %v391, %v403
        %405 = vrot.lane.b32.xlu0 %v380, 127
        %v406 = vpop.permute.xlu0 %405
        %v407 = vadd.s32 %v384, 1
        %vm408 = vcmp.ge.s32.totalorder %v407, 0
        %vm409 = vcmp.lt.s32.totalorder %v407, 128
        %vm410 = vmand %vm408, %vm409
        %v411 = vsel %vm410, %v406, 0.0
        %412 = vset.pattern.permute.xlu0 2
        %413 = vperm.xlu0 %412, %v385
        %v414 = vpop.permute.xlu0 %413
        %v416 = vmul.f32 %v414, %v411
        %v417 = vadd.f32 %v404, %v416
        %v418 = vld [vmem:[%s6] sm:$0xff]
        %v419 = vld [vmem:[%s7] sm:$0xff]
        %421 = vset.pattern.permute.xlu0 0
        %422 = vperm.xlu0 %421, %v419
        %v423 = vpop.permute.xlu0 %422
        %v426 = vsel %vm309, %v418, 0
        %428 = vmatprep.subr.mxu0 0.0
        %429 = vmatpush1.msra.mxu0 0.0
        %430 = vmatprep.subr.mxu0 0.0
        %431 = vmatpush1.msra.mxu0 0.0
        %432 = vmatprep.subr.mxu0 0.0
        %433 = vmatpush1.msra.mxu0 0.0
        %434 = vmatprep.subr.mxu0 0.0
        %435 = vmatpush1.msra.mxu0 0.0
        %436 = vmatprep.subr.mxu0 0.0
        %437 = vmatpush1.msra.mxu0 0.0
        %438 = vmatprep.subr.mxu0 0.0
        %439 = vmatpush1.msra.mxu0 0.0
        %440 = vmatprep.subr.mxu0 0.0
        %441 = vmatpush1.msra.mxu0 0.0
        %442 = vmatprep.subr.mxu0 0.0
        %443 = vmatpush1.msra.mxu0 0.0
        %444 = vmatprep.subr.mxu0 0.0
        %445 = vmatpush1.msra.mxu0 0.0
        %446 = vmatprep.subr.mxu0 0.0
        %447 = vmatpush1.msra.mxu0 0.0
        %448 = vmatprep.subr.mxu0 0.0
        %449 = vmatpush1.msra.mxu0 0.0
        %450 = vmatprep.subr.mxu0 0.0
        %451 = vmatpush1.msra.mxu0 0.0
        %452 = vmatprep.subr.mxu0 0.0
        %453 = vmatpush1.msra.mxu0 0.0
        %454 = vmatprep.subr.mxu0 0.0
        %455 = vmatpush1.msra.mxu0 0.0
        %456 = vmatprep.subr.mxu0 0.0
        %457 = vmatpush1.msra.mxu0 0.0
        %458 = vmatprep.subr.mxu0 0.0
        %459 = vmatpush1.msra.mxu0 %v417
        %460 = vmatprep.subr.mxu0 0.0
        %461 = vmatpush2.msra.mxu0 0.0
        %462 = vmatprep.subr.mxu0 0.0
        %463 = vmatpush2.msra.mxu0 0.0
        %464 = vmatprep.subr.mxu0 0.0
        %465 = vmatpush2.msra.mxu0 0.0
        %466 = vmatprep.subr.mxu0 0.0
        %467 = vmatpush2.msra.mxu0 0.0
        %468 = vmatprep.subr.mxu0 0.0
        %469 = vmatpush2.msra.mxu0 0.0
        %470 = vmatprep.subr.mxu0 0.0
        %471 = vmatpush2.msra.mxu0 0.0
        %472 = vmatprep.subr.mxu0 0.0
        %473 = vmatpush2.msra.mxu0 0.0
        %474 = vmatprep.subr.mxu0 0.0
        %475 = vmatpush2.msra.mxu0 0.0
        %476 = vmatprep.subr.mxu0 0.0
        %477 = vmatpush2.msra.mxu0 0.0
        %478 = vmatprep.subr.mxu0 0.0
        %479 = vmatpush2.msra.mxu0 0.0
        %480 = vmatprep.subr.mxu0 0.0
        %481 = vmatpush2.msra.mxu0 0.0
        %482 = vmatprep.subr.mxu0 0.0
        %483 = vmatpush2.msra.mxu0 0.0
        %484 = vmatprep.subr.mxu0 0.0
        %485 = vmatpush2.msra.mxu0 0.0
        %486 = vmatprep.subr.mxu0 0.0
        %487 = vmatpush2.msra.mxu0 0.0
        %488 = vmatprep.subr.mxu0 0.0
        %489 = vmatpush2.msra.mxu0 0.0
        %490 = vmatprep.subr.mxu0 0.0
        %491 = vmatpush2.msra.mxu0 0.0
        %492 = vmatprep.mubr.f32.mxu0 0.0
        %493 = vmatmul.mubr.f32.gmra.mxu0 %v426
        %v494 = vpop.f32.mrf.mxu0
        %v495 = vadd.f32 %v423, %v494
        %v496 = vpop.f32.mrf.mxu0
        %497 = vdwg.mxu0
        %s498 = scalar_lea.vmem %s3, 8
        %v499 = vld [vmem:[%s498] sm:$0xff]
        %501 = vset.pattern.permute.xlu0 1
        %502 = vperm.xlu0 %501, %v499
        %v503 = vpop.permute.xlu0 %502
        %v505 = vmul.f32 %v503, %v380
        %506 = vrot.lane.b32.xlu0 %v380, 2
        %v507 = vpop.permute.xlu0 %506
        %v508 = vadd.s32 %v384, 4294967294
        %vm509 = vcmp.ge.s32.totalorder %v508, 0
        %vm510 = vcmp.lt.s32.totalorder %v508, 128
        %vm511 = vmand %vm509, %vm510
        %v512 = vsel %vm511, %v507, 0.0
        %513 = vset.pattern.permute.xlu0 0
        %514 = vperm.xlu0 %513, %v499
        %v515 = vpop.permute.xlu0 %514
        %v517 = vmul.f32 %v515, %v512
        %v518 = vadd.f32 %v505, %v517
        %519 = vrot.lane.b32.xlu0 %v380, 126
        %v520 = vpop.permute.xlu0 %519
        %v521 = vadd.s32 %v384, 2
        %vm522 = vcmp.ge.s32.totalorder %v521, 0
        %vm523 = vcmp.lt.s32.totalorder %v521, 128
        %vm524 = vmand %vm522, %vm523
        %v525 = vsel %vm524, %v520, 0.0
        %526 = vset.pattern.permute.xlu0 2
        %527 = vperm.xlu0 %526, %v499
        %v528 = vpop.permute.xlu0 %527
        %v530 = vmul.f32 %v528, %v525
        %v531 = vadd.f32 %v518, %v530
        %s532 = scalar_lea.vmem %s6, 8
        %v533 = vld [vmem:[%s532] sm:$0xff]
        %s534 = scalar_lea.vmem %s7, 8
        %v535 = vld [vmem:[%s534] sm:$0xff]
        %537 = vset.pattern.permute.xlu0 0
        %538 = vperm.xlu0 %537, %v535
        %v539 = vpop.permute.xlu0 %538
        %v542 = vsel %vm309, %v533, 0
        %544 = vmatprep.subr.mxu0 0.0
        %545 = vmatpush1.msra.mxu0 0.0
        %546 = vmatprep.subr.mxu0 0.0
        %547 = vmatpush1.msra.mxu0 0.0
        %548 = vmatprep.subr.mxu0 0.0
        %549 = vmatpush1.msra.mxu0 0.0
        %550 = vmatprep.subr.mxu0 0.0
        %551 = vmatpush1.msra.mxu0 0.0
        %552 = vmatprep.subr.mxu0 0.0
        %553 = vmatpush1.msra.mxu0 0.0
        %554 = vmatprep.subr.mxu0 0.0
        %555 = vmatpush1.msra.mxu0 0.0
        %556 = vmatprep.subr.mxu0 0.0
        %557 = vmatpush1.msra.mxu0 0.0
        %558 = vmatprep.subr.mxu0 0.0
        %559 = vmatpush1.msra.mxu0 0.0
        %560 = vmatprep.subr.mxu0 0.0
        %561 = vmatpush1.msra.mxu0 0.0
        %562 = vmatprep.subr.mxu0 0.0
        %563 = vmatpush1.msra.mxu0 0.0
        %564 = vmatprep.subr.mxu0 0.0
        %565 = vmatpush1.msra.mxu0 0.0
        %566 = vmatprep.subr.mxu0 0.0
        %567 = vmatpush1.msra.mxu0 0.0
        %568 = vmatprep.subr.mxu0 0.0
        %569 = vmatpush1.msra.mxu0 0.0
        %570 = vmatprep.subr.mxu0 0.0
        %571 = vmatpush1.msra.mxu0 0.0
        %572 = vmatprep.subr.mxu0 0.0
        %573 = vmatpush1.msra.mxu0 0.0
        %574 = vmatprep.subr.mxu0 0.0
        %575 = vmatpush1.msra.mxu0 %v531
        %576 = vmatprep.subr.mxu0 0.0
        %577 = vmatpush2.msra.mxu0 0.0
        %578 = vmatprep.subr.mxu0 0.0
        %579 = vmatpush2.msra.mxu0 0.0
        %580 = vmatprep.subr.mxu0 0.0
        %581 = vmatpush2.msra.mxu0 0.0
        %582 = vmatprep.subr.mxu0 0.0
        %583 = vmatpush2.msra.mxu0 0.0
        %584 = vmatprep.subr.mxu0 0.0
        %585 = vmatpush2.msra.mxu0 0.0
        %586 = vmatprep.subr.mxu0 0.0
        %587 = vmatpush2.msra.mxu0 0.0
        %588 = vmatprep.subr.mxu0 0.0
        %589 = vmatpush2.msra.mxu0 0.0
        %590 = vmatprep.subr.mxu0 0.0
        %591 = vmatpush2.msra.mxu0 0.0
        %592 = vmatprep.subr.mxu0 0.0
        %593 = vmatpush2.msra.mxu0 0.0
        %594 = vmatprep.subr.mxu0 0.0
        %595 = vmatpush2.msra.mxu0 0.0
        %596 = vmatprep.subr.mxu0 0.0
        %597 = vmatpush2.msra.mxu0 0.0
        %598 = vmatprep.subr.mxu0 0.0
        %599 = vmatpush2.msra.mxu0 0.0
        %600 = vmatprep.subr.mxu0 0.0
        %601 = vmatpush2.msra.mxu0 0.0
        %602 = vmatprep.subr.mxu0 0.0
        %603 = vmatpush2.msra.mxu0 0.0
        %604 = vmatprep.subr.mxu0 0.0
        %605 = vmatpush2.msra.mxu0 0.0
        %606 = vmatprep.subr.mxu0 0.0
        %607 = vmatpush2.msra.mxu0 0.0
        %608 = vmatprep.mubr.f32.mxu0 0.0
        %609 = vmatmul.mubr.f32.gmra.mxu0 %v542
        %v610 = vpop.f32.mrf.mxu0
        %v611 = vadd.f32 %v539, %v610
        %v612 = vpop.f32.mrf.mxu0
        %613 = vdwg.mxu0
        %s614 = scalar_lea.vmem %s3, 16
        %v615 = vld [vmem:[%s614] sm:$0xff]
        %617 = vset.pattern.permute.xlu0 1
        %618 = vperm.xlu0 %617, %v615
        %v619 = vpop.permute.xlu0 %618
        %v621 = vmul.f32 %v619, %v380
        %622 = vrot.lane.b32.xlu0 %v380, 4
        %v623 = vpop.permute.xlu0 %622
        %v624 = vadd.s32 %v384, 4294967292
        %vm625 = vcmp.ge.s32.totalorder %v624, 0
        %vm626 = vcmp.lt.s32.totalorder %v624, 128
        %vm627 = vmand %vm625, %vm626
        %v628 = vsel %vm627, %v623, 0.0
        %629 = vset.pattern.permute.xlu0 0
        %630 = vperm.xlu0 %629, %v615
        %v631 = vpop.permute.xlu0 %630
        %v633 = vmul.f32 %v631, %v628
        %v634 = vadd.f32 %v621, %v633
        %635 = vrot.lane.b32.xlu0 %v380, 124
        %v636 = vpop.permute.xlu0 %635
        %v637 = vadd.s32 %v384, 4
        %vm638 = vcmp.ge.s32.totalorder %v637, 0
        %vm639 = vcmp.lt.s32.totalorder %v637, 128
        %vm640 = vmand %vm638, %vm639
        %v641 = vsel %vm640, %v636, 0.0
        %642 = vset.pattern.permute.xlu0 2
        %643 = vperm.xlu0 %642, %v615
        %v644 = vpop.permute.xlu0 %643
        %v646 = vmul.f32 %v644, %v641
        %v647 = vadd.f32 %v634, %v646
        %s648 = scalar_lea.vmem %s6, 16
        %v649 = vld [vmem:[%s648] sm:$0xff]
        %s650 = scalar_lea.vmem %s7, 16
        %v651 = vld [vmem:[%s650] sm:$0xff]
        %653 = vset.pattern.permute.xlu0 0
        %654 = vperm.xlu0 %653, %v651
        %v655 = vpop.permute.xlu0 %654
        %v658 = vsel %vm309, %v649, 0
        %660 = vmatprep.subr.mxu0 0.0
        %661 = vmatpush1.msra.mxu0 0.0
        %662 = vmatprep.subr.mxu0 0.0
        %663 = vmatpush1.msra.mxu0 0.0
        %664 = vmatprep.subr.mxu0 0.0
        %665 = vmatpush1.msra.mxu0 0.0
        %666 = vmatprep.subr.mxu0 0.0
        %667 = vmatpush1.msra.mxu0 0.0
        %668 = vmatprep.subr.mxu0 0.0
        %669 = vmatpush1.msra.mxu0 0.0
        %670 = vmatprep.subr.mxu0 0.0
        %671 = vmatpush1.msra.mxu0 0.0
        %672 = vmatprep.subr.mxu0 0.0
        %673 = vmatpush1.msra.mxu0 0.0
        %674 = vmatprep.subr.mxu0 0.0
        %675 = vmatpush1.msra.mxu0 0.0
        %676 = vmatprep.subr.mxu0 0.0
        %677 = vmatpush1.msra.mxu0 0.0
        %678 = vmatprep.subr.mxu0 0.0
        %679 = vmatpush1.msra.mxu0 0.0
        %680 = vmatprep.subr.mxu0 0.0
        %681 = vmatpush1.msra.mxu0 0.0
        %682 = vmatprep.subr.mxu0 0.0
        %683 = vmatpush1.msra.mxu0 0.0
        %684 = vmatprep.subr.mxu0 0.0
        %685 = vmatpush1.msra.mxu0 0.0
        %686 = vmatprep.subr.mxu0 0.0
        %687 = vmatpush1.msra.mxu0 0.0
        %688 = vmatprep.subr.mxu0 0.0
        %689 = vmatpush1.msra.mxu0 0.0
        %690 = vmatprep.subr.mxu0 0.0
        %691 = vmatpush1.msra.mxu0 %v647
        %692 = vmatprep.subr.mxu0 0.0
        %693 = vmatpush2.msra.mxu0 0.0
        %694 = vmatprep.subr.mxu0 0.0
        %695 = vmatpush2.msra.mxu0 0.0
        %696 = vmatprep.subr.mxu0 0.0
        %697 = vmatpush2.msra.mxu0 0.0
        %698 = vmatprep.subr.mxu0 0.0
        %699 = vmatpush2.msra.mxu0 0.0
        %700 = vmatprep.subr.mxu0 0.0
        %701 = vmatpush2.msra.mxu0 0.0
        %702 = vmatprep.subr.mxu0 0.0
        %703 = vmatpush2.msra.mxu0 0.0
        %704 = vmatprep.subr.mxu0 0.0
        %705 = vmatpush2.msra.mxu0 0.0
        %706 = vmatprep.subr.mxu0 0.0
        %707 = vmatpush2.msra.mxu0 0.0
        %708 = vmatprep.subr.mxu0 0.0
        %709 = vmatpush2.msra.mxu0 0.0
        %710 = vmatprep.subr.mxu0 0.0
        %711 = vmatpush2.msra.mxu0 0.0
        %712 = vmatprep.subr.mxu0 0.0
        %713 = vmatpush2.msra.mxu0 0.0
        %714 = vmatprep.subr.mxu0 0.0
        %715 = vmatpush2.msra.mxu0 0.0
        %716 = vmatprep.subr.mxu0 0.0
        %717 = vmatpush2.msra.mxu0 0.0
        %718 = vmatprep.subr.mxu0 0.0
        %719 = vmatpush2.msra.mxu0 0.0
        %720 = vmatprep.subr.mxu0 0.0
        %721 = vmatpush2.msra.mxu0 0.0
        %722 = vmatprep.subr.mxu0 0.0
        %723 = vmatpush2.msra.mxu0 0.0
        %724 = vmatprep.mubr.f32.mxu0 0.0
        %725 = vmatmul.mubr.f32.gmra.mxu0 %v658
        %v726 = vpop.f32.mrf.mxu0
        %v727 = vadd.f32 %v655, %v726
        %v728 = vpop.f32.mrf.mxu0
        %729 = vdwg.mxu0
        %s730 = scalar_lea.vmem %s3, 24
        %v731 = vld [vmem:[%s730] sm:$0xff]
        %733 = vset.pattern.permute.xlu0 1
        %734 = vperm.xlu0 %733, %v731
        %v735 = vpop.permute.xlu0 %734
        %v737 = vmul.f32 %v735, %v380
        %738 = vrot.lane.b32.xlu0 %v380, 5
        %v739 = vpop.permute.xlu0 %738
        %v740 = vadd.s32 %v384, 4294967291
        %vm741 = vcmp.ge.s32.totalorder %v740, 0
        %vm742 = vcmp.lt.s32.totalorder %v740, 128
        %vm743 = vmand %vm741, %vm742
        %v744 = vsel %vm743, %v739, 0.0
        %745 = vset.pattern.permute.xlu0 0
        %746 = vperm.xlu0 %745, %v731
        %v747 = vpop.permute.xlu0 %746
        %v749 = vmul.f32 %v747, %v744
        %v750 = vadd.f32 %v737, %v749
        %751 = vrot.lane.b32.xlu0 %v380, 123
        %v752 = vpop.permute.xlu0 %751
        %v753 = vadd.s32 %v384, 5
        %vm754 = vcmp.ge.s32.totalorder %v753, 0
        %vm755 = vcmp.lt.s32.totalorder %v753, 128
        %vm756 = vmand %vm754, %vm755
        %v757 = vsel %vm756, %v752, 0.0
        %758 = vset.pattern.permute.xlu0 2
        %759 = vperm.xlu0 %758, %v731
        %v760 = vpop.permute.xlu0 %759
        %v762 = vmul.f32 %v760, %v757
        %v763 = vadd.f32 %v750, %v762
        %s764 = scalar_lea.vmem %s6, 24
        %v765 = vld [vmem:[%s764] sm:$0xff]
        %s766 = scalar_lea.vmem %s7, 24
        %v767 = vld [vmem:[%s766] sm:$0xff]
        %769 = vset.pattern.permute.xlu0 0
        %770 = vperm.xlu0 %769, %v767
        %v771 = vpop.permute.xlu0 %770
        %v774 = vsel %vm309, %v765, 0
        %776 = vmatprep.subr.mxu0 0.0
        %777 = vmatpush1.msra.mxu0 0.0
        %778 = vmatprep.subr.mxu0 0.0
        %779 = vmatpush1.msra.mxu0 0.0
        %780 = vmatprep.subr.mxu0 0.0
        %781 = vmatpush1.msra.mxu0 0.0
        %782 = vmatprep.subr.mxu0 0.0
        %783 = vmatpush1.msra.mxu0 0.0
        %784 = vmatprep.subr.mxu0 0.0
        %785 = vmatpush1.msra.mxu0 0.0
        %786 = vmatprep.subr.mxu0 0.0
        %787 = vmatpush1.msra.mxu0 0.0
        %788 = vmatprep.subr.mxu0 0.0
        %789 = vmatpush1.msra.mxu0 0.0
        %790 = vmatprep.subr.mxu0 0.0
        %791 = vmatpush1.msra.mxu0 0.0
        %792 = vmatprep.subr.mxu0 0.0
        %793 = vmatpush1.msra.mxu0 0.0
        %794 = vmatprep.subr.mxu0 0.0
        %795 = vmatpush1.msra.mxu0 0.0
        %796 = vmatprep.subr.mxu0 0.0
        %797 = vmatpush1.msra.mxu0 0.0
        %798 = vmatprep.subr.mxu0 0.0
        %799 = vmatpush1.msra.mxu0 0.0
        %800 = vmatprep.subr.mxu0 0.0
        %801 = vmatpush1.msra.mxu0 0.0
        %802 = vmatprep.subr.mxu0 0.0
        %803 = vmatpush1.msra.mxu0 0.0
        %804 = vmatprep.subr.mxu0 0.0
        %805 = vmatpush1.msra.mxu0 0.0
        %806 = vmatprep.subr.mxu0 0.0
        %807 = vmatpush1.msra.mxu0 %v763
        %808 = vmatprep.subr.mxu0 0.0
        %809 = vmatpush2.msra.mxu0 0.0
        %810 = vmatprep.subr.mxu0 0.0
        %811 = vmatpush2.msra.mxu0 0.0
        %812 = vmatprep.subr.mxu0 0.0
        %813 = vmatpush2.msra.mxu0 0.0
        %814 = vmatprep.subr.mxu0 0.0
        %815 = vmatpush2.msra.mxu0 0.0
        %816 = vmatprep.subr.mxu0 0.0
        %817 = vmatpush2.msra.mxu0 0.0
        %818 = vmatprep.subr.mxu0 0.0
        %819 = vmatpush2.msra.mxu0 0.0
        %820 = vmatprep.subr.mxu0 0.0
        %821 = vmatpush2.msra.mxu0 0.0
        %822 = vmatprep.subr.mxu0 0.0
        %823 = vmatpush2.msra.mxu0 0.0
        %824 = vmatprep.subr.mxu0 0.0
        %825 = vmatpush2.msra.mxu0 0.0
        %826 = vmatprep.subr.mxu0 0.0
        %827 = vmatpush2.msra.mxu0 0.0
        %828 = vmatprep.subr.mxu0 0.0
        %829 = vmatpush2.msra.mxu0 0.0
        %830 = vmatprep.subr.mxu0 0.0
        %831 = vmatpush2.msra.mxu0 0.0
        %832 = vmatprep.subr.mxu0 0.0
        %833 = vmatpush2.msra.mxu0 0.0
        %834 = vmatprep.subr.mxu0 0.0
        %835 = vmatpush2.msra.mxu0 0.0
        %836 = vmatprep.subr.mxu0 0.0
        %837 = vmatpush2.msra.mxu0 0.0
        %838 = vmatprep.subr.mxu0 0.0
        %839 = vmatpush2.msra.mxu0 0.0
        %840 = vmatprep.mubr.f32.mxu0 0.0
        %841 = vmatmul.mubr.f32.gmra.mxu0 %v774
        %v842 = vpop.f32.mrf.mxu0
        %v843 = vadd.f32 %v771, %v842
        %v844 = vpop.f32.mrf.mxu0
        %845 = vdwg.mxu0
        %v846 = vld [vmem:[%s4] sm:$0xff]
        %848 = vset.pattern.permute.xlu0 2
        %849 = vperm.xlu0 %848, %v846
        %v850 = vpop.permute.xlu0 %849
        %v852 = vmul.f32 %v850, %v380
        %853 = vset.pattern.permute.xlu0 0
        %854 = vperm.xlu0 %853, %v846
        %v855 = vpop.permute.xlu0 %854
        %v857 = vmul.f32 %v855, %v512
        %v858 = vadd.f32 %v852, %v857
        %859 = vset.pattern.permute.xlu0 1
        %860 = vperm.xlu0 %859, %v846
        %v861 = vpop.permute.xlu0 %860
        %v863 = vmul.f32 %v861, %v398
        %v864 = vadd.f32 %v858, %v863
        %865 = vset.pattern.permute.xlu0 3
        %866 = vperm.xlu0 %865, %v846
        %v867 = vpop.permute.xlu0 %866
        %v869 = vmul.f32 %v867, %v411
        %v870 = vadd.f32 %v864, %v869
        %871 = vset.pattern.permute.xlu0 4
        %872 = vperm.xlu0 %871, %v846
        %v873 = vpop.permute.xlu0 %872
        %v875 = vmul.f32 %v873, %v525
        %v876 = vadd.f32 %v870, %v875
        %s877 = scalar_lea.vmem %s6, 32
        %v878 = vld [vmem:[%s877] sm:$0xff]
        %s879 = scalar_lea.vmem %s7, 32
        %v880 = vld [vmem:[%s879] sm:$0xff]
        %882 = vset.pattern.permute.xlu0 0
        %883 = vperm.xlu0 %882, %v880
        %v884 = vpop.permute.xlu0 %883
        %v887 = vsel %vm309, %v878, 0
        %889 = vmatprep.subr.mxu0 0.0
        %890 = vmatpush1.msra.mxu0 0.0
        %891 = vmatprep.subr.mxu0 0.0
        %892 = vmatpush1.msra.mxu0 0.0
        %893 = vmatprep.subr.mxu0 0.0
        %894 = vmatpush1.msra.mxu0 0.0
        %895 = vmatprep.subr.mxu0 0.0
        %896 = vmatpush1.msra.mxu0 0.0
        %897 = vmatprep.subr.mxu0 0.0
        %898 = vmatpush1.msra.mxu0 0.0
        %899 = vmatprep.subr.mxu0 0.0
        %900 = vmatpush1.msra.mxu0 0.0
        %901 = vmatprep.subr.mxu0 0.0
        %902 = vmatpush1.msra.mxu0 0.0
        %903 = vmatprep.subr.mxu0 0.0
        %904 = vmatpush1.msra.mxu0 0.0
        %905 = vmatprep.subr.mxu0 0.0
        %906 = vmatpush1.msra.mxu0 0.0
        %907 = vmatprep.subr.mxu0 0.0
        %908 = vmatpush1.msra.mxu0 0.0
        %909 = vmatprep.subr.mxu0 0.0
        %910 = vmatpush1.msra.mxu0 0.0
        %911 = vmatprep.subr.mxu0 0.0
        %912 = vmatpush1.msra.mxu0 0.0
        %913 = vmatprep.subr.mxu0 0.0
        %914 = vmatpush1.msra.mxu0 0.0
        %915 = vmatprep.subr.mxu0 0.0
        %916 = vmatpush1.msra.mxu0 0.0
        %917 = vmatprep.subr.mxu0 0.0
        %918 = vmatpush1.msra.mxu0 0.0
        %919 = vmatprep.subr.mxu0 0.0
        %920 = vmatpush1.msra.mxu0 %v876
        %921 = vmatprep.subr.mxu0 0.0
        %922 = vmatpush2.msra.mxu0 0.0
        %923 = vmatprep.subr.mxu0 0.0
        %924 = vmatpush2.msra.mxu0 0.0
        %925 = vmatprep.subr.mxu0 0.0
        %926 = vmatpush2.msra.mxu0 0.0
        %927 = vmatprep.subr.mxu0 0.0
        %928 = vmatpush2.msra.mxu0 0.0
        %929 = vmatprep.subr.mxu0 0.0
        %930 = vmatpush2.msra.mxu0 0.0
        %931 = vmatprep.subr.mxu0 0.0
        %932 = vmatpush2.msra.mxu0 0.0
        %933 = vmatprep.subr.mxu0 0.0
        %934 = vmatpush2.msra.mxu0 0.0
        %935 = vmatprep.subr.mxu0 0.0
        %936 = vmatpush2.msra.mxu0 0.0
        %937 = vmatprep.subr.mxu0 0.0
        %938 = vmatpush2.msra.mxu0 0.0
        %939 = vmatprep.subr.mxu0 0.0
        %940 = vmatpush2.msra.mxu0 0.0
        %941 = vmatprep.subr.mxu0 0.0
        %942 = vmatpush2.msra.mxu0 0.0
        %943 = vmatprep.subr.mxu0 0.0
        %944 = vmatpush2.msra.mxu0 0.0
        %945 = vmatprep.subr.mxu0 0.0
        %946 = vmatpush2.msra.mxu0 0.0
        %947 = vmatprep.subr.mxu0 0.0
        %948 = vmatpush2.msra.mxu0 0.0
        %949 = vmatprep.subr.mxu0 0.0
        %950 = vmatpush2.msra.mxu0 0.0
        %951 = vmatprep.subr.mxu0 0.0
        %952 = vmatpush2.msra.mxu0 0.0
        %953 = vmatprep.mubr.f32.mxu0 0.0
        %954 = vmatmul.mubr.f32.gmra.mxu0 %v887
        %v955 = vpop.f32.mrf.mxu0
        %v956 = vadd.f32 %v884, %v955
        %v957 = vpop.f32.mrf.mxu0
        %958 = vdwg.mxu0
        %s959 = scalar_lea.vmem %s4, 8
        %v960 = vld [vmem:[%s959] sm:$0xff]
        %962 = vset.pattern.permute.xlu0 2
        %963 = vperm.xlu0 %962, %v960
        %v964 = vpop.permute.xlu0 %963
        %v966 = vmul.f32 %v964, %v380
        %967 = vset.pattern.permute.xlu0 0
        %968 = vperm.xlu0 %967, %v960
        %v969 = vpop.permute.xlu0 %968
        %v971 = vmul.f32 %v969, %v628
        %v972 = vadd.f32 %v966, %v971
        %973 = vset.pattern.permute.xlu0 1
        %974 = vperm.xlu0 %973, %v960
        %v975 = vpop.permute.xlu0 %974
        %v977 = vmul.f32 %v975, %v512
        %v978 = vadd.f32 %v972, %v977
        %979 = vset.pattern.permute.xlu0 3
        %980 = vperm.xlu0 %979, %v960
        %v981 = vpop.permute.xlu0 %980
        %v983 = vmul.f32 %v981, %v525
        %v984 = vadd.f32 %v978, %v983
        %985 = vset.pattern.permute.xlu0 4
        %986 = vperm.xlu0 %985, %v960
        %v987 = vpop.permute.xlu0 %986
        %v989 = vmul.f32 %v987, %v641
        %v990 = vadd.f32 %v984, %v989
        %s991 = scalar_lea.vmem %s6, 40
        %v992 = vld [vmem:[%s991] sm:$0xff]
        %s993 = scalar_lea.vmem %s7, 40
        %v994 = vld [vmem:[%s993] sm:$0xff]
        %996 = vset.pattern.permute.xlu0 0
        %997 = vperm.xlu0 %996, %v994
        %v998 = vpop.permute.xlu0 %997
        %v1001 = vsel %vm309, %v992, 0
        %1003 = vmatprep.subr.mxu0 0.0
        %1004 = vmatpush1.msra.mxu0 0.0
        %1005 = vmatprep.subr.mxu0 0.0
        %1006 = vmatpush1.msra.mxu0 0.0
        %1007 = vmatprep.subr.mxu0 0.0
        %1008 = vmatpush1.msra.mxu0 0.0
        %1009 = vmatprep.subr.mxu0 0.0
        %1010 = vmatpush1.msra.mxu0 0.0
        %1011 = vmatprep.subr.mxu0 0.0
        %1012 = vmatpush1.msra.mxu0 0.0
        %1013 = vmatprep.subr.mxu0 0.0
        %1014 = vmatpush1.msra.mxu0 0.0
        %1015 = vmatprep.subr.mxu0 0.0
        %1016 = vmatpush1.msra.mxu0 0.0
        %1017 = vmatprep.subr.mxu0 0.0
        %1018 = vmatpush1.msra.mxu0 0.0
        %1019 = vmatprep.subr.mxu0 0.0
        %1020 = vmatpush1.msra.mxu0 0.0
        %1021 = vmatprep.subr.mxu0 0.0
        %1022 = vmatpush1.msra.mxu0 0.0
        %1023 = vmatprep.subr.mxu0 0.0
        %1024 = vmatpush1.msra.mxu0 0.0
        %1025 = vmatprep.subr.mxu0 0.0
        %1026 = vmatpush1.msra.mxu0 0.0
        %1027 = vmatprep.subr.mxu0 0.0
        %1028 = vmatpush1.msra.mxu0 0.0
        %1029 = vmatprep.subr.mxu0 0.0
        %1030 = vmatpush1.msra.mxu0 0.0
        %1031 = vmatprep.subr.mxu0 0.0
        %1032 = vmatpush1.msra.mxu0 0.0
        %1033 = vmatprep.subr.mxu0 0.0
        %1034 = vmatpush1.msra.mxu0 %v990
        %1035 = vmatprep.subr.mxu0 0.0
        %1036 = vmatpush2.msra.mxu0 0.0
        %1037 = vmatprep.subr.mxu0 0.0
        %1038 = vmatpush2.msra.mxu0 0.0
        %1039 = vmatprep.subr.mxu0 0.0
        %1040 = vmatpush2.msra.mxu0 0.0
        %1041 = vmatprep.subr.mxu0 0.0
        %1042 = vmatpush2.msra.mxu0 0.0
        %1043 = vmatprep.subr.mxu0 0.0
        %1044 = vmatpush2.msra.mxu0 0.0
        %1045 = vmatprep.subr.mxu0 0.0
        %1046 = vmatpush2.msra.mxu0 0.0
        %1047 = vmatprep.subr.mxu0 0.0
        %1048 = vmatpush2.msra.mxu0 0.0
        %1049 = vmatprep.subr.mxu0 0.0
        %1050 = vmatpush2.msra.mxu0 0.0
        %1051 = vmatprep.subr.mxu0 0.0
        %1052 = vmatpush2.msra.mxu0 0.0
        %1053 = vmatprep.subr.mxu0 0.0
        %1054 = vmatpush2.msra.mxu0 0.0
        %1055 = vmatprep.subr.mxu0 0.0
        %1056 = vmatpush2.msra.mxu0 0.0
        %1057 = vmatprep.subr.mxu0 0.0
        %1058 = vmatpush2.msra.mxu0 0.0
        %1059 = vmatprep.subr.mxu0 0.0
        %1060 = vmatpush2.msra.mxu0 0.0
        %1061 = vmatprep.subr.mxu0 0.0
        %1062 = vmatpush2.msra.mxu0 0.0
        %1063 = vmatprep.subr.mxu0 0.0
        %1064 = vmatpush2.msra.mxu0 0.0
        %1065 = vmatprep.subr.mxu0 0.0
        %1066 = vmatpush2.msra.mxu0 0.0
        %1067 = vmatprep.mubr.f32.mxu0 0.0
        %1068 = vmatmul.mubr.f32.gmra.mxu0 %v1001
        %v1069 = vpop.f32.mrf.mxu0
        %v1070 = vadd.f32 %v998, %v1069
        %v1071 = vpop.f32.mrf.mxu0
        %1072 = vdwg.mxu0
        %s1073 = scalar_lea.vmem %s4, 16
        %v1074 = vld [vmem:[%s1073] sm:$0xff]
        %1076 = vset.pattern.permute.xlu0 2
        %1077 = vperm.xlu0 %1076, %v1074
        %v1078 = vpop.permute.xlu0 %1077
        %v1080 = vmul.f32 %v1078, %v380
        %1081 = vrot.lane.b32.xlu0 %v380, 8
        %v1082 = vpop.permute.xlu0 %1081
        %v1083 = vadd.s32 %v384, 4294967288
        %vm1084 = vcmp.ge.s32.totalorder %v1083, 0
        %vm1085 = vcmp.lt.s32.totalorder %v1083, 128
        %vm1086 = vmand %vm1084, %vm1085
        %v1087 = vsel %vm1086, %v1082, 0.0
        %1088 = vset.pattern.permute.xlu0 0
        %1089 = vperm.xlu0 %1088, %v1074
        %v1090 = vpop.permute.xlu0 %1089
        %v1092 = vmul.f32 %v1090, %v1087
        %v1093 = vadd.f32 %v1080, %v1092
        %1094 = vset.pattern.permute.xlu0 1
        %1095 = vperm.xlu0 %1094, %v1074
        %v1096 = vpop.permute.xlu0 %1095
        %v1098 = vmul.f32 %v1096, %v628
        %v1099 = vadd.f32 %v1093, %v1098
        %1100 = vset.pattern.permute.xlu0 3
        %1101 = vperm.xlu0 %1100, %v1074
        %v1102 = vpop.permute.xlu0 %1101
        %v1104 = vmul.f32 %v1102, %v641
        %v1105 = vadd.f32 %v1099, %v1104
        %1106 = vrot.lane.b32.xlu0 %v380, 120
        %v1107 = vpop.permute.xlu0 %1106
        %v1108 = vadd.s32 %v384, 8
        %vm1109 = vcmp.ge.s32.totalorder %v1108, 0
        %vm1110 = vcmp.lt.s32.totalorder %v1108, 128
        %vm1111 = vmand %vm1109, %vm1110
        %v1112 = vsel %vm1111, %v1107, 0.0
        %1113 = vset.pattern.permute.xlu0 4
        %1114 = vperm.xlu0 %1113, %v1074
        %v1115 = vpop.permute.xlu0 %1114
        %v1117 = vmul.f32 %v1115, %v1112
        %v1118 = vadd.f32 %v1105, %v1117
        %s1119 = scalar_lea.vmem %s6, 48
        %v1120 = vld [vmem:[%s1119] sm:$0xff]
        %s1121 = scalar_lea.vmem %s7, 48
        %v1122 = vld [vmem:[%s1121] sm:$0xff]
        %1124 = vset.pattern.permute.xlu0 0
        %1125 = vperm.xlu0 %1124, %v1122
        %v1126 = vpop.permute.xlu0 %1125
        %v1129 = vsel %vm309, %v1120, 0
        %1131 = vmatprep.subr.mxu0 0.0
        %1132 = vmatpush1.msra.mxu0 0.0
        %1133 = vmatprep.subr.mxu0 0.0
        %1134 = vmatpush1.msra.mxu0 0.0
        %1135 = vmatprep.subr.mxu0 0.0
        %1136 = vmatpush1.msra.mxu0 0.0
        %1137 = vmatprep.subr.mxu0 0.0
        %1138 = vmatpush1.msra.mxu0 0.0
        %1139 = vmatprep.subr.mxu0 0.0
        %1140 = vmatpush1.msra.mxu0 0.0
        %1141 = vmatprep.subr.mxu0 0.0
        %1142 = vmatpush1.msra.mxu0 0.0
        %1143 = vmatprep.subr.mxu0 0.0
        %1144 = vmatpush1.msra.mxu0 0.0
        %1145 = vmatprep.subr.mxu0 0.0
        %1146 = vmatpush1.msra.mxu0 0.0
        %1147 = vmatprep.subr.mxu0 0.0
        %1148 = vmatpush1.msra.mxu0 0.0
        %1149 = vmatprep.subr.mxu0 0.0
        %1150 = vmatpush1.msra.mxu0 0.0
        %1151 = vmatprep.subr.mxu0 0.0
        %1152 = vmatpush1.msra.mxu0 0.0
        %1153 = vmatprep.subr.mxu0 0.0
        %1154 = vmatpush1.msra.mxu0 0.0
        %1155 = vmatprep.subr.mxu0 0.0
        %1156 = vmatpush1.msra.mxu0 0.0
        %1157 = vmatprep.subr.mxu0 0.0
        %1158 = vmatpush1.msra.mxu0 0.0
        %1159 = vmatprep.subr.mxu0 0.0
        %1160 = vmatpush1.msra.mxu0 0.0
        %1161 = vmatprep.subr.mxu0 0.0
        %1162 = vmatpush1.msra.mxu0 %v1118
        %1163 = vmatprep.subr.mxu0 0.0
        %1164 = vmatpush2.msra.mxu0 0.0
        %1165 = vmatprep.subr.mxu0 0.0
        %1166 = vmatpush2.msra.mxu0 0.0
        %1167 = vmatprep.subr.mxu0 0.0
        %1168 = vmatpush2.msra.mxu0 0.0
        %1169 = vmatprep.subr.mxu0 0.0
        %1170 = vmatpush2.msra.mxu0 0.0
        %1171 = vmatprep.subr.mxu0 0.0
        %1172 = vmatpush2.msra.mxu0 0.0
        %1173 = vmatprep.subr.mxu0 0.0
        %1174 = vmatpush2.msra.mxu0 0.0
        %1175 = vmatprep.subr.mxu0 0.0
        %1176 = vmatpush2.msra.mxu0 0.0
        %1177 = vmatprep.subr.mxu0 0.0
        %1178 = vmatpush2.msra.mxu0 0.0
        %1179 = vmatprep.subr.mxu0 0.0
        %1180 = vmatpush2.msra.mxu0 0.0
        %1181 = vmatprep.subr.mxu0 0.0
        %1182 = vmatpush2.msra.mxu0 0.0
        %1183 = vmatprep.subr.mxu0 0.0
        %1184 = vmatpush2.msra.mxu0 0.0
        %1185 = vmatprep.subr.mxu0 0.0
        %1186 = vmatpush2.msra.mxu0 0.0
        %1187 = vmatprep.subr.mxu0 0.0
        %1188 = vmatpush2.msra.mxu0 0.0
        %1189 = vmatprep.subr.mxu0 0.0
        %1190 = vmatpush2.msra.mxu0 0.0
        %1191 = vmatprep.subr.mxu0 0.0
        %1192 = vmatpush2.msra.mxu0 0.0
        %1193 = vmatprep.subr.mxu0 0.0
        %1194 = vmatpush2.msra.mxu0 0.0
        %1195 = vmatprep.mubr.f32.mxu0 0.0
        %1196 = vmatmul.mubr.f32.gmra.mxu0 %v1129
        %v1197 = vpop.f32.mrf.mxu0
        %v1198 = vadd.f32 %v1126, %v1197
        %v1199 = vpop.f32.mrf.mxu0
        %1200 = vdwg.mxu0
        %s1201 = scalar_lea.vmem %s4, 24
        %v1202 = vld [vmem:[%s1201] sm:$0xff]
        %1204 = vset.pattern.permute.xlu0 2
        %1205 = vperm.xlu0 %1204, %v1202
        %v1206 = vpop.permute.xlu0 %1205
        %v1208 = vmul.f32 %v1206, %v380
        %1209 = vrot.lane.b32.xlu0 %v380, 10
        %v1210 = vpop.permute.xlu0 %1209
        %v1211 = vadd.s32 %v384, 4294967286
        %vm1212 = vcmp.ge.s32.totalorder %v1211, 0
        %vm1213 = vcmp.lt.s32.totalorder %v1211, 128
        %vm1214 = vmand %vm1212, %vm1213
        %v1215 = vsel %vm1214, %v1210, 0.0
        %1216 = vset.pattern.permute.xlu0 0
        %1217 = vperm.xlu0 %1216, %v1202
        %v1218 = vpop.permute.xlu0 %1217
        %v1220 = vmul.f32 %v1218, %v1215
        %v1221 = vadd.f32 %v1208, %v1220
        %1222 = vset.pattern.permute.xlu0 1
        %1223 = vperm.xlu0 %1222, %v1202
        %v1224 = vpop.permute.xlu0 %1223
        %v1226 = vmul.f32 %v1224, %v744
        %v1227 = vadd.f32 %v1221, %v1226
        %1228 = vset.pattern.permute.xlu0 3
        %1229 = vperm.xlu0 %1228, %v1202
        %v1230 = vpop.permute.xlu0 %1229
        %v1232 = vmul.f32 %v1230, %v757
        %v1233 = vadd.f32 %v1227, %v1232
        %1234 = vrot.lane.b32.xlu0 %v380, 118
        %v1235 = vpop.permute.xlu0 %1234
        %v1236 = vadd.s32 %v384, 10
        %vm1237 = vcmp.ge.s32.totalorder %v1236, 0
        %vm1238 = vcmp.lt.s32.totalorder %v1236, 128
        %vm1239 = vmand %vm1237, %vm1238
        %v1240 = vsel %vm1239, %v1235, 0.0
        %1241 = vset.pattern.permute.xlu0 4
        %1242 = vperm.xlu0 %1241, %v1202
        %v1243 = vpop.permute.xlu0 %1242
        %v1245 = vmul.f32 %v1243, %v1240
        %v1246 = vadd.f32 %v1233, %v1245
        %s1247 = scalar_lea.vmem %s6, 56
        %v1248 = vld [vmem:[%s1247] sm:$0xff]
        %s1249 = scalar_lea.vmem %s7, 56
        %v1250 = vld [vmem:[%s1249] sm:$0xff]
        %1252 = vset.pattern.permute.xlu0 0
        %1253 = vperm.xlu0 %1252, %v1250
        %v1254 = vpop.permute.xlu0 %1253
        %v1257 = vsel %vm309, %v1248, 0
        %1259 = vmatprep.subr.mxu0 0.0
        %1260 = vmatpush1.msra.mxu0 0.0
        %1261 = vmatprep.subr.mxu0 0.0
        %1262 = vmatpush1.msra.mxu0 0.0
        %1263 = vmatprep.subr.mxu0 0.0
        %1264 = vmatpush1.msra.mxu0 0.0
        %1265 = vmatprep.subr.mxu0 0.0
        %1266 = vmatpush1.msra.mxu0 0.0
        %1267 = vmatprep.subr.mxu0 0.0
        %1268 = vmatpush1.msra.mxu0 0.0
        %1269 = vmatprep.subr.mxu0 0.0
        %1270 = vmatpush1.msra.mxu0 0.0
        %1271 = vmatprep.subr.mxu0 0.0
        %1272 = vmatpush1.msra.mxu0 0.0
        %1273 = vmatprep.subr.mxu0 0.0
        %1274 = vmatpush1.msra.mxu0 0.0
        %1275 = vmatprep.subr.mxu0 0.0
        %1276 = vmatpush1.msra.mxu0 0.0
        %1277 = vmatprep.subr.mxu0 0.0
        %1278 = vmatpush1.msra.mxu0 0.0
        %1279 = vmatprep.subr.mxu0 0.0
        %1280 = vmatpush1.msra.mxu0 0.0
        %1281 = vmatprep.subr.mxu0 0.0
        %1282 = vmatpush1.msra.mxu0 0.0
        %1283 = vmatprep.subr.mxu0 0.0
        %1284 = vmatpush1.msra.mxu0 0.0
        %1285 = vmatprep.subr.mxu0 0.0
        %1286 = vmatpush1.msra.mxu0 0.0
        %1287 = vmatprep.subr.mxu0 0.0
        %1288 = vmatpush1.msra.mxu0 0.0
        %1289 = vmatprep.subr.mxu0 0.0
        %1290 = vmatpush1.msra.mxu0 %v1246
        %1291 = vmatprep.subr.mxu0 0.0
        %1292 = vmatpush2.msra.mxu0 0.0
        %1293 = vmatprep.subr.mxu0 0.0
        %1294 = vmatpush2.msra.mxu0 0.0
        %1295 = vmatprep.subr.mxu0 0.0
        %1296 = vmatpush2.msra.mxu0 0.0
        %1297 = vmatprep.subr.mxu0 0.0
        %1298 = vmatpush2.msra.mxu0 0.0
        %1299 = vmatprep.subr.mxu0 0.0
        %1300 = vmatpush2.msra.mxu0 0.0
        %1301 = vmatprep.subr.mxu0 0.0
        %1302 = vmatpush2.msra.mxu0 0.0
        %1303 = vmatprep.subr.mxu0 0.0
        %1304 = vmatpush2.msra.mxu0 0.0
        %1305 = vmatprep.subr.mxu0 0.0
        %1306 = vmatpush2.msra.mxu0 0.0
        %1307 = vmatprep.subr.mxu0 0.0
        %1308 = vmatpush2.msra.mxu0 0.0
        %1309 = vmatprep.subr.mxu0 0.0
        %1310 = vmatpush2.msra.mxu0 0.0
        %1311 = vmatprep.subr.mxu0 0.0
        %1312 = vmatpush2.msra.mxu0 0.0
        %1313 = vmatprep.subr.mxu0 0.0
        %1314 = vmatpush2.msra.mxu0 0.0
        %1315 = vmatprep.subr.mxu0 0.0
        %1316 = vmatpush2.msra.mxu0 0.0
        %1317 = vmatprep.subr.mxu0 0.0
        %1318 = vmatpush2.msra.mxu0 0.0
        %1319 = vmatprep.subr.mxu0 0.0
        %1320 = vmatpush2.msra.mxu0 0.0
        %1321 = vmatprep.subr.mxu0 0.0
        %1322 = vmatpush2.msra.mxu0 0.0
        %1323 = vmatprep.mubr.f32.mxu0 0.0
        %1324 = vmatmul.mubr.f32.gmra.mxu0 %v1257
        %v1325 = vpop.f32.mrf.mxu0
        %v1326 = vadd.f32 %v1254, %v1325
        %v1327 = vpop.f32.mrf.mxu0
        %1328 = vdwg.mxu0
        %v1329 = vld [vmem:[%s5] sm:$0xff]
        %1331 = vset.pattern.permute.xlu0 3
        %1332 = vperm.xlu0 %1331, %v1329
        %v1333 = vpop.permute.xlu0 %1332
        %v1335 = vmul.f32 %v1333, %v380
        %1336 = vrot.lane.b32.xlu0 %v380, 3
        %v1337 = vpop.permute.xlu0 %1336
        %v1338 = vadd.s32 %v384, 4294967293
        %vm1339 = vcmp.ge.s32.totalorder %v1338, 0
        %vm1340 = vcmp.lt.s32.totalorder %v1338, 128
        %vm1341 = vmand %vm1339, %vm1340
        %v1342 = vsel %vm1341, %v1337, 0.0
        %1343 = vset.pattern.permute.xlu0 0
        %1344 = vperm.xlu0 %1343, %v1329
        %v1345 = vpop.permute.xlu0 %1344
        %v1347 = vmul.f32 %v1345, %v1342
        %v1348 = vadd.f32 %v1335, %v1347
        %1349 = vset.pattern.permute.xlu0 1
        %1350 = vperm.xlu0 %1349, %v1329
        %v1351 = vpop.permute.xlu0 %1350
        %v1353 = vmul.f32 %v1351, %v512
        %v1354 = vadd.f32 %v1348, %v1353
        %1355 = vset.pattern.permute.xlu0 2
        %1356 = vperm.xlu0 %1355, %v1329
        %v1357 = vpop.permute.xlu0 %1356
        %v1359 = vmul.f32 %v1357, %v398
        %v1360 = vadd.f32 %v1354, %v1359
        %1361 = vset.pattern.permute.xlu0 4
        %1362 = vperm.xlu0 %1361, %v1329
        %v1363 = vpop.permute.xlu0 %1362
        %v1365 = vmul.f32 %v1363, %v411
        %v1366 = vadd.f32 %v1360, %v1365
        %1367 = vset.pattern.permute.xlu0 5
        %1368 = vperm.xlu0 %1367, %v1329
        %v1369 = vpop.permute.xlu0 %1368
        %v1371 = vmul.f32 %v1369, %v525
        %v1372 = vadd.f32 %v1366, %v1371
        %1373 = vrot.lane.b32.xlu0 %v380, 125
        %v1374 = vpop.permute.xlu0 %1373
        %v1375 = vadd.s32 %v384, 3
        %vm1376 = vcmp.ge.s32.totalorder %v1375, 0
        %vm1377 = vcmp.lt.s32.totalorder %v1375, 128
        %vm1378 = vmand %vm1376, %vm1377
        %v1379 = vsel %vm1378, %v1374, 0.0
        %1380 = vset.pattern.permute.xlu0 6
        %1381 = vperm.xlu0 %1380, %v1329
        %v1382 = vpop.permute.xlu0 %1381
        %v1384 = vmul.f32 %v1382, %v1379
        %v1385 = vadd.f32 %v1372, %v1384
        %s1386 = scalar_lea.vmem %s6, 64
        %v1387 = vld [vmem:[%s1386] sm:$0xff]
        %s1388 = scalar_lea.vmem %s7, 64
        %v1389 = vld [vmem:[%s1388] sm:$0xff]
        %1391 = vset.pattern.permute.xlu0 0
        %1392 = vperm.xlu0 %1391, %v1389
        %v1393 = vpop.permute.xlu0 %1392
        %v1396 = vsel %vm309, %v1387, 0
        %1398 = vmatprep.subr.mxu0 0.0
        %1399 = vmatpush1.msra.mxu0 0.0
        %1400 = vmatprep.subr.mxu0 0.0
        %1401 = vmatpush1.msra.mxu0 0.0
        %1402 = vmatprep.subr.mxu0 0.0
        %1403 = vmatpush1.msra.mxu0 0.0
        %1404 = vmatprep.subr.mxu0 0.0
        %1405 = vmatpush1.msra.mxu0 0.0
        %1406 = vmatprep.subr.mxu0 0.0
        %1407 = vmatpush1.msra.mxu0 0.0
        %1408 = vmatprep.subr.mxu0 0.0
        %1409 = vmatpush1.msra.mxu0 0.0
        %1410 = vmatprep.subr.mxu0 0.0
        %1411 = vmatpush1.msra.mxu0 0.0
        %1412 = vmatprep.subr.mxu0 0.0
        %1413 = vmatpush1.msra.mxu0 0.0
        %1414 = vmatprep.subr.mxu0 0.0
        %1415 = vmatpush1.msra.mxu0 0.0
        %1416 = vmatprep.subr.mxu0 0.0
        %1417 = vmatpush1.msra.mxu0 0.0
        %1418 = vmatprep.subr.mxu0 0.0
        %1419 = vmatpush1.msra.mxu0 0.0
        %1420 = vmatprep.subr.mxu0 0.0
        %1421 = vmatpush1.msra.mxu0 0.0
        %1422 = vmatprep.subr.mxu0 0.0
        %1423 = vmatpush1.msra.mxu0 0.0
        %1424 = vmatprep.subr.mxu0 0.0
        %1425 = vmatpush1.msra.mxu0 0.0
        %1426 = vmatprep.subr.mxu0 0.0
        %1427 = vmatpush1.msra.mxu0 0.0
        %1428 = vmatprep.subr.mxu0 0.0
        %1429 = vmatpush1.msra.mxu0 %v1385
        %1430 = vmatprep.subr.mxu0 0.0
        %1431 = vmatpush2.msra.mxu0 0.0
        %1432 = vmatprep.subr.mxu0 0.0
        %1433 = vmatpush2.msra.mxu0 0.0
        %1434 = vmatprep.subr.mxu0 0.0
        %1435 = vmatpush2.msra.mxu0 0.0
        %1436 = vmatprep.subr.mxu0 0.0
        %1437 = vmatpush2.msra.mxu0 0.0
        %1438 = vmatprep.subr.mxu0 0.0
        %1439 = vmatpush2.msra.mxu0 0.0
        %1440 = vmatprep.subr.mxu0 0.0
        %1441 = vmatpush2.msra.mxu0 0.0
        %1442 = vmatprep.subr.mxu0 0.0
        %1443 = vmatpush2.msra.mxu0 0.0
        %1444 = vmatprep.subr.mxu0 0.0
        %1445 = vmatpush2.msra.mxu0 0.0
        %1446 = vmatprep.subr.mxu0 0.0
        %1447 = vmatpush2.msra.mxu0 0.0
        %1448 = vmatprep.subr.mxu0 0.0
        %1449 = vmatpush2.msra.mxu0 0.0
        %1450 = vmatprep.subr.mxu0 0.0
        %1451 = vmatpush2.msra.mxu0 0.0
        %1452 = vmatprep.subr.mxu0 0.0
        %1453 = vmatpush2.msra.mxu0 0.0
        %1454 = vmatprep.subr.mxu0 0.0
        %1455 = vmatpush2.msra.mxu0 0.0
        %1456 = vmatprep.subr.mxu0 0.0
        %1457 = vmatpush2.msra.mxu0 0.0
        %1458 = vmatprep.subr.mxu0 0.0
        %1459 = vmatpush2.msra.mxu0 0.0
        %1460 = vmatprep.subr.mxu0 0.0
        %1461 = vmatpush2.msra.mxu0 0.0
        %1462 = vmatprep.mubr.f32.mxu0 0.0
        %1463 = vmatmul.mubr.f32.gmra.mxu0 %v1396
        %v1464 = vpop.f32.mrf.mxu0
        %v1465 = vadd.f32 %v1393, %v1464
        %v1466 = vpop.f32.mrf.mxu0
        %1467 = vdwg.mxu0
        %s1468 = scalar_lea.vmem %s5, 8
        %v1469 = vld [vmem:[%s1468] sm:$0xff]
        %1471 = vset.pattern.permute.xlu0 3
        %1472 = vperm.xlu0 %1471, %v1469
        %v1473 = vpop.permute.xlu0 %1472
        %v1475 = vmul.f32 %v1473, %v380
        %1476 = vrot.lane.b32.xlu0 %v380, 6
        %v1477 = vpop.permute.xlu0 %1476
        %v1478 = vadd.s32 %v384, 4294967290
        %vm1479 = vcmp.ge.s32.totalorder %v1478, 0
        %vm1480 = vcmp.lt.s32.totalorder %v1478, 128
        %vm1481 = vmand %vm1479, %vm1480
        %v1482 = vsel %vm1481, %v1477, 0.0
        %1483 = vset.pattern.permute.xlu0 0
        %1484 = vperm.xlu0 %1483, %v1469
        %v1485 = vpop.permute.xlu0 %1484
        %v1487 = vmul.f32 %v1485, %v1482
        %v1488 = vadd.f32 %v1475, %v1487
        %1489 = vset.pattern.permute.xlu0 1
        %1490 = vperm.xlu0 %1489, %v1469
        %v1491 = vpop.permute.xlu0 %1490
        %v1493 = vmul.f32 %v1491, %v628
        %v1494 = vadd.f32 %v1488, %v1493
        %1495 = vset.pattern.permute.xlu0 2
        %1496 = vperm.xlu0 %1495, %v1469
        %v1497 = vpop.permute.xlu0 %1496
        %v1499 = vmul.f32 %v1497, %v512
        %v1500 = vadd.f32 %v1494, %v1499
        %1501 = vset.pattern.permute.xlu0 4
        %1502 = vperm.xlu0 %1501, %v1469
        %v1503 = vpop.permute.xlu0 %1502
        %v1505 = vmul.f32 %v1503, %v525
        %v1506 = vadd.f32 %v1500, %v1505
        %1507 = vset.pattern.permute.xlu0 5
        %1508 = vperm.xlu0 %1507, %v1469
        %v1509 = vpop.permute.xlu0 %1508
        %v1511 = vmul.f32 %v1509, %v641
        %v1512 = vadd.f32 %v1506, %v1511
        %1513 = vrot.lane.b32.xlu0 %v380, 122
        %v1514 = vpop.permute.xlu0 %1513
        %v1515 = vadd.s32 %v384, 6
        %vm1516 = vcmp.ge.s32.totalorder %v1515, 0
        %vm1517 = vcmp.lt.s32.totalorder %v1515, 128
        %vm1518 = vmand %vm1516, %vm1517
        %v1519 = vsel %vm1518, %v1514, 0.0
        %1520 = vset.pattern.permute.xlu0 6
        %1521 = vperm.xlu0 %1520, %v1469
        %v1522 = vpop.permute.xlu0 %1521
        %v1524 = vmul.f32 %v1522, %v1519
        %v1525 = vadd.f32 %v1512, %v1524
        %s1526 = scalar_lea.vmem %s6, 72
        %v1527 = vld [vmem:[%s1526] sm:$0xff]
        %s1528 = scalar_lea.vmem %s7, 72
        %v1529 = vld [vmem:[%s1528] sm:$0xff]
        %1531 = vset.pattern.permute.xlu0 0
        %1532 = vperm.xlu0 %1531, %v1529
        %v1533 = vpop.permute.xlu0 %1532
        %v1536 = vsel %vm309, %v1527, 0
        %1538 = vmatprep.subr.mxu0 0.0
        %1539 = vmatpush1.msra.mxu0 0.0
        %1540 = vmatprep.subr.mxu0 0.0
        %1541 = vmatpush1.msra.mxu0 0.0
        %1542 = vmatprep.subr.mxu0 0.0
        %1543 = vmatpush1.msra.mxu0 0.0
        %1544 = vmatprep.subr.mxu0 0.0
        %1545 = vmatpush1.msra.mxu0 0.0
        %1546 = vmatprep.subr.mxu0 0.0
        %1547 = vmatpush1.msra.mxu0 0.0
        %1548 = vmatprep.subr.mxu0 0.0
        %1549 = vmatpush1.msra.mxu0 0.0
        %1550 = vmatprep.subr.mxu0 0.0
        %1551 = vmatpush1.msra.mxu0 0.0
        %1552 = vmatprep.subr.mxu0 0.0
        %1553 = vmatpush1.msra.mxu0 0.0
        %1554 = vmatprep.subr.mxu0 0.0
        %1555 = vmatpush1.msra.mxu0 0.0
        %1556 = vmatprep.subr.mxu0 0.0
        %1557 = vmatpush1.msra.mxu0 0.0
        %1558 = vmatprep.subr.mxu0 0.0
        %1559 = vmatpush1.msra.mxu0 0.0
        %1560 = vmatprep.subr.mxu0 0.0
        %1561 = vmatpush1.msra.mxu0 0.0
        %1562 = vmatprep.subr.mxu0 0.0
        %1563 = vmatpush1.msra.mxu0 0.0
        %1564 = vmatprep.subr.mxu0 0.0
        %1565 = vmatpush1.msra.mxu0 0.0
        %1566 = vmatprep.subr.mxu0 0.0
        %1567 = vmatpush1.msra.mxu0 0.0
        %1568 = vmatprep.subr.mxu0 0.0
        %1569 = vmatpush1.msra.mxu0 %v1525
        %1570 = vmatprep.subr.mxu0 0.0
        %1571 = vmatpush2.msra.mxu0 0.0
        %1572 = vmatprep.subr.mxu0 0.0
        %1573 = vmatpush2.msra.mxu0 0.0
        %1574 = vmatprep.subr.mxu0 0.0
        %1575 = vmatpush2.msra.mxu0 0.0
        %1576 = vmatprep.subr.mxu0 0.0
        %1577 = vmatpush2.msra.mxu0 0.0
        %1578 = vmatprep.subr.mxu0 0.0
        %1579 = vmatpush2.msra.mxu0 0.0
        %1580 = vmatprep.subr.mxu0 0.0
        %1581 = vmatpush2.msra.mxu0 0.0
        %1582 = vmatprep.subr.mxu0 0.0
        %1583 = vmatpush2.msra.mxu0 0.0
        %1584 = vmatprep.subr.mxu0 0.0
        %1585 = vmatpush2.msra.mxu0 0.0
        %1586 = vmatprep.subr.mxu0 0.0
        %1587 = vmatpush2.msra.mxu0 0.0
        %1588 = vmatprep.subr.mxu0 0.0
        %1589 = vmatpush2.msra.mxu0 0.0
        %1590 = vmatprep.subr.mxu0 0.0
        %1591 = vmatpush2.msra.mxu0 0.0
        %1592 = vmatprep.subr.mxu0 0.0
        %1593 = vmatpush2.msra.mxu0 0.0
        %1594 = vmatprep.subr.mxu0 0.0
        %1595 = vmatpush2.msra.mxu0 0.0
        %1596 = vmatprep.subr.mxu0 0.0
        %1597 = vmatpush2.msra.mxu0 0.0
        %1598 = vmatprep.subr.mxu0 0.0
        %1599 = vmatpush2.msra.mxu0 0.0
        %1600 = vmatprep.subr.mxu0 0.0
        %1601 = vmatpush2.msra.mxu0 0.0
        %1602 = vmatprep.mubr.f32.mxu0 0.0
        %1603 = vmatmul.mubr.f32.gmra.mxu0 %v1536
        %v1604 = vpop.f32.mrf.mxu0
        %v1605 = vadd.f32 %v1533, %v1604
        %v1606 = vpop.f32.mrf.mxu0
        %1607 = vdwg.mxu0
        %s1608 = scalar_lea.vmem %s5, 16
        %v1609 = vld [vmem:[%s1608] sm:$0xff]
        %1611 = vset.pattern.permute.xlu0 3
        %1612 = vperm.xlu0 %1611, %v1609
        %v1613 = vpop.permute.xlu0 %1612
        %v1615 = vmul.f32 %v1613, %v380
        %1616 = vrot.lane.b32.xlu0 %v380, 12
        %v1617 = vpop.permute.xlu0 %1616
        %v1618 = vadd.s32 %v384, 4294967284
        %vm1619 = vcmp.ge.s32.totalorder %v1618, 0
        %vm1620 = vcmp.lt.s32.totalorder %v1618, 128
        %vm1621 = vmand %vm1619, %vm1620
        %v1622 = vsel %vm1621, %v1617, 0.0
        %1623 = vset.pattern.permute.xlu0 0
        %1624 = vperm.xlu0 %1623, %v1609
        %v1625 = vpop.permute.xlu0 %1624
        %v1627 = vmul.f32 %v1625, %v1622
        %v1628 = vadd.f32 %v1615, %v1627
        %1629 = vset.pattern.permute.xlu0 1
        %1630 = vperm.xlu0 %1629, %v1609
        %v1631 = vpop.permute.xlu0 %1630
        %v1633 = vmul.f32 %v1631, %v1087
        %v1634 = vadd.f32 %v1628, %v1633
        %1635 = vset.pattern.permute.xlu0 2
        %1636 = vperm.xlu0 %1635, %v1609
        %v1637 = vpop.permute.xlu0 %1636
        %v1639 = vmul.f32 %v1637, %v628
        %v1640 = vadd.f32 %v1634, %v1639
        %1641 = vset.pattern.permute.xlu0 4
        %1642 = vperm.xlu0 %1641, %v1609
        %v1643 = vpop.permute.xlu0 %1642
        %v1645 = vmul.f32 %v1643, %v641
        %v1646 = vadd.f32 %v1640, %v1645
        %1647 = vset.pattern.permute.xlu0 5
        %1648 = vperm.xlu0 %1647, %v1609
        %v1649 = vpop.permute.xlu0 %1648
        %v1651 = vmul.f32 %v1649, %v1112
        %v1652 = vadd.f32 %v1646, %v1651
        %1653 = vrot.lane.b32.xlu0 %v380, 116
        %v1654 = vpop.permute.xlu0 %1653
        %v1655 = vadd.s32 %v384, 12
        %vm1656 = vcmp.ge.s32.totalorder %v1655, 0
        %vm1657 = vcmp.lt.s32.totalorder %v1655, 128
        %vm1658 = vmand %vm1656, %vm1657
        %v1659 = vsel %vm1658, %v1654, 0.0
        %1660 = vset.pattern.permute.xlu0 6
        %1661 = vperm.xlu0 %1660, %v1609
        %v1662 = vpop.permute.xlu0 %1661
        %v1664 = vmul.f32 %v1662, %v1659
        %v1665 = vadd.f32 %v1652, %v1664
        %s1666 = scalar_lea.vmem %s6, 80
        %v1667 = vld [vmem:[%s1666] sm:$0xff]
        %s1668 = scalar_lea.vmem %s7, 80
        %v1669 = vld [vmem:[%s1668] sm:$0xff]
        %1671 = vset.pattern.permute.xlu0 0
        %1672 = vperm.xlu0 %1671, %v1669
        %v1673 = vpop.permute.xlu0 %1672
        %v1676 = vsel %vm309, %v1667, 0
        %1678 = vmatprep.subr.mxu0 0.0
        %1679 = vmatpush1.msra.mxu0 0.0
        %1680 = vmatprep.subr.mxu0 0.0
        %1681 = vmatpush1.msra.mxu0 0.0
        %1682 = vmatprep.subr.mxu0 0.0
        %1683 = vmatpush1.msra.mxu0 0.0
        %1684 = vmatprep.subr.mxu0 0.0
        %1685 = vmatpush1.msra.mxu0 0.0
        %1686 = vmatprep.subr.mxu0 0.0
        %1687 = vmatpush1.msra.mxu0 0.0
        %1688 = vmatprep.subr.mxu0 0.0
        %1689 = vmatpush1.msra.mxu0 0.0
        %1690 = vmatprep.subr.mxu0 0.0
        %1691 = vmatpush1.msra.mxu0 0.0
        %1692 = vmatprep.subr.mxu0 0.0
        %1693 = vmatpush1.msra.mxu0 0.0
        %1694 = vmatprep.subr.mxu0 0.0
        %1695 = vmatpush1.msra.mxu0 0.0
        %1696 = vmatprep.subr.mxu0 0.0
        %1697 = vmatpush1.msra.mxu0 0.0
        %1698 = vmatprep.subr.mxu0 0.0
        %1699 = vmatpush1.msra.mxu0 0.0
        %1700 = vmatprep.subr.mxu0 0.0
        %1701 = vmatpush1.msra.mxu0 0.0
        %1702 = vmatprep.subr.mxu0 0.0
        %1703 = vmatpush1.msra.mxu0 0.0
        %1704 = vmatprep.subr.mxu0 0.0
        %1705 = vmatpush1.msra.mxu0 0.0
        %1706 = vmatprep.subr.mxu0 0.0
        %1707 = vmatpush1.msra.mxu0 0.0
        %1708 = vmatprep.subr.mxu0 0.0
        %1709 = vmatpush1.msra.mxu0 %v1665
        %1710 = vmatprep.subr.mxu0 0.0
        %1711 = vmatpush2.msra.mxu0 0.0
        %1712 = vmatprep.subr.mxu0 0.0
        %1713 = vmatpush2.msra.mxu0 0.0
        %1714 = vmatprep.subr.mxu0 0.0
        %1715 = vmatpush2.msra.mxu0 0.0
        %1716 = vmatprep.subr.mxu0 0.0
        %1717 = vmatpush2.msra.mxu0 0.0
        %1718 = vmatprep.subr.mxu0 0.0
        %1719 = vmatpush2.msra.mxu0 0.0
        %1720 = vmatprep.subr.mxu0 0.0
        %1721 = vmatpush2.msra.mxu0 0.0
        %1722 = vmatprep.subr.mxu0 0.0
        %1723 = vmatpush2.msra.mxu0 0.0
        %1724 = vmatprep.subr.mxu0 0.0
        %1725 = vmatpush2.msra.mxu0 0.0
        %1726 = vmatprep.subr.mxu0 0.0
        %1727 = vmatpush2.msra.mxu0 0.0
        %1728 = vmatprep.subr.mxu0 0.0
        %1729 = vmatpush2.msra.mxu0 0.0
        %1730 = vmatprep.subr.mxu0 0.0
        %1731 = vmatpush2.msra.mxu0 0.0
        %1732 = vmatprep.subr.mxu0 0.0
        %1733 = vmatpush2.msra.mxu0 0.0
        %1734 = vmatprep.subr.mxu0 0.0
        %1735 = vmatpush2.msra.mxu0 0.0
        %1736 = vmatprep.subr.mxu0 0.0
        %1737 = vmatpush2.msra.mxu0 0.0
        %1738 = vmatprep.subr.mxu0 0.0
        %1739 = vmatpush2.msra.mxu0 0.0
        %1740 = vmatprep.subr.mxu0 0.0
        %1741 = vmatpush2.msra.mxu0 0.0
        %1742 = vmatprep.mubr.f32.mxu0 0.0
        %1743 = vmatmul.mubr.f32.gmra.mxu0 %v1676
        %v1744 = vpop.f32.mrf.mxu0
        %v1745 = vadd.f32 %v1673, %v1744
        %v1746 = vpop.f32.mrf.mxu0
        %1747 = vdwg.mxu0
        %s1748 = scalar_lea.vmem %s5, 24
        %v1749 = vld [vmem:[%s1748] sm:$0xff]
        %1751 = vset.pattern.permute.xlu0 3
        %1752 = vperm.xlu0 %1751, %v1749
        %v1753 = vpop.permute.xlu0 %1752
        %v1755 = vmul.f32 %v1753, %v380
        %1756 = vrot.lane.b32.xlu0 %v380, 15
        %v1757 = vpop.permute.xlu0 %1756
        %v1758 = vadd.s32 %v384, 4294967281
        %vm1759 = vcmp.ge.s32.totalorder %v1758, 0
        %vm1760 = vcmp.lt.s32.totalorder %v1758, 128
        %vm1761 = vmand %vm1759, %vm1760
        %v1762 = vsel %vm1761, %v1757, 0.0
        %1763 = vset.pattern.permute.xlu0 0
        %1764 = vperm.xlu0 %1763, %v1749
        %v1765 = vpop.permute.xlu0 %1764
        %v1767 = vmul.f32 %v1765, %v1762
        %v1768 = vadd.f32 %v1755, %v1767
        %1769 = vset.pattern.permute.xlu0 1
        %1770 = vperm.xlu0 %1769, %v1749
        %v1771 = vpop.permute.xlu0 %1770
        %v1773 = vmul.f32 %v1771, %v1215
        %v1774 = vadd.f32 %v1768, %v1773
        %1775 = vset.pattern.permute.xlu0 2
        %1776 = vperm.xlu0 %1775, %v1749
        %v1777 = vpop.permute.xlu0 %1776
        %v1779 = vmul.f32 %v1777, %v744
        %v1780 = vadd.f32 %v1774, %v1779
        %1781 = vset.pattern.permute.xlu0 4
        %1782 = vperm.xlu0 %1781, %v1749
        %v1783 = vpop.permute.xlu0 %1782
        %v1785 = vmul.f32 %v1783, %v757
        %v1786 = vadd.f32 %v1780, %v1785
        %1787 = vset.pattern.permute.xlu0 5
        %1788 = vperm.xlu0 %1787, %v1749
        %v1789 = vpop.permute.xlu0 %1788
        %v1791 = vmul.f32 %v1789, %v1240
        %v1792 = vadd.f32 %v1786, %v1791
        %1793 = vrot.lane.b32.xlu0 %v380, 113
        %v1794 = vpop.permute.xlu0 %1793
        %v1795 = vadd.s32 %v384, 15
        %vm1796 = vcmp.ge.s32.totalorder %v1795, 0
        %vm1797 = vcmp.lt.s32.totalorder %v1795, 128
        %vm1798 = vmand %vm1796, %vm1797
        %v1799 = vsel %vm1798, %v1794, 0.0
        %1800 = vset.pattern.permute.xlu0 6
        %1801 = vperm.xlu0 %1800, %v1749
        %v1802 = vpop.permute.xlu0 %1801
        %v1804 = vmul.f32 %v1802, %v1799
        %v1805 = vadd.f32 %v1792, %v1804
        %s1806 = scalar_lea.vmem %s6, 88
        %v1807 = vld [vmem:[%s1806] sm:$0xff]
        %s1808 = scalar_lea.vmem %s7, 88
        %v1809 = vld [vmem:[%s1808] sm:$0xff]
        %1811 = vset.pattern.permute.xlu0 0
        %1812 = vperm.xlu0 %1811, %v1809
        %v1813 = vpop.permute.xlu0 %1812
        %v1816 = vsel %vm309, %v1807, 0
        %1818 = vmatprep.subr.mxu0 0.0
        %1819 = vmatpush1.msra.mxu0 0.0
        %1820 = vmatprep.subr.mxu0 0.0
        %1821 = vmatpush1.msra.mxu0 0.0
        %1822 = vmatprep.subr.mxu0 0.0
        %1823 = vmatpush1.msra.mxu0 0.0
        %1824 = vmatprep.subr.mxu0 0.0
        %1825 = vmatpush1.msra.mxu0 0.0
        %1826 = vmatprep.subr.mxu0 0.0
        %1827 = vmatpush1.msra.mxu0 0.0
        %1828 = vmatprep.subr.mxu0 0.0
        %1829 = vmatpush1.msra.mxu0 0.0
        %1830 = vmatprep.subr.mxu0 0.0
        %1831 = vmatpush1.msra.mxu0 0.0
        %1832 = vmatprep.subr.mxu0 0.0
        %1833 = vmatpush1.msra.mxu0 0.0
        %1834 = vmatprep.subr.mxu0 0.0
        %1835 = vmatpush1.msra.mxu0 0.0
        %1836 = vmatprep.subr.mxu0 0.0
        %1837 = vmatpush1.msra.mxu0 0.0
        %1838 = vmatprep.subr.mxu0 0.0
        %1839 = vmatpush1.msra.mxu0 0.0
        %1840 = vmatprep.subr.mxu0 0.0
        %1841 = vmatpush1.msra.mxu0 0.0
        %1842 = vmatprep.subr.mxu0 0.0
        %1843 = vmatpush1.msra.mxu0 0.0
        %1844 = vmatprep.subr.mxu0 0.0
        %1845 = vmatpush1.msra.mxu0 0.0
        %1846 = vmatprep.subr.mxu0 0.0
        %1847 = vmatpush1.msra.mxu0 0.0
        %1848 = vmatprep.subr.mxu0 0.0
        %1849 = vmatpush1.msra.mxu0 %v1805
        %1850 = vmatprep.subr.mxu0 0.0
        %1851 = vmatpush2.msra.mxu0 0.0
        %1852 = vmatprep.subr.mxu0 0.0
        %1853 = vmatpush2.msra.mxu0 0.0
        %1854 = vmatprep.subr.mxu0 0.0
        %1855 = vmatpush2.msra.mxu0 0.0
        %1856 = vmatprep.subr.mxu0 0.0
        %1857 = vmatpush2.msra.mxu0 0.0
        %1858 = vmatprep.subr.mxu0 0.0
        %1859 = vmatpush2.msra.mxu0 0.0
        %1860 = vmatprep.subr.mxu0 0.0
        %1861 = vmatpush2.msra.mxu0 0.0
        %1862 = vmatprep.subr.mxu0 0.0
        %1863 = vmatpush2.msra.mxu0 0.0
        %1864 = vmatprep.subr.mxu0 0.0
        %1865 = vmatpush2.msra.mxu0 0.0
        %1866 = vmatprep.subr.mxu0 0.0
        %1867 = vmatpush2.msra.mxu0 0.0
        %1868 = vmatprep.subr.mxu0 0.0
        %1869 = vmatpush2.msra.mxu0 0.0
        %1870 = vmatprep.subr.mxu0 0.0
        %1871 = vmatpush2.msra.mxu0 0.0
        %1872 = vmatprep.subr.mxu0 0.0
        %1873 = vmatpush2.msra.mxu0 0.0
        %1874 = vmatprep.subr.mxu0 0.0
        %1875 = vmatpush2.msra.mxu0 0.0
        %1876 = vmatprep.subr.mxu0 0.0
        %1877 = vmatpush2.msra.mxu0 0.0
        %1878 = vmatprep.subr.mxu0 0.0
        %1879 = vmatpush2.msra.mxu0 0.0
        %1880 = vmatprep.subr.mxu0 0.0
        %1881 = vmatpush2.msra.mxu0 0.0
        %1882 = vmatprep.mubr.f32.mxu0 0.0
        %1883 = vmatmul.mubr.f32.gmra.mxu0 %v1816
        %v1884 = vpop.f32.mrf.mxu0
        %v1885 = vadd.f32 %v1813, %v1884
        %v1886 = vpop.f32.mrf.mxu0
        %1887 = vdwg.mxu0
        %1888 = vst [vmem:[%s296] sm:$0xff] %v495
        %1889 = vst [vmem:[%s296 + $0x8] sm:$0xff] %v611
        %1890 = vst [vmem:[%s296 + $0x10] sm:$0xff] %v727
        %1891 = vst [vmem:[%s296 + $0x18] sm:$0xff] %v843
        %1892 = vst [vmem:[%s296 + $0x20] sm:$0xff] %v956
        %1893 = vst [vmem:[%s296 + $0x28] sm:$0xff] %v1070
        %1894 = vst [vmem:[%s296 + $0x30] sm:$0xff] %v1198
        %1895 = vst [vmem:[%s296 + $0x38] sm:$0xff] %v1326
        %1896 = vst [vmem:[%s296 + $0x40] sm:$0xff] %v1465
        %1897 = vst [vmem:[%s296 + $0x48] sm:$0xff] %v1605
        %1898 = vst [vmem:[%s296 + $0x50] sm:$0xff] %v1745
        %1899 = vst [vmem:[%s296 + $0x58] sm:$0xff] %v1885
        %s1900 = sand.u32 %s203, 1
        %s1901 = scalar_lea.sflag [#allocation3], %s1900
        %s1902 = sand.u32 %s203, 1
        %s1903 = smul.addr %s1902, 96
        %s1904 = scalar_lea.vmem [#allocation2], %s1903
        // Predicated region
        $region53: #{tpu_custom_call.1} parent=51 // pred_check
          %p1905 = pneg %p213
        $region54: #{tpu_custom_call.1} parent=51 // pred_check_branch
          %1907 = sbr.rel (%p1905) target = $region56
        $region55: #{tpu_custom_call.1} parent=51 // pred_region
          %s1909 = ssub.s32 1536, 1536
          %1910 = vsyncadd %s1901, %s1909
          %s1911 = smul.addr %s22, 12
          %s1912 = smul.addr %s1911, 128
          %s1913 = scalar_lea.hbm %s8, %s1912
          %s1914 = sshll.u32 %s1904, 4
          %s1915 = int_to_ptr.vmem [resolvable:$true] %s1914
          %1920 = dma.vmem_to_hbm [thread:$0]  %s1915, 1536, %s1913, %s1901, 128, 128, 8
        $region56: #{tpu_custom_call.1} parent=51 // pred_fallthru
          _
      $region52: #{tpu_custom_call.1} parent=5 // pred_fallthru
        _
      %p1921 = scmp.le.s32.totalorder 2, %s17
      // Predicated region
      $region57: #{tpu_custom_call.1} parent=5 // pred_check
        %p1922 = pneg %p1921
      $region58: #{tpu_custom_call.1} parent=5 // pred_check_branch
        %1924 = sbr.rel (%p1922) target = $region60
      $region59: #{tpu_custom_call.1} parent=5 // pred_region
        %s1925 = ssub.s32 %s17, 2
        // Predicated region
        $region61: #{tpu_custom_call.1} parent=59 // pred_check
          %p1926 = pneg %p219
        $region62: #{tpu_custom_call.1} parent=59 // pred_check_branch
          %1928 = sbr.rel (%p1926) target = $region64
        $region63: #{tpu_custom_call.1} parent=59 // pred_region
          %s1929 = sand.u32 %s204, 1
          %s1930 = scalar_lea.sflag [#allocation3], %s1929
          %s1931 = sand.u32 %s204, 1
          %s1932 = smul.addr %s1931, 96
          %s1933 = scalar_lea.vmem [#allocation2], %s1932
          %1934 = dma.done %s1930, 1536
        $region64: #{tpu_custom_call.1} parent=59 // pred_fallthru
          _
      $region60: #{tpu_custom_call.1} parent=5 // pred_fallthru
        _
    $region6: #{tpu_custom_call.1} parent=1 // loop_footer
      %s21 = sadd.s32 1, %s17
    $region7: #{tpu_custom_call.1} parent=1 // loop_footer_branch
      %16 = sbr.rel target = $region3
    $region8: #{tpu_custom_call.1} parent=1 // loop_exit
      _
    %1935 = vsyncpa [#allocation3], 1
    %s1936 = scalar_lea.sflag [#allocation3], 1
    %1937 = vsyncpa %s1936, 1

</llo_original>
